<compile_context>
chip_gen: v7x
topology: tpu7x:2x2x1
jax: 0.10.0
libtpu: 0.0.40
codegen_flags: <defaults>
</compile_context>

<pallas_src>
import math

import jax
import jax.numpy as jnp
from jax.experimental import pallas as pl
from jax.experimental.pallas import tpu as pltpu

EPS = 1e-5                      # PyTorch BatchNorm2d default eps
_LANE = 128
_SUBLANE = 8


def _round_up(x, m):
    return (x + m - 1) // m * m


def _pick_vmem_limit():
    """Generation-aware scoped-VMEM limit (half of physical, clamped)."""
    try:
        info = pltpu.get_tpu_info()
        cap = (getattr(info, "vmem_capacity_bytes", None)
               or getattr(info, "vmem_size_bytes", None))
        if cap:
            return int(min(max(int(cap) // 2, 32 * 1024 * 1024),
                           96 * 1024 * 1024))
    except Exception:
        pass
    return 32 * 1024 * 1024


_VMEM_LIMIT = _pick_vmem_limit()


def _stack_rows3(rows):
    """Stack (1, C) f32 rows into a (1, R, C) value using iota+where only
    (avoids relying on in-kernel concatenate lowering)."""
    nrows, ncols = len(rows), rows[0].shape[-1]
    ridx = jax.lax.broadcasted_iota(jnp.int32, (1, nrows, ncols), 1)
    out = jnp.zeros((1, nrows, ncols), jnp.float32)
    for r, row in enumerate(rows):
        out = jnp.where(ridx == r, row.reshape(1, 1, ncols), out)
    return out


# ----------------------------------------------------------------------------
# Kernel factories
# ----------------------------------------------------------------------------
def _make_conv1_kernel_taps(s, hout, wout, cin_p, cout_p, proj):
    """Pass 1 (per-tap path, Cin not lane-aligned): conv1 3x3 stride-s
    [+ fused 1x1 shortcut conv] + per-step BN stats.  9 accumulated
    (rows x Cin)@(Cin x Cout) MXU matmuls over shifted slices of the
    (already mm_dtype) padded phase tensor."""
    hw = hout * wout
    taps = [(kh, kw) for kh in range(3) for kw in range(3)]

    def kernel(*refs):
        if proj:
            ph_ref, w1_ref, wsc_ref, z1_ref, zsc_ref, st_ref = refs
        else:
            ph_ref, w1_ref, z1_ref, st_ref = refs

        acc = jnp.zeros((hw, cout_p), jnp.float32)
        sc = None
        for t, (kh, kw) in enumerate(taps):
            a, b = kh % s, kw % s
            oh, ow = kh // s, kw // s
            p = a * s + b
            tap2d = ph_ref[p, oh:oh + hout, ow:ow + wout, :].reshape(hw, cin_p)
            acc = acc + jnp.dot(tap2d, w1_ref[t],
                                preferred_element_type=jnp.float32)
            if proj and (kh, kw) == (1, 1):
                # 1x1 stride-s shortcut conv == centre tap of the 3x3 window.
                sc = jnp.dot(tap2d, wsc_ref[...],
                             preferred_element_type=jnp.float32)

        z1_ref[...] = acc.astype(z1_ref.dtype)
        rows = [jnp.sum(acc, axis=0, keepdims=True),
                jnp.sum(acc * acc, axis=0, keepdims=True)]
        if proj:
            zsc_ref[...] = sc.astype(zsc_ref.dtype)
            rows += [jnp.sum(sc, axis=0, keepdims=True),
                     jnp.sum(sc * sc, axis=0, keepdims=True)]
        st_ref[...] = _stack_rows3(rows)          # per-step stats (no accum)

    return kernel


def _make_conv1_kernel_imcol(s, hout, wout, cin_p, cout_p, proj):
    """Pass 1 (deep-K path, used when cin_p % 128 == 0): in-VMEM im2col
    (rows, 9*Cin) built with lane-aligned stores + a single deep-K MXU
    matmul.  The 1x1 shortcut conv reuses the centre-tap column block."""
    hw = hout * wout
    taps = [(kh, kw) for kh in range(3) for kw in range(3)]

    def kernel(*refs):
        if proj:
            ph_ref, w1_ref, wsc_ref, z1_ref, zsc_ref, st_ref, col_ref = refs
        else:
            ph_ref, w1_ref, z1_ref, st_ref, col_ref = refs

        for t, (kh, kw) in enumerate(taps):
            a, b = kh % s, kw % s
            oh, ow = kh // s, kw // s
            p = a * s + b
            tap2d = ph_ref[p, oh:oh + hout, ow:ow + wout, :].reshape(hw, cin_p)
            col_ref[:, t * cin_p:(t + 1) * cin_p] = tap2d

        acc = jnp.dot(col_ref[...], w1_ref[...],
                      preferred_element_type=jnp.float32)
        z1_ref[...] = acc.astype(z1_ref.dtype)
        rows = [jnp.sum(acc, axis=0, keepdims=True),
                jnp.sum(acc * acc, axis=0, keepdims=True)]
        if proj:
            sc = jnp.dot(col_ref[:, 4 * cin_p:5 * cin_p], wsc_ref[...],
                         preferred_element_type=jnp.float32)
            zsc_ref[...] = sc.astype(zsc_ref.dtype)
            rows += [jnp.sum(sc, axis=0, keepdims=True),
                     jnp.sum(sc * sc, axis=0, keepdims=True)]
        st_ref[...] = _stack_rows3(rows)

    return kernel


def _make_conv2_kernel(hout, wout, cout_p, mm_dtype):
    """Pass 2: bn1 apply + ReLU + zero-pad + conv2 (3x3 stride 1, via
    in-VMEM im2col and a single deep-K matmul) + per-step BN stats."""
    hw = hout * wout
    taps = [(kh, kw) for kh in range(3) for kw in range(3)]

    def kernel(z1_ref, sc1_ref, sh1_ref, w2_ref, z2_ref, st_ref,
               pad_ref, col_ref):
        out1 = jnp.maximum(z1_ref[...] * sc1_ref[...] + sh1_ref[...], 0.0)

        # Zero only the 1-pixel halo; interior is fully overwritten below.
        zr = jnp.zeros((1, wout + 2, cout_p), mm_dtype)
        pad_ref[0:1, :, :] = zr
        pad_ref[hout + 1:hout + 2, :, :] = zr
        zc = jnp.zeros((hout, 1, cout_p), mm_dtype)
        pad_ref[1:1 + hout, 0:1, :] = zc
        pad_ref[1:1 + hout, wout + 1:wout + 2, :] = zc
        pad_ref[1:1 + hout, 1:1 + wout, :] = (
            out1.reshape(hout, wout, cout_p).astype(mm_dtype))

        # im2col into lane-aligned column blocks, then one deep-K matmul.
        for t, (kh, kw) in enumerate(taps):
            col_ref[:, t * cout_p:(t + 1) * cout_p] = (
                pad_ref[kh:kh + hout, kw:kw + wout, :].reshape(hw, cout_p))
        acc = jnp.dot(col_ref[...], w2_ref[...],
                      preferred_element_type=jnp.float32)

        z2_ref[...] = acc.astype(z2_ref.dtype)
        st_ref[...] = _stack_rows3([jnp.sum(acc, axis=0, keepdims=True),
                                    jnp.sum(acc * acc, axis=0, keepdims=True)])

    return kernel


def _k3_proj(z2_ref, s2_ref, h2_ref, zsc_ref, ssc_ref, hsc_ref, o_ref):
    """Pass 3 (projection): relu(bn2(z2) + bn_sc(zsc))."""
    left = z2_ref[...] * s2_ref[...] + h2_ref[...]
    sc = zsc_ref[...] * ssc_ref[...] + hsc_ref[...]
    o_ref[...] = jnp.maximum(left + sc, 0.0)


def _k3_identity(z2_ref, s2_ref, h2_ref, xs_ref, o_ref):
    """Pass 3 (identity): relu(bn2(z2) + x)."""
    o_ref[...] = jnp.maximum(
        z2_ref[...] * s2_ref[...] + h2_ref[...] + xs_ref[...], 0.0)


# ----------------------------------------------------------------------------
# ResidualBlock
# ----------------------------------------------------------------------------
class ResidualBlockPallas:
    def __init__(self, inchannel, outchannel, stride=1, key=None,
                 matmul_dtype=jnp.float32):
        self.cin = inchannel
        self.cout = outchannel
        self.stride = int(stride)
        self.mm_dtype = matmul_dtype
        self.proj = (stride != 1) or (inchannel != outchannel)

        self.cin_p = _round_up(inchannel, _SUBLANE)   # sublane-friendly K
        self.cp = _round_up(outchannel, _LANE)        # lane-dense output
        # Deep-K im2col conv1 only when column blocks are 128-lane aligned.
        self.fuse_k1 = (self.cin_p % _LANE == 0)

        key = key if key is not None else jax.random.PRNGKey(1)
        k1, k2, k3 = jax.random.split(key, 3)

        def kaiming(k, shape, fan_in):
            bound = 1.0 / math.sqrt(float(fan_in))
            return jax.random.uniform(k, shape, jnp.float32, -bound, bound)

        # PyTorch-layout parameters (used by the pure-JAX reference).
        self.w1 = kaiming(k1, (outchannel, inchannel, 3, 3), inchannel * 9)
        self.w2 = kaiming(k2, (outchannel, outchannel, 3, 3), outchannel * 9)
        self.g1 = jnp.ones((outchannel,), jnp.float32)
        self.b1 = jnp.zeros((outchannel,), jnp.float32)
        self.g2 = jnp.ones((outchannel,), jnp.float32)
        self.b2 = jnp.zeros((outchannel,), jnp.float32)
        if self.proj:
            self.wsc = kaiming(k3, (outchannel, inchannel, 1, 1), inchannel)
            self.gsc = jnp.ones((outchannel,), jnp.float32)
            self.bsc = jnp.zeros((outchannel,), jnp.float32)

        # Kernel-friendly channel-padded parameters (built once, not per call).
        def conv_taps(w, cin_pad, flatten_k):
            cout_, cin_ = w.shape[0], w.shape[1]
            t = jnp.transpose(w, (2, 3, 1, 0)).reshape(9, cin_, cout_)
            t = jnp.pad(t, ((0, 0), (0, cin_pad - cin_), (0, self.cp - cout_)))
            if flatten_k:                              # (9*K, Cp) for im2col
                t = t.reshape(9 * cin_pad, self.cp)
            return t.astype(matmul_dtype)

        self._w1t = conv_taps(self.w1, self.cin_p, self.fuse_k1)
        self._w2t = conv_taps(self.w2, self.cp, True)
        if self.proj:
            wsc = self.wsc.reshape(outchannel, inchannel).T        # (Cin, Cout)
            wsc = jnp.pad(wsc, ((0, self.cin_p - inchannel),
                                (0, self.cp - outchannel)))
            self._wsct = wsc.astype(matmul_dtype)

        def padc(v):
            return jnp.pad(v, (0, self.cp - outchannel)).reshape(1, self.cp)

        self._g1, self._b1 = padc(self.g1), padc(self.b1)
        self._g2, self._b2 = padc(self.g2), padc(self.b2)
        if self.proj:
            self._gsc, self._bsc = padc(self.gsc), padc(self.bsc)

    # ------------------------------------------------------------------
    def __call__(self, x_nchw):
        n, cin, h, w = x_nchw.shape
        assert cin == self.cin
        s, cp, cin_p = self.stride, self.cp, self.cin_p
        mmdt = self.mm_dtype
        isz = jnp.dtype(mmdt).itemsize
        hout = (h + 2 - 3) // s + 1
        wout = (w + 2 - 3) // s + 1
        hw = hout * wout
        m = n * hw

        # TODO(synk): when stacking blocks into a full ResNet keep NHWC
        # end-to-end and drop these per-block layout transposes.
        x = jnp.transpose(x_nchw, (0, 2, 3, 1)).astype(jnp.float32)   # NHWC
        xp = jnp.pad(x, ((0, 0), (1, 1), (1, 1),
                         (0, cin_p - cin))).astype(mmdt)

        if s == 1:
            # Common ResNet case: no phase decomposition / extra HBM pass.
            phases = xp                               # (n, h+2, w+2, cin_p)
            hph, wph = h + 2, w + 2
        else:
            # Space-to-depth phase decomposition: every 3x3 tap (any stride)
            # becomes a contiguous static slice in-kernel; ~1x data, no im2col
            # in HBM.
            e = -(-2 // s)
            hph, wph = hout + e, wout + e
            plist = []
            for a in range(s):
                for b in range(s):
                    ph = xp[:, a::s, b::s, :][:, :hph, :wph, :]
                    ph = jnp.pad(ph, ((0, 0), (0, hph - ph.shape[1]),
                                      (0, wph - ph.shape[2]), (0, 0)))
                    plist.append(ph)
            phases = jnp.stack(plist, axis=1).reshape(n * s * s, hph, wph,
                                                      cin_p)

        # ---------------- pass 1: conv1 (+1x1 shortcut conv) + stats --------
        nstat = 4 if self.proj else 2
        if self.fuse_k1:
            kern1 = _make_conv1_kernel_imcol(s, hout, wout, cin_p, cp,
                                             self.proj)
            w1_spec = pl.BlockSpec((9 * cin_p, cp), lambda i: (0, 0))
            scratch1 = [pltpu.VMEM((hw, 9 * cin_p), mmdt)]   # im2col slab
        else:
            kern1 = _make_conv1_kernel_taps(s, hout, wout, cin_p, cp,
                                            self.proj)
            w1_spec = pl.BlockSpec((9, cin_p, cp), lambda i: (0, 0, 0))
            scratch1 = []

        in_specs = [
            pl.BlockSpec((s * s, hph, wph, cin_p), lambda i: (i, 0, 0, 0)),
            w1_spec,
        ]
        args = [phases, self._w1t]
        if self.proj:
            in_specs.append(pl.BlockSpec((cin_p, cp), lambda i: (0, 0)))
            args.append(self._wsct)

        out_shape = [jax.ShapeDtypeStruct((m, cp), mmdt)]
        out_specs = [pl.BlockSpec((hw, cp), lambda i: (i, 0))]
        if self.proj:
            out_shape.append(jax.ShapeDtypeStruct((m, cp), mmdt))
            out_specs.append(pl.BlockSpec((hw, cp), lambda i: (i, 0)))
        # Per-step statistics rows -> no grid-resident accumulator.
        out_shape.append(jax.ShapeDtypeStruct((n, nstat, cp), jnp.float32))
        out_specs.append(pl.BlockSpec((1, nstat, cp), lambda i: (i, 0, 0)))

        flops1 = 2 * m * cp * (9 * cin_p + (cin_p if self.proj else 0))
        bytes1 = (isz * (phases.size + (2 if self.proj else 1) * m * cp
                         + 9 * cin_p * cp) + 4 * n * nstat * cp)
        res1 = pl.pallas_call(
            kern1,
            grid=(n,),
            in_specs=in_specs,
            out_specs=tuple(out_specs),
            out_shape=tuple(out_shape),
            scratch_shapes=scratch1,
            compiler_params=pltpu.CompilerParams(
                dimension_semantics=("parallel",),   # per-step stats -> megacore
                vmem_limit_bytes=_VMEM_LIMIT),
            cost_estimate=pl.CostEstimate(flops=flops1, transcendentals=0,
                                          bytes_accessed=bytes1),
        )(*args)
        if self.proj:
            z1, zsc, st1s = res1
        else:
            z1, st1s = res1
        st1 = jnp.sum(st1s, axis=0)          # tiny (nstat, Cp) host reduction

        # Fold BN (training-mode batch stats, biased variance) on the host:
        # tiny (1, Cp) vectors, rsqrt hit once per channel.
        # TODO(synk): E[x^2]-E[x]^2 in f32 can cancel for very large batches;
        # switch to per-step mean subtraction if used beyond toy shapes.
        m_tot = jnp.float32(m)

        def fold(sumrow, sqrow, gamma, beta):
            mean = sumrow / m_tot
            var = jnp.maximum(sqrow / m_tot - mean * mean, 0.0)
            scale = gamma * jax.lax.rsqrt(var + EPS)
            return scale, beta - mean * scale

        sc1, sh1 = fold(st1[0:1], st1[1:2], self._g1, self._b1)
        if self.proj:
            scs, shs = fold(st1[2:3], st1[3:4], self._gsc, self._bsc)

        # ---------------- pass 2: bn1+ReLU fused with conv2 + stats ---------
        kern2 = _make_conv2_kernel(hout, wout, cp, mmdt)
        flops2 = 2 * m * cp * 9 * cp
        bytes2 = isz * (2 * m * cp + 9 * cp * cp) + 4 * (2 * cp + n * 2 * cp)
        z2, st2s = pl.pallas_call(
            kern2,
            grid=(n,),
            in_specs=[
                pl.BlockSpec((hw, cp), lambda i: (i, 0)),
                pl.BlockSpec((1, cp), lambda i: (0, 0)),
                pl.BlockSpec((1, cp), lambda i: (0, 0)),
                pl.BlockSpec((9 * cp, cp), lambda i: (0, 0)),
            ],
            out_specs=(pl.BlockSpec((hw, cp), lambda i: (i, 0)),
                       pl.BlockSpec((1, 2, cp), lambda i: (i, 0, 0))),
            out_shape=(jax.ShapeDtypeStruct((m, cp), mmdt),
                       jax.ShapeDtypeStruct((n, 2, cp), jnp.float32)),
            scratch_shapes=[
                pltpu.VMEM((hout + 2, wout + 2, cp), mmdt),   # padded act
                pltpu.VMEM((hw, 9 * cp), mmdt),               # im2col slab
            ],
            compiler_params=pltpu.CompilerParams(
                dimension_semantics=("parallel",),
                vmem_limit_bytes=_VMEM_LIMIT),
            cost_estimate=pl.CostEstimate(flops=flops2, transcendentals=0,
                                          bytes_accessed=bytes2),
        )(z1, sc1, sh1, self._w2t)
        st2 = jnp.sum(st2s, axis=0)

        sc2, sh2 = fold(st2[0:1], st2[1:2], self._g2, self._b2)

        # ---------------- pass 3: bn2 (+bn_sc) + add + ReLU -----------------
        if self.proj:
            k3 = _k3_proj
            args3 = (z2, sc2, sh2, zsc, scs, shs)
            in_specs3 = [
                pl.BlockSpec((hw, cp), lambda i: (i, 0)),
                pl.BlockSpec((1, cp), lambda i: (0, 0)),
                pl.BlockSpec((1, cp), lambda i: (0, 0)),
                pl.BlockSpec((hw, cp), lambda i: (i, 0)),
                pl.BlockSpec((1, cp), lambda i: (0, 0)),
                pl.BlockSpec((1, cp), lambda i: (0, 0)),
            ]
        else:
            # TODO(synk): read x via its own (hw, cin) BlockSpec and pad the
            # channels in-kernel to drop this host-side pad pass.
            xs = jnp.pad(x.reshape(m, cin),
                         ((0, 0), (0, cp - cin))).astype(mmdt)
            k3 = _k3_identity
            args3 = (z2, sc2, sh2, xs)
            in_specs3 = [
                pl.BlockSpec((hw, cp), lambda i: (i, 0)),
                pl.BlockSpec((1, cp), lambda i: (0, 0)),
                pl.BlockSpec((1, cp), lambda i: (0, 0)),
                pl.BlockSpec((hw, cp), lambda i: (i, 0)),
            ]
        out = pl.pallas_call(
            k3,
            grid=(n,),
            in_specs=in_specs3,
            out_specs=pl.BlockSpec((hw, cp), lambda i: (i, 0)),
            out_shape=jax.ShapeDtypeStruct((m, cp), jnp.float32),
            compiler_params=pltpu.CompilerParams(
                dimension_semantics=("parallel",),    # independent row tiles
                vmem_limit_bytes=_VMEM_LIMIT),
            cost_estimate=pl.CostEstimate(flops=6 * m * cp, transcendentals=0,
                                          bytes_accessed=(2 * isz + 4) * m * cp),
        )(*args3)

        out = out[:, :self.cout].reshape(n, hout, wout, self.cout)
        return jnp.transpose(out, (0, 3, 1, 2))       # back to NCHW


# ----------------------------------------------------------------------------
# Pure-JAX reference (same math, no Pallas) for correctness checks
# ----------------------------------------------------------------------------
def _reference(block, x_nchw):
    def conv(x_nhwc, w_oihw, stride):
        pad = [(1, 1), (1, 1)] if w_oihw.shape[-1] == 3 else [(0, 0), (0, 0)]
        return jax.lax.conv_general_dilated(
            x_nhwc, jnp.transpose(w_oihw, (2, 3, 1, 0)),
            window_strides=(stride, stride), padding=pad,
            dimension_numbers=("NHWC", "HWIO", "NHWC"))

    def bn(z, gamma, beta):
        mean = jnp.mean(z, axis=(0, 1, 2), keepdims=True)
        var = jnp.mean((z - mean) ** 2, axis=(0, 1, 2), keepdims=True)
        return (z - mean) * jax.lax.rsqrt(var + EPS) * gamma + beta

    x = jnp.transpose(x_nchw, (0, 2, 3, 1)).astype(jnp.float32)
    left = jnp.maximum(bn(conv(x, block.w1, block.stride), block.g1, block.b1),
                       0.0)
    left = bn(conv(left, block.w2, 1), block.g2, block.b2)
    if block.proj:
        sc = bn(conv(x, block.wsc, block.stride), block.gsc, block.bsc)
    else:
        sc = x
    out = jnp.maximum(left + sc, 0.0)
    return jnp.transpose(out, (0, 3, 1, 2))


if __name__ == "__main__":
    key = jax.random.PRNGKey(0)
    kx1, kx2, kx5 = jax.random.split(key, 3)

    # 1) projection shortcut (Cin != Cout), stride 1
    x1 = jax.random.normal(kx1, (2, 4, 16, 16), jnp.float32)
    blk1 = ResidualBlockPallas(4, 8, stride=1, key=jax.random.PRNGKey(1))
    y1 = jax.block_until_ready(blk1(x1))
    assert y1.shape == (2, 8, 16, 16), y1.shape
    err1 = float(jnp.max(jnp.abs(y1 - _reference(blk1, x1))))
    assert err1 < 1e-3, f"proj/stride1 mismatch: {err1}"

    # 2) identity shortcut (Cin == Cout, stride 1)
    x2 = jax.random.normal(kx2, (2, 8, 16, 16), jnp.float32)
    blk2 = ResidualBlockPallas(8, 8, stride=1, key=jax.random.PRNGKey(2))
    y2 = jax.block_until_ready(blk2(x2))
    assert y2.shape == (2, 8, 16, 16), y2.shape
    err2 = float(jnp.max(jnp.abs(y2 - _reference(blk2, x2))))
    assert err2 < 1e-3, f"identity mismatch: {err2}"

    # 3) projection shortcut with stride 2 (downsampling block)
    blk3 = ResidualBlockPallas(4, 8, stride=2, key=jax.random.PRNGKey(3))
    y3 = jax.block_until_ready(blk3(x1))
    assert y3.shape == (2, 8, 8, 8), y3.shape
    err3 = float(jnp.max(jnp.abs(y3 - _reference(blk3, x1))))
    assert err3 < 1e-3, f"proj/stride2 mismatch: {err3}"

    # 4) bf16 MXU inputs + bf16 intermediates (v6e/v7x fast path),
    #    f32 accumulation / BN statistics.
    blk4 = ResidualBlockPallas(4, 8, stride=1, key=jax.random.PRNGKey(1),
                               matmul_dtype=jnp.bfloat16)
    y4 = jax.block_until_ready(blk4(x1))
    err4 = float(jnp.max(jnp.abs(y4 - _reference(blk4, x1))))
    assert bool(jnp.all(jnp.isfinite(y4))) and err4 < 0.25, \
        f"bf16 mismatch: {err4}"

    # 5) lane-aligned Cin -> deep-K (in-VMEM im2col) conv1 path
    x5 = jax.random.normal(kx5, (2, 128, 8, 8), jnp.float32)
    blk5 = ResidualBlockPallas(128, 128, stride=1, key=jax.random.PRNGKey(5))
    y5 = jax.block_until_ready(blk5(x5))
    assert y5.shape == (2, 128, 8, 8), y5.shape
    err5 = float(jnp.max(jnp.abs(y5 - _reference(blk5, x5))))
    assert err5 < 2e-3, f"deep-K mismatch: {err5}"

    print("KERNEL_OK")
</pallas_src>

<mosaic_0001>
module attributes {stable_mosaic.version = 11 : i64} {
  func.func @kernel(%arg0: i32, %arg1: memref<1x18x18x8xf32, #tpu.memory_space<vmem>>, %arg2: memref<9x8x128xf32, #tpu.memory_space<vmem>>, %arg3: memref<8x128xf32, #tpu.memory_space<vmem>>, %arg4: memref<256x128xf32, #tpu.memory_space<vmem>>, %arg5: memref<256x128xf32, #tpu.memory_space<vmem>>, %arg6: memref<1x4x128xf32, #tpu.memory_space<vmem>>) attributes {dimension_semantics = [#tpu.dimension_semantics<parallel>], iteration_bounds = array<i64: 2>, scalar_prefetch = 0 : i64, scratch_operands = 0 : i64, tpu.core_type = #tpu.core_type<tc>, window_params = [{transform_indices = @transform_0, window_bounds = array<i64: 1, 18, 18, 8>}, {pipeline_mode = #tpu.pipeline_mode<synchronous>, transform_indices = @transform_1, window_bounds = array<i64: 9, 8, 128>}, {pipeline_mode = #tpu.pipeline_mode<synchronous>, transform_indices = @transform_2, window_bounds = array<i64: 8, 128>}, {transform_indices = @transform_3, window_bounds = array<i64: 256, 128>}, {transform_indices = @transform_4, window_bounds = array<i64: 256, 128>}, {transform_indices = @transform_5, window_bounds = array<i64: 1, 4, 128>}]} {
    %cst = arith.constant 0.000000e+00 : f32
    %0 = vector.broadcast %cst : f32 to vector<256x128xf32>
    %c0 = arith.constant 0 : index
    %c0_0 = arith.constant 0 : index
    %c0_1 = arith.constant 0 : index
    %c0_2 = arith.constant 0 : index
    %1 = vector.load %arg1[%c0, %c0_0, %c0_1, %c0_2] : memref<1x18x18x8xf32, #tpu.memory_space<vmem>>, vector<1x16x16x8xf32>
    %2 = vector.shape_cast %1 : vector<1x16x16x8xf32> to vector<16x16x8xf32>
    %3 = vector.shape_cast %2 : vector<16x16x8xf32> to vector<256x8xf32>
    %c0_3 = arith.constant 0 : index
    %c0_4 = arith.constant 0 : index
    %c0_5 = arith.constant 0 : index
    %4 = vector.load %arg2[%c0_3, %c0_4, %c0_5] : memref<9x8x128xf32, #tpu.memory_space<vmem>>, vector<1x8x128xf32>
    %5 = vector.shape_cast %4 : vector<1x8x128xf32> to vector<8x128xf32>
    %cst_6 = arith.constant dense<0.000000e+00> : vector<256x128xf32>
    %6 = tpu.matmul %3, %5, %cst_6 {dimension_numbers = #tpu.dot_dimension_numbers<[1], [0], [0], [1], [0, 0, 1, 1], [], []>} : vector<256x8xf32>, vector<8x128xf32>, vector<256x128xf32> -> vector<256x128xf32>
    %7 = arith.addf %0, %6 : vector<256x128xf32>
    %c0_7 = arith.constant 0 : index
    %c0_8 = arith.constant 0 : index
    %c1 = arith.constant 1 : index
    %c0_9 = arith.constant 0 : index
    %8 = vector.load %arg1[%c0_7, %c0_8, %c1, %c0_9] : memref<1x18x18x8xf32, #tpu.memory_space<vmem>>, vector<1x16x16x8xf32>
    %9 = vector.shape_cast %8 : vector<1x16x16x8xf32> to vector<16x16x8xf32>
    %10 = vector.shape_cast %9 : vector<16x16x8xf32> to vector<256x8xf32>
    %c1_10 = arith.constant 1 : index
    %c0_11 = arith.constant 0 : index
    %c0_12 = arith.constant 0 : index
    %11 = vector.load %arg2[%c1_10, %c0_11, %c0_12] : memref<9x8x128xf32, #tpu.memory_space<vmem>>, vector<1x8x128xf32>
    %12 = vector.shape_cast %11 : vector<1x8x128xf32> to vector<8x128xf32>
    %cst_13 = arith.constant dense<0.000000e+00> : vector<256x128xf32>
    %13 = tpu.matmul %10, %12, %cst_13 {dimension_numbers = #tpu.dot_dimension_numbers<[1], [0], [0], [1], [0, 0, 1, 1], [], []>} : vector<256x8xf32>, vector<8x128xf32>, vector<256x128xf32> -> vector<256x128xf32>
    %14 = arith.addf %7, %13 : vector<256x128xf32>
    %c0_14 = arith.constant 0 : index
    %c0_15 = arith.constant 0 : index
    %c2 = arith.constant 2 : index
    %c0_16 = arith.constant 0 : index
    %15 = vector.load %arg1[%c0_14, %c0_15, %c2, %c0_16] : memref<1x18x18x8xf32, #tpu.memory_space<vmem>>, vector<1x16x16x8xf32>
    %16 = vector.shape_cast %15 : vector<1x16x16x8xf32> to vector<16x16x8xf32>
    %17 = vector.shape_cast %16 : vector<16x16x8xf32> to vector<256x8xf32>
    %c2_17 = arith.constant 2 : index
    %c0_18 = arith.constant 0 : index
    %c0_19 = arith.constant 0 : index
    %18 = vector.load %arg2[%c2_17, %c0_18, %c0_19] : memref<9x8x128xf32, #tpu.memory_space<vmem>>, vector<1x8x128xf32>
    %19 = vector.shape_cast %18 : vector<1x8x128xf32> to vector<8x128xf32>
    %cst_20 = arith.constant dense<0.000000e+00> : vector<256x128xf32>
    %20 = tpu.matmul %17, %19, %cst_20 {dimension_numbers = #tpu.dot_dimension_numbers<[1], [0], [0], [1], [0, 0, 1, 1], [], []>} : vector<256x8xf32>, vector<8x128xf32>, vector<256x128xf32> -> vector<256x128xf32>
    %21 = arith.addf %14, %20 : vector<256x128xf32>
    %c0_21 = arith.constant 0 : index
    %c1_22 = arith.constant 1 : index
    %c0_23 = arith.constant 0 : index
    %c0_24 = arith.constant 0 : index
    %22 = vector.load %arg1[%c0_21, %c1_22, %c0_23, %c0_24] : memref<1x18x18x8xf32, #tpu.memory_space<vmem>>, vector<1x16x16x8xf32>
    %23 = vector.shape_cast %22 : vector<1x16x16x8xf32> to vector<16x16x8xf32>
    %24 = vector.shape_cast %23 : vector<16x16x8xf32> to vector<256x8xf32>
    %c3 = arith.constant 3 : index
    %c0_25 = arith.constant 0 : index
    %c0_26 = arith.constant 0 : index
    %25 = vector.load %arg2[%c3, %c0_25, %c0_26] : memref<9x8x128xf32, #tpu.memory_space<vmem>>, vector<1x8x128xf32>
    %26 = vector.shape_cast %25 : vector<1x8x128xf32> to vector<8x128xf32>
    %cst_27 = arith.constant dense<0.000000e+00> : vector<256x128xf32>
    %27 = tpu.matmul %24, %26, %cst_27 {dimension_numbers = #tpu.dot_dimension_numbers<[1], [0], [0], [1], [0, 0, 1, 1], [], []>} : vector<256x8xf32>, vector<8x128xf32>, vector<256x128xf32> -> vector<256x128xf32>
    %28 = arith.addf %21, %27 : vector<256x128xf32>
    %c0_28 = arith.constant 0 : index
    %c1_29 = arith.constant 1 : index
    %c1_30 = arith.constant 1 : index
    %c0_31 = arith.constant 0 : index
    %29 = vector.load %arg1[%c0_28, %c1_29, %c1_30, %c0_31] : memref<1x18x18x8xf32, #tpu.memory_space<vmem>>, vector<1x16x16x8xf32>
    %30 = vector.shape_cast %29 : vector<1x16x16x8xf32> to vector<16x16x8xf32>
    %31 = vector.shape_cast %30 : vector<16x16x8xf32> to vector<256x8xf32>
    %c4 = arith.constant 4 : index
    %c0_32 = arith.constant 0 : index
    %c0_33 = arith.constant 0 : index
    %32 = vector.load %arg2[%c4, %c0_32, %c0_33] : memref<9x8x128xf32, #tpu.memory_space<vmem>>, vector<1x8x128xf32>
    %33 = vector.shape_cast %32 : vector<1x8x128xf32> to vector<8x128xf32>
    %cst_34 = arith.constant dense<0.000000e+00> : vector<256x128xf32>
    %34 = tpu.matmul %31, %33, %cst_34 {dimension_numbers = #tpu.dot_dimension_numbers<[1], [0], [0], [1], [0, 0, 1, 1], [], []>} : vector<256x8xf32>, vector<8x128xf32>, vector<256x128xf32> -> vector<256x128xf32>
    %35 = arith.addf %28, %34 : vector<256x128xf32>
    %c0_35 = arith.constant 0 : index
    %c0_36 = arith.constant 0 : index
    %36 = vector.load %arg3[%c0_35, %c0_36] : memref<8x128xf32, #tpu.memory_space<vmem>>, vector<8x128xf32>
    %cst_37 = arith.constant dense<0.000000e+00> : vector<256x128xf32>
    %37 = tpu.matmul %31, %36, %cst_37 {dimension_numbers = #tpu.dot_dimension_numbers<[1], [0], [0], [1], [0, 0, 1, 1], [], []>} : vector<256x8xf32>, vector<8x128xf32>, vector<256x128xf32> -> vector<256x128xf32>
    %c0_38 = arith.constant 0 : index
    %c1_39 = arith.constant 1 : index
    %c2_40 = arith.constant 2 : index
    %c0_41 = arith.constant 0 : index
    %38 = vector.load %arg1[%c0_38, %c1_39, %c2_40, %c0_41] : memref<1x18x18x8xf32, #tpu.memory_space<vmem>>, vector<1x16x16x8xf32>
    %39 = vector.shape_cast %38 : vector<1x16x16x8xf32> to vector<16x16x8xf32>
    %40 = vector.shape_cast %39 : vector<16x16x8xf32> to vector<256x8xf32>
    %c5 = arith.constant 5 : index
    %c0_42 = arith.constant 0 : index
    %c0_43 = arith.constant 0 : index
    %41 = vector.load %arg2[%c5, %c0_42, %c0_43] : memref<9x8x128xf32, #tpu.memory_space<vmem>>, vector<1x8x128xf32>
    %42 = vector.shape_cast %41 : vector<1x8x128xf32> to vector<8x128xf32>
    %cst_44 = arith.constant dense<0.000000e+00> : vector<256x128xf32>
    %43 = tpu.matmul %40, %42, %cst_44 {dimension_numbers = #tpu.dot_dimension_numbers<[1], [0], [0], [1], [0, 0, 1, 1], [], []>} : vector<256x8xf32>, vector<8x128xf32>, vector<256x128xf32> -> vector<256x128xf32>
    %44 = arith.addf %35, %43 : vector<256x128xf32>
    %c0_45 = arith.constant 0 : index
    %c2_46 = arith.constant 2 : index
    %c0_47 = arith.constant 0 : index
    %c0_48 = arith.constant 0 : index
    %45 = vector.load %arg1[%c0_45, %c2_46, %c0_47, %c0_48] : memref<1x18x18x8xf32, #tpu.memory_space<vmem>>, vector<1x16x16x8xf32>
    %46 = vector.shape_cast %45 : vector<1x16x16x8xf32> to vector<16x16x8xf32>
    %47 = vector.shape_cast %46 : vector<16x16x8xf32> to vector<256x8xf32>
    %c6 = arith.constant 6 : index
    %c0_49 = arith.constant 0 : index
    %c0_50 = arith.constant 0 : index
    %48 = vector.load %arg2[%c6, %c0_49, %c0_50] : memref<9x8x128xf32, #tpu.memory_space<vmem>>, vector<1x8x128xf32>
    %49 = vector.shape_cast %48 : vector<1x8x128xf32> to vector<8x128xf32>
    %cst_51 = arith.constant dense<0.000000e+00> : vector<256x128xf32>
    %50 = tpu.matmul %47, %49, %cst_51 {dimension_numbers = #tpu.dot_dimension_numbers<[1], [0], [0], [1], [0, 0, 1, 1], [], []>} : vector<256x8xf32>, vector<8x128xf32>, vector<256x128xf32> -> vector<256x128xf32>
    %51 = arith.addf %44, %50 : vector<256x128xf32>
    %c0_52 = arith.constant 0 : index
    %c2_53 = arith.constant 2 : index
    %c1_54 = arith.constant 1 : index
    %c0_55 = arith.constant 0 : index
    %52 = vector.load %arg1[%c0_52, %c2_53, %c1_54, %c0_55] : memref<1x18x18x8xf32, #tpu.memory_space<vmem>>, vector<1x16x16x8xf32>
    %53 = vector.shape_cast %52 : vector<1x16x16x8xf32> to vector<16x16x8xf32>
    %54 = vector.shape_cast %53 : vector<16x16x8xf32> to vector<256x8xf32>
    %c7 = arith.constant 7 : index
    %c0_56 = arith.constant 0 : index
    %c0_57 = arith.constant 0 : index
    %55 = vector.load %arg2[%c7, %c0_56, %c0_57] : memref<9x8x128xf32, #tpu.memory_space<vmem>>, vector<1x8x128xf32>
    %56 = vector.shape_cast %55 : vector<1x8x128xf32> to vector<8x128xf32>
    %cst_58 = arith.constant dense<0.000000e+00> : vector<256x128xf32>
    %57 = tpu.matmul %54, %56, %cst_58 {dimension_numbers = #tpu.dot_dimension_numbers<[1], [0], [0], [1], [0, 0, 1, 1], [], []>} : vector<256x8xf32>, vector<8x128xf32>, vector<256x128xf32> -> vector<256x128xf32>
    %58 = arith.addf %51, %57 : vector<256x128xf32>
    %c0_59 = arith.constant 0 : index
    %c2_60 = arith.constant 2 : index
    %c2_61 = arith.constant 2 : index
    %c0_62 = arith.constant 0 : index
    %59 = vector.load %arg1[%c0_59, %c2_60, %c2_61, %c0_62] : memref<1x18x18x8xf32, #tpu.memory_space<vmem>>, vector<1x16x16x8xf32>
    %60 = vector.shape_cast %59 : vector<1x16x16x8xf32> to vector<16x16x8xf32>
    %61 = vector.shape_cast %60 : vector<16x16x8xf32> to vector<256x8xf32>
    %c8 = arith.constant 8 : index
    %c0_63 = arith.constant 0 : index
    %c0_64 = arith.constant 0 : index
    %62 = vector.load %arg2[%c8, %c0_63, %c0_64] : memref<9x8x128xf32, #tpu.memory_space<vmem>>, vector<1x8x128xf32>
    %63 = vector.shape_cast %62 : vector<1x8x128xf32> to vector<8x128xf32>
    %cst_65 = arith.constant dense<0.000000e+00> : vector<256x128xf32>
    %64 = tpu.matmul %61, %63, %cst_65 {dimension_numbers = #tpu.dot_dimension_numbers<[1], [0], [0], [1], [0, 0, 1, 1], [], []>} : vector<256x8xf32>, vector<8x128xf32>, vector<256x128xf32> -> vector<256x128xf32>
    %65 = arith.addf %58, %64 : vector<256x128xf32>
    %c0_66 = arith.constant 0 : index
    %c0_67 = arith.constant 0 : index
    %66 = vector.load %arg4[%c0_66, %c0_67] : memref<256x128xf32, #tpu.memory_space<vmem>>, vector<256x128xf32>
    tpu.vector_store %arg4[%c0_66, %c0_67], %65 {strides = array<i32>} : memref<256x128xf32, #tpu.memory_space<vmem>>, vector<256x128xf32>,
    %cst_68 = arith.constant dense<0.000000e+00> : vector<128xf32>
    %67 = vector.multi_reduction <add>, %65, %cst_68 [0] : vector<256x128xf32> to vector<128xf32>
    %68 = vector.shape_cast %67 : vector<128xf32> to vector<1x128xf32>
    %69 = arith.mulf %65, %65 : vector<256x128xf32>
    %cst_69 = arith.constant dense<0.000000e+00> : vector<128xf32>
    %70 = vector.multi_reduction <add>, %69, %cst_69 [0] : vector<256x128xf32> to vector<128xf32>
    %71 = vector.shape_cast %70 : vector<128xf32> to vector<1x128xf32>
    %c0_70 = arith.constant 0 : index
    %c0_71 = arith.constant 0 : index
    %72 = vector.load %arg5[%c0_70, %c0_71] : memref<256x128xf32, #tpu.memory_space<vmem>>, vector<256x128xf32>
    tpu.vector_store %arg5[%c0_70, %c0_71], %37 {strides = array<i32>} : memref<256x128xf32, #tpu.memory_space<vmem>>, vector<256x128xf32>,
    %cst_72 = arith.constant dense<0.000000e+00> : vector<128xf32>
    %73 = vector.multi_reduction <add>, %37, %cst_72 [0] : vector<256x128xf32> to vector<128xf32>
    %74 = vector.shape_cast %73 : vector<128xf32> to vector<1x128xf32>
    %75 = arith.mulf %37, %37 : vector<256x128xf32>
    %cst_73 = arith.constant dense<0.000000e+00> : vector<128xf32>
    %76 = vector.multi_reduction <add>, %75, %cst_73 [0] : vector<256x128xf32> to vector<128xf32>
    %77 = vector.shape_cast %76 : vector<128xf32> to vector<1x128xf32>
    %78 = tpu.iota {dimensions = array<i32: 1>} : vector<1x4x128xi32>
    %cst_74 = arith.constant 0.000000e+00 : f32
    %79 = vector.broadcast %cst_74 : f32 to vector<1x4x128xf32>
    %c0_i32 = arith.constant 0 : i32
    %80 = vector.broadcast %c0_i32 : i32 to vector<1x4x128xi32>
    %81 = arith.cmpi eq, %78, %80 : vector<1x4x128xi32>
    %82 = vector.shape_cast %68 : vector<1x128xf32> to vector<1x1x128xf32>
    %83 = vector.shape_cast %82 : vector<1x1x128xf32> to vector<1x1x128xf32>
    %84 = vector.broadcast %83 : vector<1x1x128xf32> to vector<1x4x128xf32>
    %85 = arith.select %81, %84, %79 : vector<1x4x128xi1>, vector<1x4x128xf32>
    %c1_i32 = arith.constant 1 : i32
    %86 = vector.broadcast %c1_i32 : i32 to vector<1x4x128xi32>
    %87 = arith.cmpi eq, %78, %86 : vector<1x4x128xi32>
    %88 = vector.shape_cast %71 : vector<1x128xf32> to vector<1x1x128xf32>
    %89 = vector.shape_cast %88 : vector<1x1x128xf32> to vector<1x1x128xf32>
    %90 = vector.broadcast %89 : vector<1x1x128xf32> to vector<1x4x128xf32>
    %91 = arith.select %87, %90, %85 : vector<1x4x128xi1>, vector<1x4x128xf32>
    %c2_i32 = arith.constant 2 : i32
    %92 = vector.broadcast %c2_i32 : i32 to vector<1x4x128xi32>
    %93 = arith.cmpi eq, %78, %92 : vector<1x4x128xi32>
    %94 = vector.shape_cast %74 : vector<1x128xf32> to vector<1x1x128xf32>
    %95 = vector.shape_cast %94 : vector<1x1x128xf32> to vector<1x1x128xf32>
    %96 = vector.broadcast %95 : vector<1x1x128xf32> to vector<1x4x128xf32>
    %97 = arith.select %93, %96, %91 : vector<1x4x128xi1>, vector<1x4x128xf32>
    %c3_i32 = arith.constant 3 : i32
    %98 = vector.broadcast %c3_i32 : i32 to vector<1x4x128xi32>
    %99 = arith.cmpi eq, %78, %98 : vector<1x4x128xi32>
    %100 = vector.shape_cast %77 : vector<1x128xf32> to vector<1x1x128xf32>
    %101 = vector.shape_cast %100 : vector<1x1x128xf32> to vector<1x1x128xf32>
    %102 = vector.broadcast %101 : vector<1x1x128xf32> to vector<1x4x128xf32>
    %103 = arith.select %99, %102, %97 : vector<1x4x128xi1>, vector<1x4x128xf32>
    %c0_75 = arith.constant 0 : index
    %c0_76 = arith.constant 0 : index
    %c0_77 = arith.constant 0 : index
    %104 = vector.load %arg6[%c0_75, %c0_76, %c0_77] : memref<1x4x128xf32, #tpu.memory_space<vmem>>, vector<1x4x128xf32>
    tpu.vector_store %arg6[%c0_75, %c0_76, %c0_77], %103 {strides = array<i32>} : memref<1x4x128xf32, #tpu.memory_space<vmem>>, vector<1x4x128xf32>,
    return
  }
  func.func @transform_0(%arg0: i32) -> (i32, i32, i32, i32) {
    %c0_i32 = arith.constant 0 : i32
    %c0_i32_0 = arith.constant 0 : i32
    %c0_i32_1 = arith.constant 0 : i32
    %c0_i32_2 = arith.constant 0 : i32
    return %arg0, %c0_i32, %c0_i32_0, %c0_i32_1 : i32, i32, i32, i32
  }
  func.func @transform_1(%arg0: i32) -> (i32, i32, i32) {
    %c0_i32 = arith.constant 0 : i32
    %c0_i32_0 = arith.constant 0 : i32
    %c0_i32_1 = arith.constant 0 : i32
    %c0_i32_2 = arith.constant 0 : i32
    return %c0_i32, %c0_i32_0, %c0_i32_1 : i32, i32, i32
  }
  func.func @transform_2(%arg0: i32) -> (i32, i32) {
    %c0_i32 = arith.constant 0 : i32
    %c0_i32_0 = arith.constant 0 : i32
    %c0_i32_1 = arith.constant 0 : i32
    return %c0_i32, %c0_i32_0 : i32, i32
  }
  func.func @transform_3(%arg0: i32) -> (i32, i32) {
    %c0_i32 = arith.constant 0 : i32
    %c0_i32_0 = arith.constant 0 : i32
    return %arg0, %c0_i32 : i32, i32
  }
  func.func @transform_4(%arg0: i32) -> (i32, i32) {
    %c0_i32 = arith.constant 0 : i32
    %c0_i32_0 = arith.constant 0 : i32
    return %arg0, %c0_i32 : i32, i32
  }
  func.func @transform_5(%arg0: i32) -> (i32, i32, i32) {
    %c0_i32 = arith.constant 0 : i32
    %c0_i32_0 = arith.constant 0 : i32
    %c0_i32_1 = arith.constant 0 : i32
    return %arg0, %c0_i32, %c0_i32_0 : i32, i32, i32
  }
}

</mosaic_0001>

<llo_original>
// kernel: tpu_custom_call.1
$region0: #{tpu_custom_call.1}
  #allocation0 [shape = 'u32[]', space=smem, size = 0x4, offset = 0x4, fixed_abs, tag = 'smem constant byte address 0x4 - core index']
  #allocation1 [shape = 'u32[144,128]{1,0:T(1,128)}', space=vmem, size = 0x12000, scoped, tag = 'internal scratch']
  %s0 = inlined_call_operand.vmem [shape: f32[2,18,18,8], index: 0, kind: input, shape index: {}]
  %s1 = inlined_call_operand.vmem [shape: f32[9,8,128], index: 1, kind: input, shape index: {}]
  %s2 = inlined_call_operand.vmem [shape: f32[8,128], index: 2, kind: input, shape index: {}]
  %s3 = inlined_call_operand.hbm [shape: f32[512,128], index: 3, kind: output, shape index: {0}]
  %s4 = inlined_call_operand.hbm [shape: f32[512,128], index: 4, kind: output, shape index: {1}]
  %s5 = inlined_call_operand.hbm [shape: f32[2,4,128], index: 5, kind: output, shape index: {2}]
  %6 = xla_tuple %s3, %s4, %s5
  %s7 = sld [smem:[#allocation0]]
  $region61: #{tpu_custom_call.1} parent=0
    _
  %s9 = ssub.s32 1, %s7
  %s10 = scalar_select 0, %s9, %s7
  $region1: #{tpu_custom_call.1} parent=0
    #allocation2 [shape = 'u8[262144]{0}', space=vmem, size = 0x40000, scoped, tag = 'output window, operand 0']
    #allocation3 [shape = 's32[2]{0}', space=sflag, size = 0x8, scoped, tag = 'scoped memory for tpu_custom_call.1']
    #allocation4 [shape = 'u8[262144]{0}', space=vmem, size = 0x40000, scoped, tag = 'output window, operand 1']
    #allocation5 [shape = 's32[2]{0}', space=sflag, size = 0x8, scoped, tag = 'scoped memory for tpu_custom_call.1']
    #allocation6 [shape = 'u8[4096]{0}', space=vmem, size = 0x1000, scoped, tag = 'output window, operand 2']
    %11 = vsyncpa [#allocation3], 0
    %s12 = scalar_lea.sflag [#allocation3], 1
    %13 = vsyncpa %s12, 0
    %14 = vsyncpa [#allocation5], 0
    %s15 = scalar_lea.sflag [#allocation5], 1
    %16 = vsyncpa %s15, 0
    loop: start=0, step=1, limit=4
    $region2: #{tpu_custom_call.1} parent=1 // loop_pre_header
      _
    $region3: #{tpu_custom_call.1} parent=1 // loop_header
      %s18 = sphi 0, %s22
      %p19 = scmp.ge.s32.totalorder %s18, 4
      %s28 = sphi 0, %s30
      %s31 = sphi 0, %s28
      %s32 = sphi 0, %s31
      %s48 = sphi 0, %s32
      %s52 = sphi 0, %s52
      %s54 = sphi 0, %s52
      %s55 = sphi 0, %s54
      %s69 = sphi 0, %s55
      %s73 = sphi 0, %s73
      %s75 = sphi 0, %s73
      %s76 = sphi 0, %s75
      %s90 = sphi 0, %s76
      %s96 = sphi 0, %s98
      %s99 = sphi 0, %s96
      %s100 = sphi 0, %s99
      %s116 = sphi 0, %s100
      %s122 = sphi 0, %s124
      %s125 = sphi 0, %s122
      %s126 = sphi 0, %s125
      %s142 = sphi 0, %s126
      %s148 = sphi 0, %s150
      %s151 = sphi 0, %s148
      %s152 = sphi 0, %s151
      %s168 = sphi 0, %s152
    $region4: #{tpu_custom_call.1} parent=1 // loop_header_branch
      %21 = sbr.rel (%p19) target = $region8
    $region5: #{tpu_custom_call.1} parent=1 // loop_body
      %s23 = ssub.s32 %s18, 1
      %s24 = ssub.s32 %s18, 2
      %s25 = sadd.s32 %s18, 1
      %s26 = ssub.s32 %s18, %s25
      %p27 = scmp.eq.s32.totalorder %s26, 0
      %s29 = sadd.s32 %s28, 1
      %s30 = scalar_select %p27, %s28, %s29
      %p33 = pneg %p27
      %p34 = scmp.eq.s32.totalorder %s18, 1
      %p35 = por %p33, %p34
      %p36 = scmp.ne.s32.totalorder %s28, %s31
      %p37 = scmp.eq.s32.totalorder %s18, 0
      %p38 = por %p36, %p37
      %p39 = scmp.ne.s32.totalorder %s28, %s31
      %p40 = scmp.eq.s32.totalorder %s23, 1
      %p41 = por %p39, %p40
      %p42 = scmp.ne.s32.totalorder %s31, %s32
      %p43 = scmp.eq.s32.totalorder %s23, 0
      %p44 = por %p42, %p43
      %p45 = scmp.ne.s32.totalorder %s31, %s32
      %p46 = scmp.eq.s32.totalorder %s24, 1
      %p47 = por %p45, %p46
      %p49 = scmp.ne.s32.totalorder %s32, %s48
      %p50 = scmp.eq.s32.totalorder %s24, 0
      %p51 = por %p49, %p50
      %s53 = sadd.s32 %s52, 1
      %p56 = scmp.eq.s32.totalorder %s18, 1
      %p57 = scmp.ne.s32.totalorder %s52, %s54
      %p58 = scmp.eq.s32.totalorder %s18, 0
      %p59 = por %p57, %p58
      %p60 = scmp.ne.s32.totalorder %s52, %s54
      %p61 = scmp.eq.s32.totalorder %s23, 1
      %p62 = por %p60, %p61
      %p63 = scmp.ne.s32.totalorder %s54, %s55
      %p64 = scmp.eq.s32.totalorder %s23, 0
      %p65 = por %p63, %p64
      %p66 = scmp.ne.s32.totalorder %s54, %s55
      %p67 = scmp.eq.s32.totalorder %s24, 1
      %p68 = por %p66, %p67
      %p70 = scmp.ne.s32.totalorder %s55, %s69
      %p71 = scmp.eq.s32.totalorder %s24, 0
      %p72 = por %p70, %p71
      %s74 = sadd.s32 %s73, 1
      %p77 = scmp.eq.s32.totalorder %s18, 1
      %p78 = scmp.ne.s32.totalorder %s73, %s75
      %p79 = scmp.eq.s32.totalorder %s18, 0
      %p80 = por %p78, %p79
      %p81 = scmp.ne.s32.totalorder %s73, %s75
      %p82 = scmp.eq.s32.totalorder %s23, 1
      %p83 = por %p81, %p82
      %p84 = scmp.ne.s32.totalorder %s75, %s76
      %p85 = scmp.eq.s32.totalorder %s23, 0
      %p86 = por %p84, %p85
      %p87 = scmp.ne.s32.totalorder %s75, %s76
      %p88 = scmp.eq.s32.totalorder %s24, 1
      %p89 = por %p87, %p88
      %p91 = scmp.ne.s32.totalorder %s76, %s90
      %p92 = scmp.eq.s32.totalorder %s24, 0
      %p93 = por %p91, %p92
      %s94 = ssub.s32 %s18, %s25
      %p95 = scmp.eq.s32.totalorder %s94, 0
      %s97 = sadd.s32 %s96, 1
      %s98 = scalar_select %p95, %s96, %s97
      %p101 = pneg %p95
      %p102 = scmp.eq.s32.totalorder %s18, 1
      %p103 = por %p101, %p102
      %p104 = scmp.ne.s32.totalorder %s96, %s99
      %p105 = scmp.eq.s32.totalorder %s18, 0
      %p106 = por %p104, %p105
      %p107 = scmp.ne.s32.totalorder %s96, %s99
      %p108 = scmp.eq.s32.totalorder %s23, 1
      %p109 = por %p107, %p108
      %p110 = scmp.ne.s32.totalorder %s99, %s100
      %p111 = scmp.eq.s32.totalorder %s23, 0
      %p112 = por %p110, %p111
      %p113 = scmp.ne.s32.totalorder %s99, %s100
      %p114 = scmp.eq.s32.totalorder %s24, 1
      %p115 = por %p113, %p114
      %p117 = scmp.ne.s32.totalorder %s100, %s116
      %p118 = scmp.eq.s32.totalorder %s24, 0
      %p119 = por %p117, %p118
      %s120 = ssub.s32 %s18, %s25
      %p121 = scmp.eq.s32.totalorder %s120, 0
      %s123 = sadd.s32 %s122, 1
      %s124 = scalar_select %p121, %s122, %s123
      %p127 = pneg %p121
      %p128 = scmp.eq.s32.totalorder %s18, 1
      %p129 = por %p127, %p128
      %p130 = scmp.ne.s32.totalorder %s122, %s125
      %p131 = scmp.eq.s32.totalorder %s18, 0
      %p132 = por %p130, %p131
      %p133 = scmp.ne.s32.totalorder %s122, %s125
      %p134 = scmp.eq.s32.totalorder %s23, 1
      %p135 = por %p133, %p134
      %p136 = scmp.ne.s32.totalorder %s125, %s126
      %p137 = scmp.eq.s32.totalorder %s23, 0
      %p138 = por %p136, %p137
      %p139 = scmp.ne.s32.totalorder %s125, %s126
      %p140 = scmp.eq.s32.totalorder %s24, 1
      %p141 = por %p139, %p140
      %p143 = scmp.ne.s32.totalorder %s126, %s142
      %p144 = scmp.eq.s32.totalorder %s24, 0
      %p145 = por %p143, %p144
      %s146 = ssub.s32 %s18, %s25
      %p147 = scmp.eq.s32.totalorder %s146, 0
      %s149 = sadd.s32 %s148, 1
      %s150 = scalar_select %p147, %s148, %s149
      %p153 = pneg %p147
      %p154 = scmp.eq.s32.totalorder %s18, 1
      %p155 = por %p153, %p154
      %p156 = scmp.ne.s32.totalorder %s148, %s151
      %p157 = scmp.eq.s32.totalorder %s18, 0
      %p158 = por %p156, %p157
      %p159 = scmp.ne.s32.totalorder %s148, %s151
      %p160 = scmp.eq.s32.totalorder %s23, 1
      %p161 = por %p159, %p160
      %p162 = scmp.ne.s32.totalorder %s151, %s152
      %p163 = scmp.eq.s32.totalorder %s23, 0
      %p164 = por %p162, %p163
      %p165 = scmp.ne.s32.totalorder %s151, %s152
      %p166 = scmp.eq.s32.totalorder %s24, 1
      %p167 = por %p165, %p166
      %p169 = scmp.ne.s32.totalorder %s152, %s168
      %p170 = scmp.eq.s32.totalorder %s24, 0
      %p171 = por %p169, %p170
      %p172 = scmp.le.s32.totalorder 1, %s18
      %p173 = scmp.lt.s32.totalorder %s18, 3
      %p174 = pnand %p172, %p173
      %p175 = pneg %p174
      // Predicated region
      $region9: #{tpu_custom_call.1} parent=5 // pred_check
        _
      $region10: #{tpu_custom_call.1} parent=5 // pred_check_branch
        %177 = sbr.rel (%p174) target = $region12
      $region11: #{tpu_custom_call.1} parent=5 // pred_region
        %s178 = ssub.s32 %s18, 1
        // Predicated region
        $region13: #{tpu_custom_call.1} parent=11 // pred_check
          %p179 = pneg %p65
        $region14: #{tpu_custom_call.1} parent=11 // pred_check_branch
          %181 = sbr.rel (%p179) target = $region16
        $region15: #{tpu_custom_call.1} parent=11 // pred_region
          _
        $region16: #{tpu_custom_call.1} parent=11 // pred_fallthru
          _
        // Predicated region
        $region17: #{tpu_custom_call.1} parent=11 // pred_check
          %p182 = pneg %p86
        $region18: #{tpu_custom_call.1} parent=11 // pred_check_branch
          %184 = sbr.rel (%p182) target = $region20
        $region19: #{tpu_custom_call.1} parent=11 // pred_region
          _
        $region20: #{tpu_custom_call.1} parent=11 // pred_fallthru
          _
      $region12: #{tpu_custom_call.1} parent=5 // pred_fallthru
        _
      %p185 = scmp.lt.s32.totalorder %s18, 2
      // Predicated region
      $region21: #{tpu_custom_call.1} parent=5 // pred_check
        %p186 = pneg %p185
      $region22: #{tpu_custom_call.1} parent=5 // pred_check_branch
        %188 = sbr.rel (%p186) target = $region24
      $region23: #{tpu_custom_call.1} parent=5 // pred_region
        // Predicated region
        $region25: #{tpu_custom_call.1} parent=23 // pred_check
          %p189 = pneg %p38
        $region26: #{tpu_custom_call.1} parent=23 // pred_check_branch
          %191 = sbr.rel (%p189) target = $region28
        $region27: #{tpu_custom_call.1} parent=23 // pred_region
          %p192 = scmp.lt.s32.totalorder %s18, 1
          %s193 = scalar_select %p192, %s18, 1
          %s194 = smul.addr %s193, 54
          %s195 = smul.addr %s194, 8
          %s196 = scalar_lea.vmem %s0, %s195
        $region28: #{tpu_custom_call.1} parent=23 // pred_fallthru
          _
      $region24: #{tpu_custom_call.1} parent=5 // pred_fallthru
        _
      %p197 = scmp.le.s32.totalorder 1, %s18
      %p198 = scmp.lt.s32.totalorder %s18, 3
      %p199 = pnand %p197, %p198
      %p200 = pneg %p199
      // Predicated region
      $region29: #{tpu_custom_call.1} parent=5 // pred_check
        _
      $region30: #{tpu_custom_call.1} parent=5 // pred_check_branch
        %202 = sbr.rel (%p199) target = $region32
      $region31: #{tpu_custom_call.1} parent=5 // pred_region
        %s203 = ssub.s32 %s18, 1
        %p204 = scmp.lt.s32.totalorder %s23, 1
        %s205 = scalar_select %p204, %s23, 1
        %s206 = smul.addr %s205, 54
        %s207 = smul.addr %s206, 8
        %s208 = scalar_lea.vmem %s0, %s207
        %p209 = pneg %p44
        %p210 = pneg %p41
        %p211 = pneg %p65
        %p212 = pneg %p62
        %p213 = pneg %p86
        %p214 = pneg %p83
        %p215 = pneg %p112
        %p216 = pneg %p109
        %s217 = sand.u32 %s99, 1
        %s218 = scalar_lea.sflag [#allocation3], %s217
        %s219 = sand.u32 %s99, 1
        %s220 = smul.addr %s219, 256
        %s221 = scalar_lea.vmem [#allocation2], %s220
        %p222 = pneg %p138
        %p223 = pneg %p135
        %s224 = sand.u32 %s23, 1
        %s225 = scalar_lea.sflag [#allocation5], %s224
        %s226 = sand.u32 %s125, 1
        %s227 = smul.addr %s226, 256
        %s228 = scalar_lea.vmem [#allocation4], %s227
        %p229 = pneg %p164
        %p230 = pneg %p161
        %s231 = sand.u32 %s23, 1
        %s232 = scalar_lea.sflag [#allocation5], %s231
        %s233 = sand.u32 %s151, 1
        %s234 = smul.addr %s233, 4
        %s235 = scalar_lea.vmem [#allocation6], %s234
        %p236 = scmp.lt.s32.totalorder %s23, 1
        %s237 = scalar_select %p236, %s23, 1
        %s238 = smul.addr %s237, 54
        %s239 = smul.addr %s238, 8
        %s240 = scalar_lea.vmem %s0, %s239
        %s241 = smul.u32 32, %s23
        %s242 = smul.u32 32, %s23
        %v243 = vld [vmem:[%s240] sm:$0xff]
        %v244 = vld [vmem:[%s240 + $0x8] sm:$0xff]
        %v245 = vld [vmem:[%s240 + $0x18] sm:$0xff]
        %v246 = vld [vmem:[%s240 + $0x20] sm:$0xff]
        %v247 = vld [vmem:[%s240 + $0x30] sm:$0xff]
        %v248 = vld [vmem:[%s240 + $0x38] sm:$0xff]
        %v249 = vld [vmem:[%s240 + $0x48] sm:$0xff]
        %v250 = vld [vmem:[%s240 + $0x50] sm:$0xff]
        %v251 = vld [vmem:[%s240 + $0x60] sm:$0xff]
        %v252 = vld [vmem:[%s240 + $0x68] sm:$0xff]
        %v253 = vld [vmem:[%s240 + $0x78] sm:$0xff]
        %v254 = vld [vmem:[%s240 + $0x80] sm:$0xff]
        %v255 = vld [vmem:[%s240 + $0x90] sm:$0xff]
        %v256 = vld [vmem:[%s240 + $0x98] sm:$0xff]
        %v257 = vld [vmem:[%s240 + $0xa8] sm:$0xff]
        %v258 = vld [vmem:[%s240 + $0xb0] sm:$0xff]
        %v259 = vld [vmem:[%s240 + $0xc0] sm:$0xff]
        %v260 = vld [vmem:[%s240 + $0xc8] sm:$0xff]
        %v261 = vld [vmem:[%s240 + $0xd8] sm:$0xff]
        %v262 = vld [vmem:[%s240 + $0xe0] sm:$0xff]
        %v263 = vld [vmem:[%s240 + $0xf0] sm:$0xff]
        %v264 = vld [vmem:[%s240 + $0xf8] sm:$0xff]
        %v265 = vld [vmem:[%s240 + $0x108] sm:$0xff]
        %v266 = vld [vmem:[%s240 + $0x110] sm:$0xff]
        %v267 = vld [vmem:[%s240 + $0x120] sm:$0xff]
        %v268 = vld [vmem:[%s240 + $0x128] sm:$0xff]
        %v269 = vld [vmem:[%s240 + $0x138] sm:$0xff]
        %v270 = vld [vmem:[%s240 + $0x140] sm:$0xff]
        %v271 = vld [vmem:[%s240 + $0x150] sm:$0xff]
        %v272 = vld [vmem:[%s240 + $0x158] sm:$0xff]
        %v273 = vld [vmem:[%s240 + $0x168] sm:$0xff]
        %v274 = vld [vmem:[%s240 + $0x170] sm:$0xff]
        %v275 = vld [vmem:[%s1] sm:$0xff]
        %v276 = vld [vmem:[%s240 + $0x1] sm:$0xff]
        %v277 = vld [vmem:[%s240 + $0x9] sm:$0xff]
        %v278 = vld [vmem:[%s240 + $0x19] sm:$0xff]
        %v279 = vld [vmem:[%s240 + $0x21] sm:$0xff]
        %v280 = vld [vmem:[%s240 + $0x31] sm:$0xff]
        %v281 = vld [vmem:[%s240 + $0x39] sm:$0xff]
        %v282 = vld [vmem:[%s240 + $0x49] sm:$0xff]
        %v283 = vld [vmem:[%s240 + $0x51] sm:$0xff]
        %v284 = vld [vmem:[%s240 + $0x61] sm:$0xff]
        %v285 = vld [vmem:[%s240 + $0x69] sm:$0xff]
        %v286 = vld [vmem:[%s240 + $0x79] sm:$0xff]
        %v287 = vld [vmem:[%s240 + $0x81] sm:$0xff]
        %v288 = vld [vmem:[%s240 + $0x91] sm:$0xff]
        %v289 = vld [vmem:[%s240 + $0x99] sm:$0xff]
        %v290 = vld [vmem:[%s240 + $0xa9] sm:$0xff]
        %v291 = vld [vmem:[%s240 + $0xb1] sm:$0xff]
        %v292 = vld [vmem:[%s240 + $0xc1] sm:$0xff]
        %v293 = vld [vmem:[%s240 + $0xc9] sm:$0xff]
        %v294 = vld [vmem:[%s240 + $0xd9] sm:$0xff]
        %v295 = vld [vmem:[%s240 + $0xe1] sm:$0xff]
        %v296 = vld [vmem:[%s240 + $0xf1] sm:$0xff]
        %v297 = vld [vmem:[%s240 + $0xf9] sm:$0xff]
        %v298 = vld [vmem:[%s240 + $0x109] sm:$0xff]
        %v299 = vld [vmem:[%s240 + $0x111] sm:$0xff]
        %v300 = vld [vmem:[%s240 + $0x121] sm:$0xff]
        %v301 = vld [vmem:[%s240 + $0x129] sm:$0xff]
        %v302 = vld [vmem:[%s240 + $0x139] sm:$0xff]
        %v303 = vld [vmem:[%s240 + $0x141] sm:$0xff]
        %v304 = vld [vmem:[%s240 + $0x151] sm:$0xff]
        %v305 = vld [vmem:[%s240 + $0x159] sm:$0xff]
        %v306 = vld [vmem:[%s240 + $0x169] sm:$0xff]
        %v307 = vld [vmem:[%s240 + $0x171] sm:$0xff]
        %s308 = scalar_lea.vmem %s1, 8
        %v309 = vld [vmem:[%s308] sm:$0xff]
        %vm310 = vcmask 64512
        %v312 = vsel %vm310, %v276, 0
        %v315 = vsel %vm310, %v277, 0
        %v318 = vsel %vm310, %v278, 0
        %v321 = vsel %vm310, %v279, 0
        %v324 = vsel %vm310, %v280, 0
        %v327 = vsel %vm310, %v281, 0
        %v330 = vsel %vm310, %v282, 0
        %v333 = vsel %vm310, %v283, 0
        %v336 = vsel %vm310, %v284, 0
        %v339 = vsel %vm310, %v285, 0
        %v342 = vsel %vm310, %v286, 0
        %v345 = vsel %vm310, %v287, 0
        %v348 = vsel %vm310, %v288, 0
        %v351 = vsel %vm310, %v289, 0
        %v354 = vsel %vm310, %v290, 0
        %v357 = vsel %vm310, %v291, 0
        %v360 = vsel %vm310, %v292, 0
        %v363 = vsel %vm310, %v293, 0
        %v366 = vsel %vm310, %v294, 0
        %v369 = vsel %vm310, %v295, 0
        %v372 = vsel %vm310, %v296, 0
        %v375 = vsel %vm310, %v297, 0
        %v378 = vsel %vm310, %v298, 0
        %v381 = vsel %vm310, %v299, 0
        %v384 = vsel %vm310, %v300, 0
        %v387 = vsel %vm310, %v301, 0
        %v390 = vsel %vm310, %v302, 0
        %v393 = vsel %vm310, %v303, 0
        %v396 = vsel %vm310, %v304, 0
        %v399 = vsel %vm310, %v305, 0
        %v402 = vsel %vm310, %v306, 0
        %v405 = vsel %vm310, %v307, 0
        %407 = vmatprep.subr.mxu0 0.0
        %408 = vmatpush1.msra.mxu0 %v309
        %409 = vmatprep.subr.mxu0 0.0
        %410 = vmatpush1.msra.mxu0 0.0
        %411 = vmatprep.subr.mxu0 0.0
        %412 = vmatpush1.msra.mxu0 0.0
        %413 = vmatprep.subr.mxu0 0.0
        %414 = vmatpush1.msra.mxu0 0.0
        %415 = vmatprep.subr.mxu0 0.0
        %416 = vmatpush1.msra.mxu0 0.0
        %417 = vmatprep.subr.mxu0 0.0
        %418 = vmatpush1.msra.mxu0 0.0
        %419 = vmatprep.subr.mxu0 0.0
        %420 = vmatpush1.msra.mxu0 0.0
        %421 = vmatprep.subr.mxu0 0.0
        %422 = vmatpush1.msra.mxu0 0.0
        %423 = vmatprep.subr.mxu0 0.0
        %424 = vmatpush1.msra.mxu0 0.0
        %425 = vmatprep.subr.mxu0 0.0
        %426 = vmatpush1.msra.mxu0 0.0
        %427 = vmatprep.subr.mxu0 0.0
        %428 = vmatpush1.msra.mxu0 0.0
        %429 = vmatprep.subr.mxu0 0.0
        %430 = vmatpush1.msra.mxu0 0.0
        %431 = vmatprep.subr.mxu0 0.0
        %432 = vmatpush1.msra.mxu0 0.0
        %433 = vmatprep.subr.mxu0 0.0
        %434 = vmatpush1.msra.mxu0 0.0
        %435 = vmatprep.subr.mxu0 0.0
        %436 = vmatpush1.msra.mxu0 0.0
        %437 = vmatprep.subr.mxu0 0.0
        %438 = vmatpush1.msra.mxu0 0.0
        %439 = vmatprep.subr.mxu0 0.0
        %440 = vmatpush1.msra.mxu0 0.0
        %441 = vmatprep.subr.mxu0 0.0
        %442 = vmatpush1.msra.mxu0 0.0
        %443 = vmatprep.subr.mxu0 0.0
        %444 = vmatpush1.msra.mxu0 0.0
        %445 = vmatprep.subr.mxu0 0.0
        %446 = vmatpush1.msra.mxu0 0.0
        %447 = vmatprep.subr.mxu0 0.0
        %448 = vmatpush1.msra.mxu0 0.0
        %449 = vmatprep.subr.mxu0 0.0
        %450 = vmatpush1.msra.mxu0 0.0
        %451 = vmatprep.subr.mxu0 0.0
        %452 = vmatpush1.msra.mxu0 0.0
        %453 = vmatprep.subr.mxu0 0.0
        %454 = vmatpush1.msra.mxu0 0.0
        %455 = vmatprep.subr.mxu0 0.0
        %456 = vmatpush1.msra.mxu0 0.0
        %457 = vmatprep.subr.mxu0 0.0
        %458 = vmatpush1.msra.mxu0 0.0
        %459 = vmatprep.subr.mxu0 0.0
        %460 = vmatpush1.msra.mxu0 0.0
        %461 = vmatprep.subr.mxu0 0.0
        %462 = vmatpush1.msra.mxu0 0.0
        %463 = vmatprep.subr.mxu0 0.0
        %464 = vmatpush1.msra.mxu0 0.0
        %465 = vmatprep.subr.mxu0 0.0
        %466 = vmatpush1.msra.mxu0 0.0
        %467 = vmatprep.subr.mxu0 0.0
        %468 = vmatpush1.msra.mxu0 0.0
        %469 = vmatprep.subr.mxu0 0.0
        %470 = vmatpush1.msra.mxu0 0.0
        %471 = vmatprep.mubr.f32.mxu0 0.0
        %472 = vmatmul.mubr.f32.gmra.mrb[0].mxu0 %v312
        %v473 = vpop.f32.mrb[0].mxu0
        %v474 = vadd.f32 0.0, %v473
        %v475 = vpop.f32.mrb[0].mxu0
        %476 = vmatprep.mubr.f32.mxu0 0.0
        %477 = vmatmul.mubr.f32.gmra.mrb[0].mxu0 %v315
        %v478 = vpop.f32.mrb[0].mxu0
        %v479 = vadd.f32 0.0, %v478
        %v480 = vpop.f32.mrb[0].mxu0
        %481 = vmatprep.mubr.f32.mxu0 0.0
        %482 = vmatmul.mubr.f32.gmra.mrb[0].mxu0 %v318
        %v483 = vpop.f32.mrb[0].mxu0
        %v484 = vadd.f32 0.0, %v483
        %v485 = vpop.f32.mrb[0].mxu0
        %486 = vmatprep.mubr.f32.mxu0 0.0
        %487 = vmatmul.mubr.f32.gmra.mrb[0].mxu0 %v321
        %v488 = vpop.f32.mrb[0].mxu0
        %v489 = vadd.f32 0.0, %v488
        %v490 = vpop.f32.mrb[0].mxu0
        %491 = vmatprep.mubr.f32.mxu0 0.0
        %492 = vmatmul.mubr.f32.gmra.mrb[0].mxu0 %v324
        %v493 = vpop.f32.mrb[0].mxu0
        %v494 = vadd.f32 0.0, %v493
        %v495 = vpop.f32.mrb[0].mxu0
        %496 = vmatprep.mubr.f32.mxu0 0.0
        %497 = vmatmul.mubr.f32.gmra.mrb[0].mxu0 %v327
        %v498 = vpop.f32.mrb[0].mxu0
        %v499 = vadd.f32 0.0, %v498
        %v500 = vpop.f32.mrb[0].mxu0
        %501 = vmatprep.mubr.f32.mxu0 0.0
        %502 = vmatmul.mubr.f32.gmra.mrb[0].mxu0 %v330
        %v503 = vpop.f32.mrb[0].mxu0
        %v504 = vadd.f32 0.0, %v503
        %v505 = vpop.f32.mrb[0].mxu0
        %506 = vmatprep.mubr.f32.mxu0 0.0
        %507 = vmatmul.mubr.f32.gmra.mrb[0].mxu0 %v333
        %v508 = vpop.f32.mrb[0].mxu0
        %v509 = vadd.f32 0.0, %v508
        %v510 = vpop.f32.mrb[0].mxu0
        %511 = vmatprep.mubr.f32.mxu0 0.0
        %512 = vmatmul.mubr.f32.gmra.mrb[0].mxu0 %v336
        %v513 = vpop.f32.mrb[0].mxu0
        %v514 = vadd.f32 0.0, %v513
        %v515 = vpop.f32.mrb[0].mxu0
        %516 = vmatprep.mubr.f32.mxu0 0.0
        %517 = vmatmul.mubr.f32.gmra.mrb[0].mxu0 %v339
        %v518 = vpop.f32.mrb[0].mxu0
        %v519 = vadd.f32 0.0, %v518
        %v520 = vpop.f32.mrb[0].mxu0
        %521 = vmatprep.mubr.f32.mxu0 0.0
        %522 = vmatmul.mubr.f32.gmra.mrb[0].mxu0 %v342
        %v523 = vpop.f32.mrb[0].mxu0
        %v524 = vadd.f32 0.0, %v523
        %v525 = vpop.f32.mrb[0].mxu0
        %526 = vmatprep.mubr.f32.mxu0 0.0
        %527 = vmatmul.mubr.f32.gmra.mrb[0].mxu0 %v345
        %v528 = vpop.f32.mrb[0].mxu0
        %v529 = vadd.f32 0.0, %v528
        %v530 = vpop.f32.mrb[0].mxu0
        %531 = vmatprep.mubr.f32.mxu0 0.0
        %532 = vmatmul.mubr.f32.gmra.mrb[0].mxu0 %v348
        %v533 = vpop.f32.mrb[0].mxu0
        %v534 = vadd.f32 0.0, %v533
        %v535 = vpop.f32.mrb[0].mxu0
        %536 = vmatprep.mubr.f32.mxu0 0.0
        %537 = vmatmul.mubr.f32.gmra.mrb[0].mxu0 %v351
        %v538 = vpop.f32.mrb[0].mxu0
        %v539 = vadd.f32 0.0, %v538
        %v540 = vpop.f32.mrb[0].mxu0
        %541 = vmatprep.mubr.f32.mxu0 0.0
        %542 = vmatmul.mubr.f32.gmra.mrb[0].mxu0 %v354
        %v543 = vpop.f32.mrb[0].mxu0
        %v544 = vadd.f32 0.0, %v543
        %v545 = vpop.f32.mrb[0].mxu0
        %546 = vmatprep.mubr.f32.mxu0 0.0
        %547 = vmatmul.mubr.f32.gmra.mrb[0].mxu0 %v357
        %v548 = vpop.f32.mrb[0].mxu0
        %v549 = vadd.f32 0.0, %v548
        %v550 = vpop.f32.mrb[0].mxu0
        %551 = vmatprep.mubr.f32.mxu0 0.0
        %552 = vmatmul.mubr.f32.gmra.mrb[0].mxu0 %v360
        %v553 = vpop.f32.mrb[0].mxu0
        %v554 = vadd.f32 0.0, %v553
        %v555 = vpop.f32.mrb[0].mxu0
        %556 = vmatprep.mubr.f32.mxu0 0.0
        %557 = vmatmul.mubr.f32.gmra.mrb[0].mxu0 %v363
        %v558 = vpop.f32.mrb[0].mxu0
        %v559 = vadd.f32 0.0, %v558
        %v560 = vpop.f32.mrb[0].mxu0
        %561 = vmatprep.mubr.f32.mxu0 0.0
        %562 = vmatmul.mubr.f32.gmra.mrb[0].mxu0 %v366
        %v563 = vpop.f32.mrb[0].mxu0
        %v564 = vadd.f32 0.0, %v563
        %v565 = vpop.f32.mrb[0].mxu0
        %566 = vmatprep.mubr.f32.mxu0 0.0
        %567 = vmatmul.mubr.f32.gmra.mrb[0].mxu0 %v369
        %v568 = vpop.f32.mrb[0].mxu0
        %v569 = vadd.f32 0.0, %v568
        %v570 = vpop.f32.mrb[0].mxu0
        %571 = vmatprep.mubr.f32.mxu0 0.0
        %572 = vmatmul.mubr.f32.gmra.mrb[0].mxu0 %v372
        %v573 = vpop.f32.mrb[0].mxu0
        %v574 = vadd.f32 0.0, %v573
        %v575 = vpop.f32.mrb[0].mxu0
        %576 = vmatprep.mubr.f32.mxu0 0.0
        %577 = vmatmul.mubr.f32.gmra.mrb[0].mxu0 %v375
        %v578 = vpop.f32.mrb[0].mxu0
        %v579 = vadd.f32 0.0, %v578
        %v580 = vpop.f32.mrb[0].mxu0
        %581 = vmatprep.mubr.f32.mxu0 0.0
        %582 = vmatmul.mubr.f32.gmra.mrb[0].mxu0 %v378
        %v583 = vpop.f32.mrb[0].mxu0
        %v584 = vadd.f32 0.0, %v583
        %v585 = vpop.f32.mrb[0].mxu0
        %586 = vmatprep.mubr.f32.mxu0 0.0
        %587 = vmatmul.mubr.f32.gmra.mrb[0].mxu0 %v381
        %v588 = vpop.f32.mrb[0].mxu0
        %v589 = vadd.f32 0.0, %v588
        %v590 = vpop.f32.mrb[0].mxu0
        %591 = vmatprep.mubr.f32.mxu0 0.0
        %592 = vmatmul.mubr.f32.gmra.mrb[0].mxu0 %v384
        %v593 = vpop.f32.mrb[0].mxu0
        %v594 = vadd.f32 0.0, %v593
        %v595 = vpop.f32.mrb[0].mxu0
        %596 = vmatprep.mubr.f32.mxu0 0.0
        %597 = vmatmul.mubr.f32.gmra.mrb[0].mxu0 %v387
        %v598 = vpop.f32.mrb[0].mxu0
        %v599 = vadd.f32 0.0, %v598
        %v600 = vpop.f32.mrb[0].mxu0
        %601 = vmatprep.mubr.f32.mxu0 0.0
        %602 = vmatmul.mubr.f32.gmra.mrb[0].mxu0 %v390
        %v603 = vpop.f32.mrb[0].mxu0
        %v604 = vadd.f32 0.0, %v603
        %v605 = vpop.f32.mrb[0].mxu0
        %606 = vmatprep.mubr.f32.mxu0 0.0
        %607 = vmatmul.mubr.f32.gmra.mrb[0].mxu0 %v393
        %v608 = vpop.f32.mrb[0].mxu0
        %v609 = vadd.f32 0.0, %v608
        %v610 = vpop.f32.mrb[0].mxu0
        %611 = vmatprep.mubr.f32.mxu0 0.0
        %612 = vmatmul.mubr.f32.gmra.mrb[0].mxu0 %v396
        %v613 = vpop.f32.mrb[0].mxu0
        %v614 = vadd.f32 0.0, %v613
        %v615 = vpop.f32.mrb[0].mxu0
        %616 = vmatprep.mubr.f32.mxu0 0.0
        %617 = vmatmul.mubr.f32.gmra.mrb[0].mxu0 %v399
        %v618 = vpop.f32.mrb[0].mxu0
        %v619 = vadd.f32 0.0, %v618
        %v620 = vpop.f32.mrb[0].mxu0
        %621 = vmatprep.mubr.f32.mxu0 0.0
        %622 = vmatmul.mubr.f32.gmra.mrb[0].mxu0 %v402
        %v623 = vpop.f32.mrb[0].mxu0
        %v624 = vadd.f32 0.0, %v623
        %v625 = vpop.f32.mrb[0].mxu0
        %626 = vmatprep.mubr.f32.mxu0 0.0
        %627 = vmatmul.mubr.f32.gmra.mrb[0].mxu0 %v405
        %v628 = vpop.f32.mrb[0].mxu0
        %v629 = vadd.f32 0.0, %v628
        %v630 = vpop.f32.mrb[0].mxu0
        %631 = vdwg.mxu0
        %v633 = vsel %vm310, %v243, 0
        %v636 = vsel %vm310, %v244, 0
        %v639 = vsel %vm310, %v245, 0
        %v642 = vsel %vm310, %v246, 0
        %v645 = vsel %vm310, %v247, 0
        %v648 = vsel %vm310, %v248, 0
        %v651 = vsel %vm310, %v249, 0
        %v654 = vsel %vm310, %v250, 0
        %v657 = vsel %vm310, %v251, 0
        %v660 = vsel %vm310, %v252, 0
        %v663 = vsel %vm310, %v253, 0
        %v666 = vsel %vm310, %v254, 0
        %v669 = vsel %vm310, %v255, 0
        %v672 = vsel %vm310, %v256, 0
        %v675 = vsel %vm310, %v257, 0
        %v678 = vsel %vm310, %v258, 0
        %v681 = vsel %vm310, %v259, 0
        %v684 = vsel %vm310, %v260, 0
        %v687 = vsel %vm310, %v261, 0
        %v690 = vsel %vm310, %v262, 0
        %v693 = vsel %vm310, %v263, 0
        %v696 = vsel %vm310, %v264, 0
        %v699 = vsel %vm310, %v265, 0
        %v702 = vsel %vm310, %v266, 0
        %v705 = vsel %vm310, %v267, 0
        %v708 = vsel %vm310, %v268, 0
        %v711 = vsel %vm310, %v269, 0
        %v714 = vsel %vm310, %v270, 0
        %v717 = vsel %vm310, %v271, 0
        %v720 = vsel %vm310, %v272, 0
        %v723 = vsel %vm310, %v273, 0
        %v726 = vsel %vm310, %v274, 0
        %728 = vmatprep.subr.mxu0 0.0
        %729 = vmatpush1.msra.mxu0 %v275
        %730 = vmatprep.subr.mxu0 0.0
        %731 = vmatpush1.msra.mxu0 0.0
        %732 = vmatprep.subr.mxu0 0.0
        %733 = vmatpush1.msra.mxu0 0.0
        %734 = vmatprep.subr.mxu0 0.0
        %735 = vmatpush1.msra.mxu0 0.0
        %736 = vmatprep.subr.mxu0 0.0
        %737 = vmatpush1.msra.mxu0 0.0
        %738 = vmatprep.subr.mxu0 0.0
        %739 = vmatpush1.msra.mxu0 0.0
        %740 = vmatprep.subr.mxu0 0.0
        %741 = vmatpush1.msra.mxu0 0.0
        %742 = vmatprep.subr.mxu0 0.0
        %743 = vmatpush1.msra.mxu0 0.0
        %744 = vmatprep.subr.mxu0 0.0
        %745 = vmatpush1.msra.mxu0 0.0
        %746 = vmatprep.subr.mxu0 0.0
        %747 = vmatpush1.msra.mxu0 0.0
        %748 = vmatprep.subr.mxu0 0.0
        %749 = vmatpush1.msra.mxu0 0.0
        %750 = vmatprep.subr.mxu0 0.0
        %751 = vmatpush1.msra.mxu0 0.0
        %752 = vmatprep.subr.mxu0 0.0
        %753 = vmatpush1.msra.mxu0 0.0
        %754 = vmatprep.subr.mxu0 0.0
        %755 = vmatpush1.msra.mxu0 0.0
        %756 = vmatprep.subr.mxu0 0.0
        %757 = vmatpush1.msra.mxu0 0.0
        %758 = vmatprep.subr.mxu0 0.0
        %759 = vmatpush1.msra.mxu0 0.0
        %760 = vmatprep.subr.mxu0 0.0
        %761 = vmatpush1.msra.mxu0 0.0
        %762 = vmatprep.subr.mxu0 0.0
        %763 = vmatpush1.msra.mxu0 0.0
        %764 = vmatprep.subr.mxu0 0.0
        %765 = vmatpush1.msra.mxu0 0.0
        %766 = vmatprep.subr.mxu0 0.0
        %767 = vmatpush1.msra.mxu0 0.0
        %768 = vmatprep.subr.mxu0 0.0
        %769 = vmatpush1.msra.mxu0 0.0
        %770 = vmatprep.subr.mxu0 0.0
        %771 = vmatpush1.msra.mxu0 0.0
        %772 = vmatprep.subr.mxu0 0.0
        %773 = vmatpush1.msra.mxu0 0.0
        %774 = vmatprep.subr.mxu0 0.0
        %775 = vmatpush1.msra.mxu0 0.0
        %776 = vmatprep.subr.mxu0 0.0
        %777 = vmatpush1.msra.mxu0 0.0
        %778 = vmatprep.subr.mxu0 0.0
        %779 = vmatpush1.msra.mxu0 0.0
        %780 = vmatprep.subr.mxu0 0.0
        %781 = vmatpush1.msra.mxu0 0.0
        %782 = vmatprep.subr.mxu0 0.0
        %783 = vmatpush1.msra.mxu0 0.0
        %784 = vmatprep.subr.mxu0 0.0
        %785 = vmatpush1.msra.mxu0 0.0
        %786 = vmatprep.subr.mxu0 0.0
        %787 = vmatpush1.msra.mxu0 0.0
        %788 = vmatprep.subr.mxu0 0.0
        %789 = vmatpush1.msra.mxu0 0.0
        %790 = vmatprep.subr.mxu0 0.0
        %791 = vmatpush1.msra.mxu0 0.0
        %792 = vmatprep.mubr.f32.mxu0 0.0
        %793 = vmatmul.mubr.f32.gmra.mrb[0].mxu0 %v633
        %v794 = vpop.f32.mrb[0].mxu0
        %v795 = vadd.f32 %v474, %v794
        %v796 = vpop.f32.mrb[0].mxu0
        %797 = vmatprep.mubr.f32.mxu0 0.0
        %798 = vmatmul.mubr.f32.gmra.mrb[0].mxu0 %v636
        %v799 = vpop.f32.mrb[0].mxu0
        %v800 = vadd.f32 %v479, %v799
        %v801 = vpop.f32.mrb[0].mxu0
        %802 = vmatprep.mubr.f32.mxu0 0.0
        %803 = vmatmul.mubr.f32.gmra.mrb[0].mxu0 %v639
        %v804 = vpop.f32.mrb[0].mxu0
        %v805 = vadd.f32 %v484, %v804
        %v806 = vpop.f32.mrb[0].mxu0
        %807 = vmatprep.mubr.f32.mxu0 0.0
        %808 = vmatmul.mubr.f32.gmra.mrb[0].mxu0 %v642
        %v809 = vpop.f32.mrb[0].mxu0
        %v810 = vadd.f32 %v489, %v809
        %v811 = vpop.f32.mrb[0].mxu0
        %812 = vmatprep.mubr.f32.mxu0 0.0
        %813 = vmatmul.mubr.f32.gmra.mrb[0].mxu0 %v645
        %v814 = vpop.f32.mrb[0].mxu0
        %v815 = vadd.f32 %v494, %v814
        %v816 = vpop.f32.mrb[0].mxu0
        %817 = vmatprep.mubr.f32.mxu0 0.0
        %818 = vmatmul.mubr.f32.gmra.mrb[0].mxu0 %v648
        %v819 = vpop.f32.mrb[0].mxu0
        %v820 = vadd.f32 %v499, %v819
        %v821 = vpop.f32.mrb[0].mxu0
        %822 = vmatprep.mubr.f32.mxu0 0.0
        %823 = vmatmul.mubr.f32.gmra.mrb[0].mxu0 %v651
        %v824 = vpop.f32.mrb[0].mxu0
        %v825 = vadd.f32 %v504, %v824
        %v826 = vpop.f32.mrb[0].mxu0
        %827 = vmatprep.mubr.f32.mxu0 0.0
        %828 = vmatmul.mubr.f32.gmra.mrb[0].mxu0 %v654
        %v829 = vpop.f32.mrb[0].mxu0
        %v830 = vadd.f32 %v509, %v829
        %v831 = vpop.f32.mrb[0].mxu0
        %832 = vmatprep.mubr.f32.mxu0 0.0
        %833 = vmatmul.mubr.f32.gmra.mrb[0].mxu0 %v657
        %v834 = vpop.f32.mrb[0].mxu0
        %v835 = vadd.f32 %v514, %v834
        %v836 = vpop.f32.mrb[0].mxu0
        %837 = vmatprep.mubr.f32.mxu0 0.0
        %838 = vmatmul.mubr.f32.gmra.mrb[0].mxu0 %v660
        %v839 = vpop.f32.mrb[0].mxu0
        %v840 = vadd.f32 %v519, %v839
        %v841 = vpop.f32.mrb[0].mxu0
        %842 = vmatprep.mubr.f32.mxu0 0.0
        %843 = vmatmul.mubr.f32.gmra.mrb[0].mxu0 %v663
        %v844 = vpop.f32.mrb[0].mxu0
        %v845 = vadd.f32 %v524, %v844
        %v846 = vpop.f32.mrb[0].mxu0
        %847 = vmatprep.mubr.f32.mxu0 0.0
        %848 = vmatmul.mubr.f32.gmra.mrb[0].mxu0 %v666
        %v849 = vpop.f32.mrb[0].mxu0
        %v850 = vadd.f32 %v529, %v849
        %v851 = vpop.f32.mrb[0].mxu0
        %852 = vmatprep.mubr.f32.mxu0 0.0
        %853 = vmatmul.mubr.f32.gmra.mrb[0].mxu0 %v669
        %v854 = vpop.f32.mrb[0].mxu0
        %v855 = vadd.f32 %v534, %v854
        %v856 = vpop.f32.mrb[0].mxu0
        %857 = vmatprep.mubr.f32.mxu0 0.0
        %858 = vmatmul.mubr.f32.gmra.mrb[0].mxu0 %v672
        %v859 = vpop.f32.mrb[0].mxu0
        %v860 = vadd.f32 %v539, %v859
        %v861 = vpop.f32.mrb[0].mxu0
        %862 = vmatprep.mubr.f32.mxu0 0.0
        %863 = vmatmul.mubr.f32.gmra.mrb[0].mxu0 %v675
        %v864 = vpop.f32.mrb[0].mxu0
        %v865 = vadd.f32 %v544, %v864
        %v866 = vpop.f32.mrb[0].mxu0
        %867 = vmatprep.mubr.f32.mxu0 0.0
        %868 = vmatmul.mubr.f32.gmra.mrb[0].mxu0 %v678
        %v869 = vpop.f32.mrb[0].mxu0
        %v870 = vadd.f32 %v549, %v869
        %v871 = vpop.f32.mrb[0].mxu0
        %872 = vmatprep.mubr.f32.mxu0 0.0
        %873 = vmatmul.mubr.f32.gmra.mrb[0].mxu0 %v681
        %v874 = vpop.f32.mrb[0].mxu0
        %v875 = vadd.f32 %v554, %v874
        %v876 = vpop.f32.mrb[0].mxu0
        %877 = vmatprep.mubr.f32.mxu0 0.0
        %878 = vmatmul.mubr.f32.gmra.mrb[0].mxu0 %v684
        %v879 = vpop.f32.mrb[0].mxu0
        %v880 = vadd.f32 %v559, %v879
        %v881 = vpop.f32.mrb[0].mxu0
        %882 = vmatprep.mubr.f32.mxu0 0.0
        %883 = vmatmul.mubr.f32.gmra.mrb[0].mxu0 %v687
        %v884 = vpop.f32.mrb[0].mxu0
        %v885 = vadd.f32 %v564, %v884
        %v886 = vpop.f32.mrb[0].mxu0
        %887 = vmatprep.mubr.f32.mxu0 0.0
        %888 = vmatmul.mubr.f32.gmra.mrb[0].mxu0 %v690
        %v889 = vpop.f32.mrb[0].mxu0
        %v890 = vadd.f32 %v569, %v889
        %v891 = vpop.f32.mrb[0].mxu0
        %892 = vmatprep.mubr.f32.mxu0 0.0
        %893 = vmatmul.mubr.f32.gmra.mrb[0].mxu0 %v693
        %v894 = vpop.f32.mrb[0].mxu0
        %v895 = vadd.f32 %v574, %v894
        %v896 = vpop.f32.mrb[0].mxu0
        %897 = vmatprep.mubr.f32.mxu0 0.0
        %898 = vmatmul.mubr.f32.gmra.mrb[0].mxu0 %v696
        %v899 = vpop.f32.mrb[0].mxu0
        %v900 = vadd.f32 %v579, %v899
        %v901 = vpop.f32.mrb[0].mxu0
        %902 = vmatprep.mubr.f32.mxu0 0.0
        %903 = vmatmul.mubr.f32.gmra.mrb[0].mxu0 %v699
        %v904 = vpop.f32.mrb[0].mxu0
        %v905 = vadd.f32 %v584, %v904
        %v906 = vpop.f32.mrb[0].mxu0
        %907 = vmatprep.mubr.f32.mxu0 0.0
        %908 = vmatmul.mubr.f32.gmra.mrb[0].mxu0 %v702
        %v909 = vpop.f32.mrb[0].mxu0
        %v910 = vadd.f32 %v589, %v909
        %v911 = vpop.f32.mrb[0].mxu0
        %912 = vmatprep.mubr.f32.mxu0 0.0
        %913 = vmatmul.mubr.f32.gmra.mrb[0].mxu0 %v705
        %v914 = vpop.f32.mrb[0].mxu0
        %v915 = vadd.f32 %v594, %v914
        %v916 = vpop.f32.mrb[0].mxu0
        %917 = vmatprep.mubr.f32.mxu0 0.0
        %918 = vmatmul.mubr.f32.gmra.mrb[0].mxu0 %v708
        %v919 = vpop.f32.mrb[0].mxu0
        %v920 = vadd.f32 %v599, %v919
        %v921 = vpop.f32.mrb[0].mxu0
        %922 = vmatprep.mubr.f32.mxu0 0.0
        %923 = vmatmul.mubr.f32.gmra.mrb[0].mxu0 %v711
        %v924 = vpop.f32.mrb[0].mxu0
        %v925 = vadd.f32 %v604, %v924
        %v926 = vpop.f32.mrb[0].mxu0
        %927 = vmatprep.mubr.f32.mxu0 0.0
        %928 = vmatmul.mubr.f32.gmra.mrb[0].mxu0 %v714
        %v929 = vpop.f32.mrb[0].mxu0
        %v930 = vadd.f32 %v609, %v929
        %v931 = vpop.f32.mrb[0].mxu0
        %932 = vmatprep.mubr.f32.mxu0 0.0
        %933 = vmatmul.mubr.f32.gmra.mrb[0].mxu0 %v717
        %v934 = vpop.f32.mrb[0].mxu0
        %v935 = vadd.f32 %v614, %v934
        %v936 = vpop.f32.mrb[0].mxu0
        %937 = vmatprep.mubr.f32.mxu0 0.0
        %938 = vmatmul.mubr.f32.gmra.mrb[0].mxu0 %v720
        %v939 = vpop.f32.mrb[0].mxu0
        %v940 = vadd.f32 %v619, %v939
        %v941 = vpop.f32.mrb[0].mxu0
        %942 = vmatprep.mubr.f32.mxu0 0.0
        %943 = vmatmul.mubr.f32.gmra.mrb[0].mxu0 %v723
        %v944 = vpop.f32.mrb[0].mxu0
        %v945 = vadd.f32 %v624, %v944
        %v946 = vpop.f32.mrb[0].mxu0
        %947 = vmatprep.mubr.f32.mxu0 0.0
        %948 = vmatmul.mubr.f32.gmra.mrb[0].mxu0 %v726
        %v949 = vpop.f32.mrb[0].mxu0
        %v950 = vadd.f32 %v629, %v949
        %v951 = vpop.f32.mrb[0].mxu0
        %952 = vdwg.mxu0
        %v953 = vld [vmem:[%s240 + $0x2] sm:$0xff]
        %v954 = vld [vmem:[%s240 + $0xa] sm:$0xff]
        %v955 = vld [vmem:[%s240 + $0x1a] sm:$0xff]
        %v956 = vld [vmem:[%s240 + $0x22] sm:$0xff]
        %v957 = vld [vmem:[%s240 + $0x32] sm:$0xff]
        %v958 = vld [vmem:[%s240 + $0x3a] sm:$0xff]
        %v959 = vld [vmem:[%s240 + $0x4a] sm:$0xff]
        %v960 = vld [vmem:[%s240 + $0x52] sm:$0xff]
        %v961 = vld [vmem:[%s240 + $0x62] sm:$0xff]
        %v962 = vld [vmem:[%s240 + $0x6a] sm:$0xff]
        %v963 = vld [vmem:[%s240 + $0x7a] sm:$0xff]
        %v964 = vld [vmem:[%s240 + $0x82] sm:$0xff]
        %v965 = vld [vmem:[%s240 + $0x92] sm:$0xff]
        %v966 = vld [vmem:[%s240 + $0x9a] sm:$0xff]
        %v967 = vld [vmem:[%s240 + $0xaa] sm:$0xff]
        %v968 = vld [vmem:[%s240 + $0xb2] sm:$0xff]
        %v969 = vld [vmem:[%s240 + $0xc2] sm:$0xff]
        %v970 = vld [vmem:[%s240 + $0xca] sm:$0xff]
        %v971 = vld [vmem:[%s240 + $0xda] sm:$0xff]
        %v972 = vld [vmem:[%s240 + $0xe2] sm:$0xff]
        %v973 = vld [vmem:[%s240 + $0xf2] sm:$0xff]
        %v974 = vld [vmem:[%s240 + $0xfa] sm:$0xff]
        %v975 = vld [vmem:[%s240 + $0x10a] sm:$0xff]
        %v976 = vld [vmem:[%s240 + $0x112] sm:$0xff]
        %v977 = vld [vmem:[%s240 + $0x122] sm:$0xff]
        %v978 = vld [vmem:[%s240 + $0x12a] sm:$0xff]
        %v979 = vld [vmem:[%s240 + $0x13a] sm:$0xff]
        %v980 = vld [vmem:[%s240 + $0x142] sm:$0xff]
        %v981 = vld [vmem:[%s240 + $0x152] sm:$0xff]
        %v982 = vld [vmem:[%s240 + $0x15a] sm:$0xff]
        %v983 = vld [vmem:[%s240 + $0x16a] sm:$0xff]
        %v984 = vld [vmem:[%s240 + $0x172] sm:$0xff]
        %s985 = scalar_lea.vmem %s1, 16
        %v986 = vld [vmem:[%s985] sm:$0xff]
        %v988 = vsel %vm310, %v953, 0
        %v991 = vsel %vm310, %v954, 0
        %v994 = vsel %vm310, %v955, 0
        %v997 = vsel %vm310, %v956, 0
        %v1000 = vsel %vm310, %v957, 0
        %v1003 = vsel %vm310, %v958, 0
        %v1006 = vsel %vm310, %v959, 0
        %v1009 = vsel %vm310, %v960, 0
        %v1012 = vsel %vm310, %v961, 0
        %v1015 = vsel %vm310, %v962, 0
        %v1018 = vsel %vm310, %v963, 0
        %v1021 = vsel %vm310, %v964, 0
        %v1024 = vsel %vm310, %v965, 0
        %v1027 = vsel %vm310, %v966, 0
        %v1030 = vsel %vm310, %v967, 0
        %v1033 = vsel %vm310, %v968, 0
        %v1036 = vsel %vm310, %v969, 0
        %v1039 = vsel %vm310, %v970, 0
        %v1042 = vsel %vm310, %v971, 0
        %v1045 = vsel %vm310, %v972, 0
        %v1048 = vsel %vm310, %v973, 0
        %v1051 = vsel %vm310, %v974, 0
        %v1054 = vsel %vm310, %v975, 0
        %v1057 = vsel %vm310, %v976, 0
        %v1060 = vsel %vm310, %v977, 0
        %v1063 = vsel %vm310, %v978, 0
        %v1066 = vsel %vm310, %v979, 0
        %v1069 = vsel %vm310, %v980, 0
        %v1072 = vsel %vm310, %v981, 0
        %v1075 = vsel %vm310, %v982, 0
        %v1078 = vsel %vm310, %v983, 0
        %v1081 = vsel %vm310, %v984, 0
        %1083 = vmatprep.subr.mxu0 0.0
        %1084 = vmatpush1.msra.mxu0 %v986
        %1085 = vmatprep.subr.mxu0 0.0
        %1086 = vmatpush1.msra.mxu0 0.0
        %1087 = vmatprep.subr.mxu0 0.0
        %1088 = vmatpush1.msra.mxu0 0.0
        %1089 = vmatprep.subr.mxu0 0.0
        %1090 = vmatpush1.msra.mxu0 0.0
        %1091 = vmatprep.subr.mxu0 0.0
        %1092 = vmatpush1.msra.mxu0 0.0
        %1093 = vmatprep.subr.mxu0 0.0
        %1094 = vmatpush1.msra.mxu0 0.0
        %1095 = vmatprep.subr.mxu0 0.0
        %1096 = vmatpush1.msra.mxu0 0.0
        %1097 = vmatprep.subr.mxu0 0.0
        %1098 = vmatpush1.msra.mxu0 0.0
        %1099 = vmatprep.subr.mxu0 0.0
        %1100 = vmatpush1.msra.mxu0 0.0
        %1101 = vmatprep.subr.mxu0 0.0
        %1102 = vmatpush1.msra.mxu0 0.0
        %1103 = vmatprep.subr.mxu0 0.0
        %1104 = vmatpush1.msra.mxu0 0.0
        %1105 = vmatprep.subr.mxu0 0.0
        %1106 = vmatpush1.msra.mxu0 0.0
        %1107 = vmatprep.subr.mxu0 0.0
        %1108 = vmatpush1.msra.mxu0 0.0
        %1109 = vmatprep.subr.mxu0 0.0
        %1110 = vmatpush1.msra.mxu0 0.0
        %1111 = vmatprep.subr.mxu0 0.0
        %1112 = vmatpush1.msra.mxu0 0.0
        %1113 = vmatprep.subr.mxu0 0.0
        %1114 = vmatpush1.msra.mxu0 0.0
        %1115 = vmatprep.subr.mxu0 0.0
        %1116 = vmatpush1.msra.mxu0 0.0
        %1117 = vmatprep.subr.mxu0 0.0
        %1118 = vmatpush1.msra.mxu0 0.0
        %1119 = vmatprep.subr.mxu0 0.0
        %1120 = vmatpush1.msra.mxu0 0.0
        %1121 = vmatprep.subr.mxu0 0.0
        %1122 = vmatpush1.msra.mxu0 0.0
        %1123 = vmatprep.subr.mxu0 0.0
        %1124 = vmatpush1.msra.mxu0 0.0
        %1125 = vmatprep.subr.mxu0 0.0
        %1126 = vmatpush1.msra.mxu0 0.0
        %1127 = vmatprep.subr.mxu0 0.0
        %1128 = vmatpush1.msra.mxu0 0.0
        %1129 = vmatprep.subr.mxu0 0.0
        %1130 = vmatpush1.msra.mxu0 0.0
        %1131 = vmatprep.subr.mxu0 0.0
        %1132 = vmatpush1.msra.mxu0 0.0
        %1133 = vmatprep.subr.mxu0 0.0
        %1134 = vmatpush1.msra.mxu0 0.0
        %1135 = vmatprep.subr.mxu0 0.0
        %1136 = vmatpush1.msra.mxu0 0.0
        %1137 = vmatprep.subr.mxu0 0.0
        %1138 = vmatpush1.msra.mxu0 0.0
        %1139 = vmatprep.subr.mxu0 0.0
        %1140 = vmatpush1.msra.mxu0 0.0
        %1141 = vmatprep.subr.mxu0 0.0
        %1142 = vmatpush1.msra.mxu0 0.0
        %1143 = vmatprep.subr.mxu0 0.0
        %1144 = vmatpush1.msra.mxu0 0.0
        %1145 = vmatprep.subr.mxu0 0.0
        %1146 = vmatpush1.msra.mxu0 0.0
        %1147 = vmatprep.mubr.f32.mxu0 0.0
        %1148 = vmatmul.mubr.f32.gmra.mrb[0].mxu0 %v988
        %v1149 = vpop.f32.mrb[0].mxu0
        %v1150 = vadd.f32 0.0, %v1149
        %v1151 = vpop.f32.mrb[0].mxu0
        %1152 = vmatprep.mubr.f32.mxu0 0.0
        %1153 = vmatmul.mubr.f32.gmra.mrb[0].mxu0 %v991
        %v1154 = vpop.f32.mrb[0].mxu0
        %v1155 = vadd.f32 0.0, %v1154
        %v1156 = vpop.f32.mrb[0].mxu0
        %1157 = vmatprep.mubr.f32.mxu0 0.0
        %1158 = vmatmul.mubr.f32.gmra.mrb[0].mxu0 %v994
        %v1159 = vpop.f32.mrb[0].mxu0
        %v1160 = vadd.f32 0.0, %v1159
        %v1161 = vpop.f32.mrb[0].mxu0
        %1162 = vmatprep.mubr.f32.mxu0 0.0
        %1163 = vmatmul.mubr.f32.gmra.mrb[0].mxu0 %v997
        %v1164 = vpop.f32.mrb[0].mxu0
        %v1165 = vadd.f32 0.0, %v1164
        %v1166 = vpop.f32.mrb[0].mxu0
        %1167 = vmatprep.mubr.f32.mxu0 0.0
        %1168 = vmatmul.mubr.f32.gmra.mrb[0].mxu0 %v1000
        %v1169 = vpop.f32.mrb[0].mxu0
        %v1170 = vadd.f32 0.0, %v1169
        %v1171 = vpop.f32.mrb[0].mxu0
        %1172 = vmatprep.mubr.f32.mxu0 0.0
        %1173 = vmatmul.mubr.f32.gmra.mrb[0].mxu0 %v1003
        %v1174 = vpop.f32.mrb[0].mxu0
        %v1175 = vadd.f32 0.0, %v1174
        %v1176 = vpop.f32.mrb[0].mxu0
        %1177 = vmatprep.mubr.f32.mxu0 0.0
        %1178 = vmatmul.mubr.f32.gmra.mrb[0].mxu0 %v1006
        %v1179 = vpop.f32.mrb[0].mxu0
        %v1180 = vadd.f32 0.0, %v1179
        %v1181 = vpop.f32.mrb[0].mxu0
        %1182 = vmatprep.mubr.f32.mxu0 0.0
        %1183 = vmatmul.mubr.f32.gmra.mrb[0].mxu0 %v1009
        %v1184 = vpop.f32.mrb[0].mxu0
        %v1185 = vadd.f32 0.0, %v1184
        %v1186 = vpop.f32.mrb[0].mxu0
        %1187 = vmatprep.mubr.f32.mxu0 0.0
        %1188 = vmatmul.mubr.f32.gmra.mrb[0].mxu0 %v1012
        %v1189 = vpop.f32.mrb[0].mxu0
        %v1190 = vadd.f32 0.0, %v1189
        %v1191 = vpop.f32.mrb[0].mxu0
        %1192 = vmatprep.mubr.f32.mxu0 0.0
        %1193 = vmatmul.mubr.f32.gmra.mrb[0].mxu0 %v1015
        %v1194 = vpop.f32.mrb[0].mxu0
        %v1195 = vadd.f32 0.0, %v1194
        %v1196 = vpop.f32.mrb[0].mxu0
        %1197 = vmatprep.mubr.f32.mxu0 0.0
        %1198 = vmatmul.mubr.f32.gmra.mrb[0].mxu0 %v1018
        %v1199 = vpop.f32.mrb[0].mxu0
        %v1200 = vadd.f32 0.0, %v1199
        %v1201 = vpop.f32.mrb[0].mxu0
        %1202 = vmatprep.mubr.f32.mxu0 0.0
        %1203 = vmatmul.mubr.f32.gmra.mrb[0].mxu0 %v1021
        %v1204 = vpop.f32.mrb[0].mxu0
        %v1205 = vadd.f32 0.0, %v1204
        %v1206 = vpop.f32.mrb[0].mxu0
        %1207 = vmatprep.mubr.f32.mxu0 0.0
        %1208 = vmatmul.mubr.f32.gmra.mrb[0].mxu0 %v1024
        %v1209 = vpop.f32.mrb[0].mxu0
        %v1210 = vadd.f32 0.0, %v1209
        %v1211 = vpop.f32.mrb[0].mxu0
        %1212 = vmatprep.mubr.f32.mxu0 0.0
        %1213 = vmatmul.mubr.f32.gmra.mrb[0].mxu0 %v1027
        %v1214 = vpop.f32.mrb[0].mxu0
        %v1215 = vadd.f32 0.0, %v1214
        %v1216 = vpop.f32.mrb[0].mxu0
        %1217 = vmatprep.mubr.f32.mxu0 0.0
        %1218 = vmatmul.mubr.f32.gmra.mrb[0].mxu0 %v1030
        %v1219 = vpop.f32.mrb[0].mxu0
        %v1220 = vadd.f32 0.0, %v1219
        %v1221 = vpop.f32.mrb[0].mxu0
        %1222 = vmatprep.mubr.f32.mxu0 0.0
        %1223 = vmatmul.mubr.f32.gmra.mrb[0].mxu0 %v1033
        %v1224 = vpop.f32.mrb[0].mxu0
        %v1225 = vadd.f32 0.0, %v1224
        %v1226 = vpop.f32.mrb[0].mxu0
        %1227 = vmatprep.mubr.f32.mxu0 0.0
        %1228 = vmatmul.mubr.f32.gmra.mrb[0].mxu0 %v1036
        %v1229 = vpop.f32.mrb[0].mxu0
        %v1230 = vadd.f32 0.0, %v1229
        %v1231 = vpop.f32.mrb[0].mxu0
        %1232 = vmatprep.mubr.f32.mxu0 0.0
        %1233 = vmatmul.mubr.f32.gmra.mrb[0].mxu0 %v1039
        %v1234 = vpop.f32.mrb[0].mxu0
        %v1235 = vadd.f32 0.0, %v1234
        %v1236 = vpop.f32.mrb[0].mxu0
        %1237 = vmatprep.mubr.f32.mxu0 0.0
        %1238 = vmatmul.mubr.f32.gmra.mrb[0].mxu0 %v1042
        %v1239 = vpop.f32.mrb[0].mxu0
        %v1240 = vadd.f32 0.0, %v1239
        %v1241 = vpop.f32.mrb[0].mxu0
        %1242 = vmatprep.mubr.f32.mxu0 0.0
        %1243 = vmatmul.mubr.f32.gmra.mrb[0].mxu0 %v1045
        %v1244 = vpop.f32.mrb[0].mxu0
        %v1245 = vadd.f32 0.0, %v1244
        %v1246 = vpop.f32.mrb[0].mxu0
        %1247 = vmatprep.mubr.f32.mxu0 0.0
        %1248 = vmatmul.mubr.f32.gmra.mrb[0].mxu0 %v1048
        %v1249 = vpop.f32.mrb[0].mxu0
        %v1250 = vadd.f32 0.0, %v1249
        %v1251 = vpop.f32.mrb[0].mxu0
        %1252 = vmatprep.mubr.f32.mxu0 0.0
        %1253 = vmatmul.mubr.f32.gmra.mrb[0].mxu0 %v1051
        %v1254 = vpop.f32.mrb[0].mxu0
        %v1255 = vadd.f32 0.0, %v1254
        %v1256 = vpop.f32.mrb[0].mxu0
        %1257 = vmatprep.mubr.f32.mxu0 0.0
        %1258 = vmatmul.mubr.f32.gmra.mrb[0].mxu0 %v1054
        %v1259 = vpop.f32.mrb[0].mxu0
        %v1260 = vadd.f32 0.0, %v1259
        %v1261 = vpop.f32.mrb[0].mxu0
        %1262 = vmatprep.mubr.f32.mxu0 0.0
        %1263 = vmatmul.mubr.f32.gmra.mrb[0].mxu0 %v1057
        %v1264 = vpop.f32.mrb[0].mxu0
        %v1265 = vadd.f32 0.0, %v1264
        %v1266 = vpop.f32.mrb[0].mxu0
        %1267 = vmatprep.mubr.f32.mxu0 0.0
        %1268 = vmatmul.mubr.f32.gmra.mrb[0].mxu0 %v1060
        %v1269 = vpop.f32.mrb[0].mxu0
        %v1270 = vadd.f32 0.0, %v1269
        %v1271 = vpop.f32.mrb[0].mxu0
        %1272 = vmatprep.mubr.f32.mxu0 0.0
        %1273 = vmatmul.mubr.f32.gmra.mrb[0].mxu0 %v1063
        %v1274 = vpop.f32.mrb[0].mxu0
        %v1275 = vadd.f32 0.0, %v1274
        %v1276 = vpop.f32.mrb[0].mxu0
        %1277 = vmatprep.mubr.f32.mxu0 0.0
        %1278 = vmatmul.mubr.f32.gmra.mrb[0].mxu0 %v1066
        %v1279 = vpop.f32.mrb[0].mxu0
        %v1280 = vadd.f32 0.0, %v1279
        %v1281 = vpop.f32.mrb[0].mxu0
        %1282 = vmatprep.mubr.f32.mxu0 0.0
        %1283 = vmatmul.mubr.f32.gmra.mrb[0].mxu0 %v1069
        %v1284 = vpop.f32.mrb[0].mxu0
        %v1285 = vadd.f32 0.0, %v1284
        %v1286 = vpop.f32.mrb[0].mxu0
        %1287 = vmatprep.mubr.f32.mxu0 0.0
        %1288 = vmatmul.mubr.f32.gmra.mrb[0].mxu0 %v1072
        %v1289 = vpop.f32.mrb[0].mxu0
        %v1290 = vadd.f32 0.0, %v1289
        %v1291 = vpop.f32.mrb[0].mxu0
        %1292 = vmatprep.mubr.f32.mxu0 0.0
        %1293 = vmatmul.mubr.f32.gmra.mrb[0].mxu0 %v1075
        %v1294 = vpop.f32.mrb[0].mxu0
        %v1295 = vadd.f32 0.0, %v1294
        %v1296 = vpop.f32.mrb[0].mxu0
        %1297 = vmatprep.mubr.f32.mxu0 0.0
        %1298 = vmatmul.mubr.f32.gmra.mrb[0].mxu0 %v1078
        %v1299 = vpop.f32.mrb[0].mxu0
        %v1300 = vadd.f32 0.0, %v1299
        %v1301 = vpop.f32.mrb[0].mxu0
        %1302 = vmatprep.mubr.f32.mxu0 0.0
        %1303 = vmatmul.mubr.f32.gmra.mrb[0].mxu0 %v1081
        %v1304 = vpop.f32.mrb[0].mxu0
        %v1305 = vadd.f32 0.0, %v1304
        %v1306 = vpop.f32.mrb[0].mxu0
        %1307 = vdwg.mxu0
        %v1308 = vadd.f32 %v795, %v1150
        %v1309 = vadd.f32 %v800, %v1155
        %v1310 = vadd.f32 %v805, %v1160
        %v1311 = vadd.f32 %v810, %v1165
        %v1312 = vadd.f32 %v815, %v1170
        %v1313 = vadd.f32 %v820, %v1175
        %v1314 = vadd.f32 %v825, %v1180
        %v1315 = vadd.f32 %v830, %v1185
        %v1316 = vadd.f32 %v835, %v1190
        %v1317 = vadd.f32 %v840, %v1195
        %v1318 = vadd.f32 %v845, %v1200
        %v1319 = vadd.f32 %v850, %v1205
        %v1320 = vadd.f32 %v855, %v1210
        %v1321 = vadd.f32 %v860, %v1215
        %v1322 = vadd.f32 %v865, %v1220
        %v1323 = vadd.f32 %v870, %v1225
        %v1324 = vadd.f32 %v875, %v1230
        %v1325 = vadd.f32 %v880, %v1235
        %v1326 = vadd.f32 %v885, %v1240
        %v1327 = vadd.f32 %v890, %v1245
        %v1328 = vadd.f32 %v895, %v1250
        %v1329 = vadd.f32 %v900, %v1255
        %v1330 = vadd.f32 %v905, %v1260
        %v1331 = vadd.f32 %v910, %v1265
        %v1332 = vadd.f32 %v915, %v1270
        %v1333 = vadd.f32 %v920, %v1275
        %v1334 = vadd.f32 %v925, %v1280
        %v1335 = vadd.f32 %v930, %v1285
        %v1336 = vadd.f32 %v935, %v1290
        %v1337 = vadd.f32 %v940, %v1295
        %v1338 = vadd.f32 %v945, %v1300
        %v1339 = vadd.f32 %v950, %v1305
        %s1340 = scalar_lea.vmem %s240, 24
        %v1341 = vld [vmem:[%s1340] sm:$0xff]
        %v1342 = vld [vmem:[%s1340 + $0x8] sm:$0xff]
        %v1343 = vld [vmem:[%s1340 + $0x18] sm:$0xff]
        %v1344 = vld [vmem:[%s1340 + $0x20] sm:$0xff]
        %v1345 = vld [vmem:[%s1340 + $0x30] sm:$0xff]
        %v1346 = vld [vmem:[%s1340 + $0x38] sm:$0xff]
        %v1347 = vld [vmem:[%s1340 + $0x48] sm:$0xff]
        %v1348 = vld [vmem:[%s1340 + $0x50] sm:$0xff]
        %v1349 = vld [vmem:[%s1340 + $0x60] sm:$0xff]
        %v1350 = vld [vmem:[%s1340 + $0x68] sm:$0xff]
        %v1351 = vld [vmem:[%s1340 + $0x78] sm:$0xff]
        %v1352 = vld [vmem:[%s1340 + $0x80] sm:$0xff]
        %v1353 = vld [vmem:[%s1340 + $0x90] sm:$0xff]
        %v1354 = vld [vmem:[%s1340 + $0x98] sm:$0xff]
        %v1355 = vld [vmem:[%s1340 + $0xa8] sm:$0xff]
        %v1356 = vld [vmem:[%s1340 + $0xb0] sm:$0xff]
        %v1357 = vld [vmem:[%s1340 + $0xc0] sm:$0xff]
        %v1358 = vld [vmem:[%s1340 + $0xc8] sm:$0xff]
        %v1359 = vld [vmem:[%s1340 + $0xd8] sm:$0xff]
        %v1360 = vld [vmem:[%s1340 + $0xe0] sm:$0xff]
        %v1361 = vld [vmem:[%s1340 + $0xf0] sm:$0xff]
        %v1362 = vld [vmem:[%s1340 + $0xf8] sm:$0xff]
        %v1363 = vld [vmem:[%s1340 + $0x108] sm:$0xff]
        %v1364 = vld [vmem:[%s1340 + $0x110] sm:$0xff]
        %v1365 = vld [vmem:[%s1340 + $0x120] sm:$0xff]
        %v1366 = vld [vmem:[%s1340 + $0x128] sm:$0xff]
        %v1367 = vld [vmem:[%s1340 + $0x138] sm:$0xff]
        %v1368 = vld [vmem:[%s1340 + $0x140] sm:$0xff]
        %v1369 = vld [vmem:[%s1340 + $0x150] sm:$0xff]
        %v1370 = vld [vmem:[%s1340 + $0x158] sm:$0xff]
        %v1371 = vld [vmem:[%s1340 + $0x168] sm:$0xff]
        %v1372 = vld [vmem:[%s1340 + $0x170] sm:$0xff]
        %s1373 = scalar_lea.vmem %s1, 24
        %v1374 = vld [vmem:[%s1373] sm:$0xff]
        %v1376 = vsel %vm310, %v1341, 0
        %v1379 = vsel %vm310, %v1342, 0
        %v1382 = vsel %vm310, %v1343, 0
        %v1385 = vsel %vm310, %v1344, 0
        %v1388 = vsel %vm310, %v1345, 0
        %v1391 = vsel %vm310, %v1346, 0
        %v1394 = vsel %vm310, %v1347, 0
        %v1397 = vsel %vm310, %v1348, 0
        %v1400 = vsel %vm310, %v1349, 0
        %v1403 = vsel %vm310, %v1350, 0
        %v1406 = vsel %vm310, %v1351, 0
        %v1409 = vsel %vm310, %v1352, 0
        %v1412 = vsel %vm310, %v1353, 0
        %v1415 = vsel %vm310, %v1354, 0
        %v1418 = vsel %vm310, %v1355, 0
        %v1421 = vsel %vm310, %v1356, 0
        %v1424 = vsel %vm310, %v1357, 0
        %v1427 = vsel %vm310, %v1358, 0
        %v1430 = vsel %vm310, %v1359, 0
        %v1433 = vsel %vm310, %v1360, 0
        %v1436 = vsel %vm310, %v1361, 0
        %v1439 = vsel %vm310, %v1362, 0
        %v1442 = vsel %vm310, %v1363, 0
        %v1445 = vsel %vm310, %v1364, 0
        %v1448 = vsel %vm310, %v1365, 0
        %v1451 = vsel %vm310, %v1366, 0
        %v1454 = vsel %vm310, %v1367, 0
        %v1457 = vsel %vm310, %v1368, 0
        %v1460 = vsel %vm310, %v1369, 0
        %v1463 = vsel %vm310, %v1370, 0
        %v1466 = vsel %vm310, %v1371, 0
        %v1469 = vsel %vm310, %v1372, 0
        %1471 = vmatprep.subr.mxu0 0.0
        %1472 = vmatpush1.msra.mxu0 %v1374
        %1473 = vmatprep.subr.mxu0 0.0
        %1474 = vmatpush1.msra.mxu0 0.0
        %1475 = vmatprep.subr.mxu0 0.0
        %1476 = vmatpush1.msra.mxu0 0.0
        %1477 = vmatprep.subr.mxu0 0.0
        %1478 = vmatpush1.msra.mxu0 0.0
        %1479 = vmatprep.subr.mxu0 0.0
        %1480 = vmatpush1.msra.mxu0 0.0
        %1481 = vmatprep.subr.mxu0 0.0
        %1482 = vmatpush1.msra.mxu0 0.0
        %1483 = vmatprep.subr.mxu0 0.0
        %1484 = vmatpush1.msra.mxu0 0.0
        %1485 = vmatprep.subr.mxu0 0.0
        %1486 = vmatpush1.msra.mxu0 0.0
        %1487 = vmatprep.subr.mxu0 0.0
        %1488 = vmatpush1.msra.mxu0 0.0
        %1489 = vmatprep.subr.mxu0 0.0
        %1490 = vmatpush1.msra.mxu0 0.0
        %1491 = vmatprep.subr.mxu0 0.0
        %1492 = vmatpush1.msra.mxu0 0.0
        %1493 = vmatprep.subr.mxu0 0.0
        %1494 = vmatpush1.msra.mxu0 0.0
        %1495 = vmatprep.subr.mxu0 0.0
        %1496 = vmatpush1.msra.mxu0 0.0
        %1497 = vmatprep.subr.mxu0 0.0
        %1498 = vmatpush1.msra.mxu0 0.0
        %1499 = vmatprep.subr.mxu0 0.0
        %1500 = vmatpush1.msra.mxu0 0.0
        %1501 = vmatprep.subr.mxu0 0.0
        %1502 = vmatpush1.msra.mxu0 0.0
        %1503 = vmatprep.subr.mxu0 0.0
        %1504 = vmatpush1.msra.mxu0 0.0
        %1505 = vmatprep.subr.mxu0 0.0
        %1506 = vmatpush1.msra.mxu0 0.0
        %1507 = vmatprep.subr.mxu0 0.0
        %1508 = vmatpush1.msra.mxu0 0.0
        %1509 = vmatprep.subr.mxu0 0.0
        %1510 = vmatpush1.msra.mxu0 0.0
        %1511 = vmatprep.subr.mxu0 0.0
        %1512 = vmatpush1.msra.mxu0 0.0
        %1513 = vmatprep.subr.mxu0 0.0
        %1514 = vmatpush1.msra.mxu0 0.0
        %1515 = vmatprep.subr.mxu0 0.0
        %1516 = vmatpush1.msra.mxu0 0.0
        %1517 = vmatprep.subr.mxu0 0.0
        %1518 = vmatpush1.msra.mxu0 0.0
        %1519 = vmatprep.subr.mxu0 0.0
        %1520 = vmatpush1.msra.mxu0 0.0
        %1521 = vmatprep.subr.mxu0 0.0
        %1522 = vmatpush1.msra.mxu0 0.0
        %1523 = vmatprep.subr.mxu0 0.0
        %1524 = vmatpush1.msra.mxu0 0.0
        %1525 = vmatprep.subr.mxu0 0.0
        %1526 = vmatpush1.msra.mxu0 0.0
        %1527 = vmatprep.subr.mxu0 0.0
        %1528 = vmatpush1.msra.mxu0 0.0
        %1529 = vmatprep.subr.mxu0 0.0
        %1530 = vmatpush1.msra.mxu0 0.0
        %1531 = vmatprep.subr.mxu0 0.0
        %1532 = vmatpush1.msra.mxu0 0.0
        %1533 = vmatprep.subr.mxu0 0.0
        %1534 = vmatpush1.msra.mxu0 0.0
        %1535 = vmatprep.mubr.f32.mxu0 0.0
        %1536 = vmatmul.mubr.f32.gmra.mrb[0].mxu0 %v1376
        %v1537 = vpop.f32.mrb[0].mxu0
        %v1538 = vadd.f32 0.0, %v1537
        %v1539 = vpop.f32.mrb[0].mxu0
        %1540 = vmatprep.mubr.f32.mxu0 0.0
        %1541 = vmatmul.mubr.f32.gmra.mrb[0].mxu0 %v1379
        %v1542 = vpop.f32.mrb[0].mxu0
        %v1543 = vadd.f32 0.0, %v1542
        %v1544 = vpop.f32.mrb[0].mxu0
        %1545 = vmatprep.mubr.f32.mxu0 0.0
        %1546 = vmatmul.mubr.f32.gmra.mrb[0].mxu0 %v1382
        %v1547 = vpop.f32.mrb[0].mxu0
        %v1548 = vadd.f32 0.0, %v1547
        %v1549 = vpop.f32.mrb[0].mxu0
        %1550 = vmatprep.mubr.f32.mxu0 0.0
        %1551 = vmatmul.mubr.f32.gmra.mrb[0].mxu0 %v1385
        %v1552 = vpop.f32.mrb[0].mxu0
        %v1553 = vadd.f32 0.0, %v1552
        %v1554 = vpop.f32.mrb[0].mxu0
        %1555 = vmatprep.mubr.f32.mxu0 0.0
        %1556 = vmatmul.mubr.f32.gmra.mrb[0].mxu0 %v1388
        %v1557 = vpop.f32.mrb[0].mxu0
        %v1558 = vadd.f32 0.0, %v1557
        %v1559 = vpop.f32.mrb[0].mxu0
        %1560 = vmatprep.mubr.f32.mxu0 0.0
        %1561 = vmatmul.mubr.f32.gmra.mrb[0].mxu0 %v1391
        %v1562 = vpop.f32.mrb[0].mxu0
        %v1563 = vadd.f32 0.0, %v1562
        %v1564 = vpop.f32.mrb[0].mxu0
        %1565 = vmatprep.mubr.f32.mxu0 0.0
        %1566 = vmatmul.mubr.f32.gmra.mrb[0].mxu0 %v1394
        %v1567 = vpop.f32.mrb[0].mxu0
        %v1568 = vadd.f32 0.0, %v1567
        %v1569 = vpop.f32.mrb[0].mxu0
        %1570 = vmatprep.mubr.f32.mxu0 0.0
        %1571 = vmatmul.mubr.f32.gmra.mrb[0].mxu0 %v1397
        %v1572 = vpop.f32.mrb[0].mxu0
        %v1573 = vadd.f32 0.0, %v1572
        %v1574 = vpop.f32.mrb[0].mxu0
        %1575 = vmatprep.mubr.f32.mxu0 0.0
        %1576 = vmatmul.mubr.f32.gmra.mrb[0].mxu0 %v1400
        %v1577 = vpop.f32.mrb[0].mxu0
        %v1578 = vadd.f32 0.0, %v1577
        %v1579 = vpop.f32.mrb[0].mxu0
        %1580 = vmatprep.mubr.f32.mxu0 0.0
        %1581 = vmatmul.mubr.f32.gmra.mrb[0].mxu0 %v1403
        %v1582 = vpop.f32.mrb[0].mxu0
        %v1583 = vadd.f32 0.0, %v1582
        %v1584 = vpop.f32.mrb[0].mxu0
        %1585 = vmatprep.mubr.f32.mxu0 0.0
        %1586 = vmatmul.mubr.f32.gmra.mrb[0].mxu0 %v1406
        %v1587 = vpop.f32.mrb[0].mxu0
        %v1588 = vadd.f32 0.0, %v1587
        %v1589 = vpop.f32.mrb[0].mxu0
        %1590 = vmatprep.mubr.f32.mxu0 0.0
        %1591 = vmatmul.mubr.f32.gmra.mrb[0].mxu0 %v1409
        %v1592 = vpop.f32.mrb[0].mxu0
        %v1593 = vadd.f32 0.0, %v1592
        %v1594 = vpop.f32.mrb[0].mxu0
        %1595 = vmatprep.mubr.f32.mxu0 0.0
        %1596 = vmatmul.mubr.f32.gmra.mrb[0].mxu0 %v1412
        %v1597 = vpop.f32.mrb[0].mxu0
        %v1598 = vadd.f32 0.0, %v1597
        %v1599 = vpop.f32.mrb[0].mxu0
        %1600 = vmatprep.mubr.f32.mxu0 0.0
        %1601 = vmatmul.mubr.f32.gmra.mrb[0].mxu0 %v1415
        %v1602 = vpop.f32.mrb[0].mxu0
        %v1603 = vadd.f32 0.0, %v1602
        %v1604 = vpop.f32.mrb[0].mxu0
        %1605 = vmatprep.mubr.f32.mxu0 0.0
        %1606 = vmatmul.mubr.f32.gmra.mrb[0].mxu0 %v1418
        %v1607 = vpop.f32.mrb[0].mxu0
        %v1608 = vadd.f32 0.0, %v1607
        %v1609 = vpop.f32.mrb[0].mxu0
        %1610 = vmatprep.mubr.f32.mxu0 0.0
        %1611 = vmatmul.mubr.f32.gmra.mrb[0].mxu0 %v1421
        %v1612 = vpop.f32.mrb[0].mxu0
        %v1613 = vadd.f32 0.0, %v1612
        %v1614 = vpop.f32.mrb[0].mxu0
        %1615 = vmatprep.mubr.f32.mxu0 0.0
        %1616 = vmatmul.mubr.f32.gmra.mrb[0].mxu0 %v1424
        %v1617 = vpop.f32.mrb[0].mxu0
        %v1618 = vadd.f32 0.0, %v1617
        %v1619 = vpop.f32.mrb[0].mxu0
        %1620 = vmatprep.mubr.f32.mxu0 0.0
        %1621 = vmatmul.mubr.f32.gmra.mrb[0].mxu0 %v1427
        %v1622 = vpop.f32.mrb[0].mxu0
        %v1623 = vadd.f32 0.0, %v1622
        %v1624 = vpop.f32.mrb[0].mxu0
        %1625 = vmatprep.mubr.f32.mxu0 0.0
        %1626 = vmatmul.mubr.f32.gmra.mrb[0].mxu0 %v1430
        %v1627 = vpop.f32.mrb[0].mxu0
        %v1628 = vadd.f32 0.0, %v1627
        %v1629 = vpop.f32.mrb[0].mxu0
        %1630 = vmatprep.mubr.f32.mxu0 0.0
        %1631 = vmatmul.mubr.f32.gmra.mrb[0].mxu0 %v1433
        %v1632 = vpop.f32.mrb[0].mxu0
        %v1633 = vadd.f32 0.0, %v1632
        %v1634 = vpop.f32.mrb[0].mxu0
        %1635 = vmatprep.mubr.f32.mxu0 0.0
        %1636 = vmatmul.mubr.f32.gmra.mrb[0].mxu0 %v1436
        %v1637 = vpop.f32.mrb[0].mxu0
        %v1638 = vadd.f32 0.0, %v1637
        %v1639 = vpop.f32.mrb[0].mxu0
        %1640 = vmatprep.mubr.f32.mxu0 0.0
        %1641 = vmatmul.mubr.f32.gmra.mrb[0].mxu0 %v1439
        %v1642 = vpop.f32.mrb[0].mxu0
        %v1643 = vadd.f32 0.0, %v1642
        %v1644 = vpop.f32.mrb[0].mxu0
        %1645 = vmatprep.mubr.f32.mxu0 0.0
        %1646 = vmatmul.mubr.f32.gmra.mrb[0].mxu0 %v1442
        %v1647 = vpop.f32.mrb[0].mxu0
        %v1648 = vadd.f32 0.0, %v1647
        %v1649 = vpop.f32.mrb[0].mxu0
        %1650 = vmatprep.mubr.f32.mxu0 0.0
        %1651 = vmatmul.mubr.f32.gmra.mrb[0].mxu0 %v1445
        %v1652 = vpop.f32.mrb[0].mxu0
        %v1653 = vadd.f32 0.0, %v1652
        %v1654 = vpop.f32.mrb[0].mxu0
        %1655 = vmatprep.mubr.f32.mxu0 0.0
        %1656 = vmatmul.mubr.f32.gmra.mrb[0].mxu0 %v1448
        %v1657 = vpop.f32.mrb[0].mxu0
        %v1658 = vadd.f32 0.0, %v1657
        %v1659 = vpop.f32.mrb[0].mxu0
        %1660 = vmatprep.mubr.f32.mxu0 0.0
        %1661 = vmatmul.mubr.f32.gmra.mrb[0].mxu0 %v1451
        %v1662 = vpop.f32.mrb[0].mxu0
        %v1663 = vadd.f32 0.0, %v1662
        %v1664 = vpop.f32.mrb[0].mxu0
        %1665 = vmatprep.mubr.f32.mxu0 0.0
        %1666 = vmatmul.mubr.f32.gmra.mrb[0].mxu0 %v1454
        %v1667 = vpop.f32.mrb[0].mxu0
        %v1668 = vadd.f32 0.0, %v1667
        %v1669 = vpop.f32.mrb[0].mxu0
        %1670 = vmatprep.mubr.f32.mxu0 0.0
        %1671 = vmatmul.mubr.f32.gmra.mrb[0].mxu0 %v1457
        %v1672 = vpop.f32.mrb[0].mxu0
        %v1673 = vadd.f32 0.0, %v1672
        %v1674 = vpop.f32.mrb[0].mxu0
        %1675 = vmatprep.mubr.f32.mxu0 0.0
        %1676 = vmatmul.mubr.f32.gmra.mrb[0].mxu0 %v1460
        %v1677 = vpop.f32.mrb[0].mxu0
        %v1678 = vadd.f32 0.0, %v1677
        %v1679 = vpop.f32.mrb[0].mxu0
        %1680 = vmatprep.mubr.f32.mxu0 0.0
        %1681 = vmatmul.mubr.f32.gmra.mrb[0].mxu0 %v1463
        %v1682 = vpop.f32.mrb[0].mxu0
        %v1683 = vadd.f32 0.0, %v1682
        %v1684 = vpop.f32.mrb[0].mxu0
        %1685 = vmatprep.mubr.f32.mxu0 0.0
        %1686 = vmatmul.mubr.f32.gmra.mrb[0].mxu0 %v1466
        %v1687 = vpop.f32.mrb[0].mxu0
        %v1688 = vadd.f32 0.0, %v1687
        %v1689 = vpop.f32.mrb[0].mxu0
        %1690 = vmatprep.mubr.f32.mxu0 0.0
        %1691 = vmatmul.mubr.f32.gmra.mrb[0].mxu0 %v1469
        %v1692 = vpop.f32.mrb[0].mxu0
        %v1693 = vadd.f32 0.0, %v1692
        %v1694 = vpop.f32.mrb[0].mxu0
        %1695 = vdwg.mxu0
        %v1696 = vadd.f32 %v1308, %v1538
        %v1697 = vadd.f32 %v1309, %v1543
        %v1698 = vadd.f32 %v1310, %v1548
        %v1699 = vadd.f32 %v1311, %v1553
        %v1700 = vadd.f32 %v1312, %v1558
        %v1701 = vadd.f32 %v1313, %v1563
        %v1702 = vadd.f32 %v1314, %v1568
        %v1703 = vadd.f32 %v1315, %v1573
        %v1704 = vadd.f32 %v1316, %v1578
        %v1705 = vadd.f32 %v1317, %v1583
        %v1706 = vadd.f32 %v1318, %v1588
        %v1707 = vadd.f32 %v1319, %v1593
        %v1708 = vadd.f32 %v1320, %v1598
        %v1709 = vadd.f32 %v1321, %v1603
        %v1710 = vadd.f32 %v1322, %v1608
        %v1711 = vadd.f32 %v1323, %v1613
        %v1712 = vadd.f32 %v1324, %v1618
        %v1713 = vadd.f32 %v1325, %v1623
        %v1714 = vadd.f32 %v1326, %v1628
        %v1715 = vadd.f32 %v1327, %v1633
        %v1716 = vadd.f32 %v1328, %v1638
        %v1717 = vadd.f32 %v1329, %v1643
        %v1718 = vadd.f32 %v1330, %v1648
        %v1719 = vadd.f32 %v1331, %v1653
        %v1720 = vadd.f32 %v1332, %v1658
        %v1721 = vadd.f32 %v1333, %v1663
        %v1722 = vadd.f32 %v1334, %v1668
        %v1723 = vadd.f32 %v1335, %v1673
        %v1724 = vadd.f32 %v1336, %v1678
        %v1725 = vadd.f32 %v1337, %v1683
        %v1726 = vadd.f32 %v1338, %v1688
        %v1727 = vadd.f32 %v1339, %v1693
        %v1728 = vld [vmem:[%s1340 + $0x1] sm:$0xff]
        %v1729 = vld [vmem:[%s1340 + $0x9] sm:$0xff]
        %v1730 = vld [vmem:[%s1340 + $0x19] sm:$0xff]
        %v1731 = vld [vmem:[%s1340 + $0x21] sm:$0xff]
        %v1732 = vld [vmem:[%s1340 + $0x31] sm:$0xff]
        %v1733 = vld [vmem:[%s1340 + $0x39] sm:$0xff]
        %v1734 = vld [vmem:[%s1340 + $0x49] sm:$0xff]
        %v1735 = vld [vmem:[%s1340 + $0x51] sm:$0xff]
        %v1736 = vld [vmem:[%s1340 + $0x61] sm:$0xff]
        %v1737 = vld [vmem:[%s1340 + $0x69] sm:$0xff]
        %v1738 = vld [vmem:[%s1340 + $0x79] sm:$0xff]
        %v1739 = vld [vmem:[%s1340 + $0x81] sm:$0xff]
        %v1740 = vld [vmem:[%s1340 + $0x91] sm:$0xff]
        %v1741 = vld [vmem:[%s1340 + $0x99] sm:$0xff]
        %v1742 = vld [vmem:[%s1340 + $0xa9] sm:$0xff]
        %v1743 = vld [vmem:[%s1340 + $0xb1] sm:$0xff]
        %v1744 = vld [vmem:[%s1340 + $0xc1] sm:$0xff]
        %v1745 = vld [vmem:[%s1340 + $0xc9] sm:$0xff]
        %v1746 = vld [vmem:[%s1340 + $0xd9] sm:$0xff]
        %v1747 = vld [vmem:[%s1340 + $0xe1] sm:$0xff]
        %v1748 = vld [vmem:[%s1340 + $0xf1] sm:$0xff]
        %v1749 = vld [vmem:[%s1340 + $0xf9] sm:$0xff]
        %v1750 = vld [vmem:[%s1340 + $0x109] sm:$0xff]
        %v1751 = vld [vmem:[%s1340 + $0x111] sm:$0xff]
        %v1752 = vld [vmem:[%s1340 + $0x121] sm:$0xff]
        %v1753 = vld [vmem:[%s1340 + $0x129] sm:$0xff]
        %v1754 = vld [vmem:[%s1340 + $0x139] sm:$0xff]
        %v1755 = vld [vmem:[%s1340 + $0x141] sm:$0xff]
        %v1756 = vld [vmem:[%s1340 + $0x151] sm:$0xff]
        %v1757 = vld [vmem:[%s1340 + $0x159] sm:$0xff]
        %v1758 = vld [vmem:[%s1340 + $0x169] sm:$0xff]
        %v1759 = vld [vmem:[%s1340 + $0x171] sm:$0xff]
        %s1760 = scalar_lea.vmem %s1, 32
        %v1761 = vld [vmem:[%s1760] sm:$0xff]
        %v1763 = vsel %vm310, %v1728, 0
        %v1766 = vsel %vm310, %v1729, 0
        %v1769 = vsel %vm310, %v1730, 0
        %v1772 = vsel %vm310, %v1731, 0
        %v1775 = vsel %vm310, %v1732, 0
        %v1778 = vsel %vm310, %v1733, 0
        %v1781 = vsel %vm310, %v1734, 0
        %v1784 = vsel %vm310, %v1735, 0
        %v1787 = vsel %vm310, %v1736, 0
        %v1790 = vsel %vm310, %v1737, 0
        %v1793 = vsel %vm310, %v1738, 0
        %v1796 = vsel %vm310, %v1739, 0
        %v1799 = vsel %vm310, %v1740, 0
        %v1802 = vsel %vm310, %v1741, 0
        %v1805 = vsel %vm310, %v1742, 0
        %v1808 = vsel %vm310, %v1743, 0
        %v1811 = vsel %vm310, %v1744, 0
        %v1814 = vsel %vm310, %v1745, 0
        %v1817 = vsel %vm310, %v1746, 0
        %v1820 = vsel %vm310, %v1747, 0
        %v1823 = vsel %vm310, %v1748, 0
        %v1826 = vsel %vm310, %v1749, 0
        %v1829 = vsel %vm310, %v1750, 0
        %v1832 = vsel %vm310, %v1751, 0
        %v1835 = vsel %vm310, %v1752, 0
        %v1838 = vsel %vm310, %v1753, 0
        %v1841 = vsel %vm310, %v1754, 0
        %v1844 = vsel %vm310, %v1755, 0
        %v1847 = vsel %vm310, %v1756, 0
        %v1850 = vsel %vm310, %v1757, 0
        %v1853 = vsel %vm310, %v1758, 0
        %v1856 = vsel %vm310, %v1759, 0
        %1858 = vmatprep.subr.mxu0 0.0
        %1859 = vmatpush1.msra.mxu0 %v1761
        %1860 = vmatprep.subr.mxu0 0.0
        %1861 = vmatpush1.msra.mxu0 0.0
        %1862 = vmatprep.subr.mxu0 0.0
        %1863 = vmatpush1.msra.mxu0 0.0
        %1864 = vmatprep.subr.mxu0 0.0
        %1865 = vmatpush1.msra.mxu0 0.0
        %1866 = vmatprep.subr.mxu0 0.0
        %1867 = vmatpush1.msra.mxu0 0.0
        %1868 = vmatprep.subr.mxu0 0.0
        %1869 = vmatpush1.msra.mxu0 0.0
        %1870 = vmatprep.subr.mxu0 0.0
        %1871 = vmatpush1.msra.mxu0 0.0
        %1872 = vmatprep.subr.mxu0 0.0
        %1873 = vmatpush1.msra.mxu0 0.0
        %1874 = vmatprep.subr.mxu0 0.0
        %1875 = vmatpush1.msra.mxu0 0.0
        %1876 = vmatprep.subr.mxu0 0.0
        %1877 = vmatpush1.msra.mxu0 0.0
        %1878 = vmatprep.subr.mxu0 0.0
        %1879 = vmatpush1.msra.mxu0 0.0
        %1880 = vmatprep.subr.mxu0 0.0
        %1881 = vmatpush1.msra.mxu0 0.0
        %1882 = vmatprep.subr.mxu0 0.0
        %1883 = vmatpush1.msra.mxu0 0.0
        %1884 = vmatprep.subr.mxu0 0.0
        %1885 = vmatpush1.msra.mxu0 0.0
        %1886 = vmatprep.subr.mxu0 0.0
        %1887 = vmatpush1.msra.mxu0 0.0
        %1888 = vmatprep.subr.mxu0 0.0
        %1889 = vmatpush1.msra.mxu0 0.0
        %1890 = vmatprep.subr.mxu0 0.0
        %1891 = vmatpush1.msra.mxu0 0.0
        %1892 = vmatprep.subr.mxu0 0.0
        %1893 = vmatpush1.msra.mxu0 0.0
        %1894 = vmatprep.subr.mxu0 0.0
        %1895 = vmatpush1.msra.mxu0 0.0
        %1896 = vmatprep.subr.mxu0 0.0
        %1897 = vmatpush1.msra.mxu0 0.0
        %1898 = vmatprep.subr.mxu0 0.0
        %1899 = vmatpush1.msra.mxu0 0.0
        %1900 = vmatprep.subr.mxu0 0.0
        %1901 = vmatpush1.msra.mxu0 0.0
        %1902 = vmatprep.subr.mxu0 0.0
        %1903 = vmatpush1.msra.mxu0 0.0
        %1904 = vmatprep.subr.mxu0 0.0
        %1905 = vmatpush1.msra.mxu0 0.0
        %1906 = vmatprep.subr.mxu0 0.0
        %1907 = vmatpush1.msra.mxu0 0.0
        %1908 = vmatprep.subr.mxu0 0.0
        %1909 = vmatpush1.msra.mxu0 0.0
        %1910 = vmatprep.subr.mxu0 0.0
        %1911 = vmatpush1.msra.mxu0 0.0
        %1912 = vmatprep.subr.mxu0 0.0
        %1913 = vmatpush1.msra.mxu0 0.0
        %1914 = vmatprep.subr.mxu0 0.0
        %1915 = vmatpush1.msra.mxu0 0.0
        %1916 = vmatprep.subr.mxu0 0.0
        %1917 = vmatpush1.msra.mxu0 0.0
        %1918 = vmatprep.subr.mxu0 0.0
        %1919 = vmatpush1.msra.mxu0 0.0
        %1920 = vmatprep.subr.mxu0 0.0
        %1921 = vmatpush1.msra.mxu0 0.0
        %1922 = vmatprep.mubr.f32.mxu0 0.0
        %1923 = vmatmul.mubr.f32.gmra.mrb[0].mxu0 %v1763
        %v1924 = vpop.f32.mrb[0].mxu0
        %v1925 = vadd.f32 0.0, %v1924
        %v1926 = vpop.f32.mrb[0].mxu0
        %1927 = vmatprep.mubr.f32.mxu0 0.0
        %1928 = vmatmul.mubr.f32.gmra.mrb[0].mxu0 %v1766
        %v1929 = vpop.f32.mrb[0].mxu0
        %v1930 = vadd.f32 0.0, %v1929
        %v1931 = vpop.f32.mrb[0].mxu0
        %1932 = vmatprep.mubr.f32.mxu0 0.0
        %1933 = vmatmul.mubr.f32.gmra.mrb[0].mxu0 %v1769
        %v1934 = vpop.f32.mrb[0].mxu0
        %v1935 = vadd.f32 0.0, %v1934
        %v1936 = vpop.f32.mrb[0].mxu0
        %1937 = vmatprep.mubr.f32.mxu0 0.0
        %1938 = vmatmul.mubr.f32.gmra.mrb[0].mxu0 %v1772
        %v1939 = vpop.f32.mrb[0].mxu0
        %v1940 = vadd.f32 0.0, %v1939
        %v1941 = vpop.f32.mrb[0].mxu0
        %1942 = vmatprep.mubr.f32.mxu0 0.0
        %1943 = vmatmul.mubr.f32.gmra.mrb[0].mxu0 %v1775
        %v1944 = vpop.f32.mrb[0].mxu0
        %v1945 = vadd.f32 0.0, %v1944
        %v1946 = vpop.f32.mrb[0].mxu0
        %1947 = vmatprep.mubr.f32.mxu0 0.0
        %1948 = vmatmul.mubr.f32.gmra.mrb[0].mxu0 %v1778
        %v1949 = vpop.f32.mrb[0].mxu0
        %v1950 = vadd.f32 0.0, %v1949
        %v1951 = vpop.f32.mrb[0].mxu0
        %1952 = vmatprep.mubr.f32.mxu0 0.0
        %1953 = vmatmul.mubr.f32.gmra.mrb[0].mxu0 %v1781
        %v1954 = vpop.f32.mrb[0].mxu0
        %v1955 = vadd.f32 0.0, %v1954
        %v1956 = vpop.f32.mrb[0].mxu0
        %1957 = vmatprep.mubr.f32.mxu0 0.0
        %1958 = vmatmul.mubr.f32.gmra.mrb[0].mxu0 %v1784
        %v1959 = vpop.f32.mrb[0].mxu0
        %v1960 = vadd.f32 0.0, %v1959
        %v1961 = vpop.f32.mrb[0].mxu0
        %1962 = vmatprep.mubr.f32.mxu0 0.0
        %1963 = vmatmul.mubr.f32.gmra.mrb[0].mxu0 %v1787
        %v1964 = vpop.f32.mrb[0].mxu0
        %v1965 = vadd.f32 0.0, %v1964
        %v1966 = vpop.f32.mrb[0].mxu0
        %1967 = vmatprep.mubr.f32.mxu0 0.0
        %1968 = vmatmul.mubr.f32.gmra.mrb[0].mxu0 %v1790
        %v1969 = vpop.f32.mrb[0].mxu0
        %v1970 = vadd.f32 0.0, %v1969
        %v1971 = vpop.f32.mrb[0].mxu0
        %1972 = vmatprep.mubr.f32.mxu0 0.0
        %1973 = vmatmul.mubr.f32.gmra.mrb[0].mxu0 %v1793
        %v1974 = vpop.f32.mrb[0].mxu0
        %v1975 = vadd.f32 0.0, %v1974
        %v1976 = vpop.f32.mrb[0].mxu0
        %1977 = vmatprep.mubr.f32.mxu0 0.0
        %1978 = vmatmul.mubr.f32.gmra.mrb[0].mxu0 %v1796
        %v1979 = vpop.f32.mrb[0].mxu0
        %v1980 = vadd.f32 0.0, %v1979
        %v1981 = vpop.f32.mrb[0].mxu0
        %1982 = vmatprep.mubr.f32.mxu0 0.0
        %1983 = vmatmul.mubr.f32.gmra.mrb[0].mxu0 %v1799
        %v1984 = vpop.f32.mrb[0].mxu0
        %v1985 = vadd.f32 0.0, %v1984
        %v1986 = vpop.f32.mrb[0].mxu0
        %1987 = vmatprep.mubr.f32.mxu0 0.0
        %1988 = vmatmul.mubr.f32.gmra.mrb[0].mxu0 %v1802
        %v1989 = vpop.f32.mrb[0].mxu0
        %v1990 = vadd.f32 0.0, %v1989
        %v1991 = vpop.f32.mrb[0].mxu0
        %1992 = vmatprep.mubr.f32.mxu0 0.0
        %1993 = vmatmul.mubr.f32.gmra.mrb[0].mxu0 %v1805
        %v1994 = vpop.f32.mrb[0].mxu0
        %v1995 = vadd.f32 0.0, %v1994
        %v1996 = vpop.f32.mrb[0].mxu0
        %1997 = vmatprep.mubr.f32.mxu0 0.0
        %1998 = vmatmul.mubr.f32.gmra.mrb[0].mxu0 %v1808
        %v1999 = vpop.f32.mrb[0].mxu0
        %v2000 = vadd.f32 0.0, %v1999
        %v2001 = vpop.f32.mrb[0].mxu0
        %2002 = vmatprep.mubr.f32.mxu0 0.0
        %2003 = vmatmul.mubr.f32.gmra.mrb[0].mxu0 %v1811
        %v2004 = vpop.f32.mrb[0].mxu0
        %v2005 = vadd.f32 0.0, %v2004
        %v2006 = vpop.f32.mrb[0].mxu0
        %2007 = vmatprep.mubr.f32.mxu0 0.0
        %2008 = vmatmul.mubr.f32.gmra.mrb[0].mxu0 %v1814
        %v2009 = vpop.f32.mrb[0].mxu0
        %v2010 = vadd.f32 0.0, %v2009
        %v2011 = vpop.f32.mrb[0].mxu0
        %2012 = vmatprep.mubr.f32.mxu0 0.0
        %2013 = vmatmul.mubr.f32.gmra.mrb[0].mxu0 %v1817
        %v2014 = vpop.f32.mrb[0].mxu0
        %v2015 = vadd.f32 0.0, %v2014
        %v2016 = vpop.f32.mrb[0].mxu0
        %2017 = vmatprep.mubr.f32.mxu0 0.0
        %2018 = vmatmul.mubr.f32.gmra.mrb[0].mxu0 %v1820
        %v2019 = vpop.f32.mrb[0].mxu0
        %v2020 = vadd.f32 0.0, %v2019
        %v2021 = vpop.f32.mrb[0].mxu0
        %2022 = vmatprep.mubr.f32.mxu0 0.0
        %2023 = vmatmul.mubr.f32.gmra.mrb[0].mxu0 %v1823
        %v2024 = vpop.f32.mrb[0].mxu0
        %v2025 = vadd.f32 0.0, %v2024
        %v2026 = vpop.f32.mrb[0].mxu0
        %2027 = vmatprep.mubr.f32.mxu0 0.0
        %2028 = vmatmul.mubr.f32.gmra.mrb[0].mxu0 %v1826
        %v2029 = vpop.f32.mrb[0].mxu0
        %v2030 = vadd.f32 0.0, %v2029
        %v2031 = vpop.f32.mrb[0].mxu0
        %2032 = vmatprep.mubr.f32.mxu0 0.0
        %2033 = vmatmul.mubr.f32.gmra.mrb[0].mxu0 %v1829
        %v2034 = vpop.f32.mrb[0].mxu0
        %v2035 = vadd.f32 0.0, %v2034
        %v2036 = vpop.f32.mrb[0].mxu0
        %2037 = vmatprep.mubr.f32.mxu0 0.0
        %2038 = vmatmul.mubr.f32.gmra.mrb[0].mxu0 %v1832
        %v2039 = vpop.f32.mrb[0].mxu0
        %v2040 = vadd.f32 0.0, %v2039
        %v2041 = vpop.f32.mrb[0].mxu0
        %2042 = vmatprep.mubr.f32.mxu0 0.0
        %2043 = vmatmul.mubr.f32.gmra.mrb[0].mxu0 %v1835
        %v2044 = vpop.f32.mrb[0].mxu0
        %v2045 = vadd.f32 0.0, %v2044
        %v2046 = vpop.f32.mrb[0].mxu0
        %2047 = vmatprep.mubr.f32.mxu0 0.0
        %2048 = vmatmul.mubr.f32.gmra.mrb[0].mxu0 %v1838
        %v2049 = vpop.f32.mrb[0].mxu0
        %v2050 = vadd.f32 0.0, %v2049
        %v2051 = vpop.f32.mrb[0].mxu0
        %2052 = vmatprep.mubr.f32.mxu0 0.0
        %2053 = vmatmul.mubr.f32.gmra.mrb[0].mxu0 %v1841
        %v2054 = vpop.f32.mrb[0].mxu0
        %v2055 = vadd.f32 0.0, %v2054
        %v2056 = vpop.f32.mrb[0].mxu0
        %2057 = vmatprep.mubr.f32.mxu0 0.0
        %2058 = vmatmul.mubr.f32.gmra.mrb[0].mxu0 %v1844
        %v2059 = vpop.f32.mrb[0].mxu0
        %v2060 = vadd.f32 0.0, %v2059
        %v2061 = vpop.f32.mrb[0].mxu0
        %2062 = vmatprep.mubr.f32.mxu0 0.0
        %2063 = vmatmul.mubr.f32.gmra.mrb[0].mxu0 %v1847
        %v2064 = vpop.f32.mrb[0].mxu0
        %v2065 = vadd.f32 0.0, %v2064
        %v2066 = vpop.f32.mrb[0].mxu0
        %2067 = vmatprep.mubr.f32.mxu0 0.0
        %2068 = vmatmul.mubr.f32.gmra.mrb[0].mxu0 %v1850
        %v2069 = vpop.f32.mrb[0].mxu0
        %v2070 = vadd.f32 0.0, %v2069
        %v2071 = vpop.f32.mrb[0].mxu0
        %2072 = vmatprep.mubr.f32.mxu0 0.0
        %2073 = vmatmul.mubr.f32.gmra.mrb[0].mxu0 %v1853
        %v2074 = vpop.f32.mrb[0].mxu0
        %v2075 = vadd.f32 0.0, %v2074
        %v2076 = vpop.f32.mrb[0].mxu0
        %2077 = vmatprep.mubr.f32.mxu0 0.0
        %2078 = vmatmul.mubr.f32.gmra.mrb[0].mxu0 %v1856
        %v2079 = vpop.f32.mrb[0].mxu0
        %v2080 = vadd.f32 0.0, %v2079
        %v2081 = vpop.f32.mrb[0].mxu0
        %2082 = vdwg.mxu0
        %v2083 = vadd.f32 %v1696, %v1925
        %v2084 = vadd.f32 %v1697, %v1930
        %v2085 = vadd.f32 %v1698, %v1935
        %v2086 = vadd.f32 %v1699, %v1940
        %v2087 = vadd.f32 %v1700, %v1945
        %v2088 = vadd.f32 %v1701, %v1950
        %v2089 = vadd.f32 %v1702, %v1955
        %v2090 = vadd.f32 %v1703, %v1960
        %v2091 = vadd.f32 %v1704, %v1965
        %v2092 = vadd.f32 %v1705, %v1970
        %v2093 = vadd.f32 %v1706, %v1975
        %v2094 = vadd.f32 %v1707, %v1980
        %v2095 = vadd.f32 %v1708, %v1985
        %v2096 = vadd.f32 %v1709, %v1990
        %v2097 = vadd.f32 %v1710, %v1995
        %v2098 = vadd.f32 %v1711, %v2000
        %v2099 = vadd.f32 %v1712, %v2005
        %v2100 = vadd.f32 %v1713, %v2010
        %v2101 = vadd.f32 %v1714, %v2015
        %v2102 = vadd.f32 %v1715, %v2020
        %v2103 = vadd.f32 %v1716, %v2025
        %v2104 = vadd.f32 %v1717, %v2030
        %v2105 = vadd.f32 %v1718, %v2035
        %v2106 = vadd.f32 %v1719, %v2040
        %v2107 = vadd.f32 %v1720, %v2045
        %v2108 = vadd.f32 %v1721, %v2050
        %v2109 = vadd.f32 %v1722, %v2055
        %v2110 = vadd.f32 %v1723, %v2060
        %v2111 = vadd.f32 %v1724, %v2065
        %v2112 = vadd.f32 %v1725, %v2070
        %v2113 = vadd.f32 %v1726, %v2075
        %v2114 = vadd.f32 %v1727, %v2080
        %v2115 = vld [vmem:[%s2] sm:$0xff]
        %2116 = vmatprep.subr.mxu0 0.0
        %2117 = vmatpush1.msra.mxu0 %v2115
        %2118 = vmatprep.subr.mxu0 0.0
        %2119 = vmatpush1.msra.mxu0 0.0
        %2120 = vmatprep.subr.mxu0 0.0
        %2121 = vmatpush1.msra.mxu0 0.0
        %2122 = vmatprep.subr.mxu0 0.0
        %2123 = vmatpush1.msra.mxu0 0.0
        %2124 = vmatprep.subr.mxu0 0.0
        %2125 = vmatpush1.msra.mxu0 0.0
        %2126 = vmatprep.subr.mxu0 0.0
        %2127 = vmatpush1.msra.mxu0 0.0
        %2128 = vmatprep.subr.mxu0 0.0
        %2129 = vmatpush1.msra.mxu0 0.0
        %2130 = vmatprep.subr.mxu0 0.0
        %2131 = vmatpush1.msra.mxu0 0.0
        %2132 = vmatprep.subr.mxu0 0.0
        %2133 = vmatpush1.msra.mxu0 0.0
        %2134 = vmatprep.subr.mxu0 0.0
        %2135 = vmatpush1.msra.mxu0 0.0
        %2136 = vmatprep.subr.mxu0 0.0
        %2137 = vmatpush1.msra.mxu0 0.0
        %2138 = vmatprep.subr.mxu0 0.0
        %2139 = vmatpush1.msra.mxu0 0.0
        %2140 = vmatprep.subr.mxu0 0.0
        %2141 = vmatpush1.msra.mxu0 0.0
        %2142 = vmatprep.subr.mxu0 0.0
        %2143 = vmatpush1.msra.mxu0 0.0
        %2144 = vmatprep.subr.mxu0 0.0
        %2145 = vmatpush1.msra.mxu0 0.0
        %2146 = vmatprep.subr.mxu0 0.0
        %2147 = vmatpush1.msra.mxu0 0.0
        %2148 = vmatprep.subr.mxu0 0.0
        %2149 = vmatpush1.msra.mxu0 0.0
        %2150 = vmatprep.subr.mxu0 0.0
        %2151 = vmatpush1.msra.mxu0 0.0
        %2152 = vmatprep.subr.mxu0 0.0
        %2153 = vmatpush1.msra.mxu0 0.0
        %2154 = vmatprep.subr.mxu0 0.0
        %2155 = vmatpush1.msra.mxu0 0.0
        %2156 = vmatprep.subr.mxu0 0.0
        %2157 = vmatpush1.msra.mxu0 0.0
        %2158 = vmatprep.subr.mxu0 0.0
        %2159 = vmatpush1.msra.mxu0 0.0
        %2160 = vmatprep.subr.mxu0 0.0
        %2161 = vmatpush1.msra.mxu0 0.0
        %2162 = vmatprep.subr.mxu0 0.0
        %2163 = vmatpush1.msra.mxu0 0.0
        %2164 = vmatprep.subr.mxu0 0.0
        %2165 = vmatpush1.msra.mxu0 0.0
        %2166 = vmatprep.subr.mxu0 0.0
        %2167 = vmatpush1.msra.mxu0 0.0
        %2168 = vmatprep.subr.mxu0 0.0
        %2169 = vmatpush1.msra.mxu0 0.0
        %2170 = vmatprep.subr.mxu0 0.0
        %2171 = vmatpush1.msra.mxu0 0.0
        %2172 = vmatprep.subr.mxu0 0.0
        %2173 = vmatpush1.msra.mxu0 0.0
        %2174 = vmatprep.subr.mxu0 0.0
        %2175 = vmatpush1.msra.mxu0 0.0
        %2176 = vmatprep.subr.mxu0 0.0
        %2177 = vmatpush1.msra.mxu0 0.0
        %2178 = vmatprep.subr.mxu0 0.0
        %2179 = vmatpush1.msra.mxu0 0.0
        %2180 = vmatprep.mubr.f32.mxu0 0.0
        %2181 = vmatmul.mubr.f32.gmra.mrb[0].mxu0 %v1763
        %v2182 = vpop.f32.mrb[0].mxu0
        %v2183 = vadd.f32 0.0, %v2182
        %v2184 = vpop.f32.mrb[0].mxu0
        %2185 = vmatprep.mubr.f32.mxu0 0.0
        %2186 = vmatmul.mubr.f32.gmra.mrb[0].mxu0 %v1766
        %v2187 = vpop.f32.mrb[0].mxu0
        %v2188 = vadd.f32 0.0, %v2187
        %v2189 = vpop.f32.mrb[0].mxu0
        %2190 = vmatprep.mubr.f32.mxu0 0.0
        %2191 = vmatmul.mubr.f32.gmra.mrb[0].mxu0 %v1769
        %v2192 = vpop.f32.mrb[0].mxu0
        %v2193 = vadd.f32 0.0, %v2192
        %v2194 = vpop.f32.mrb[0].mxu0
        %2195 = vmatprep.mubr.f32.mxu0 0.0
        %2196 = vmatmul.mubr.f32.gmra.mrb[0].mxu0 %v1772
        %v2197 = vpop.f32.mrb[0].mxu0
        %v2198 = vadd.f32 0.0, %v2197
        %v2199 = vpop.f32.mrb[0].mxu0
        %2200 = vmatprep.mubr.f32.mxu0 0.0
        %2201 = vmatmul.mubr.f32.gmra.mrb[0].mxu0 %v1775
        %v2202 = vpop.f32.mrb[0].mxu0
        %v2203 = vadd.f32 0.0, %v2202
        %v2204 = vpop.f32.mrb[0].mxu0
        %2205 = vmatprep.mubr.f32.mxu0 0.0
        %2206 = vmatmul.mubr.f32.gmra.mrb[0].mxu0 %v1778
        %v2207 = vpop.f32.mrb[0].mxu0
        %v2208 = vadd.f32 0.0, %v2207
        %v2209 = vpop.f32.mrb[0].mxu0
        %2210 = vmatprep.mubr.f32.mxu0 0.0
        %2211 = vmatmul.mubr.f32.gmra.mrb[0].mxu0 %v1781
        %v2212 = vpop.f32.mrb[0].mxu0
        %v2213 = vadd.f32 0.0, %v2212
        %v2214 = vpop.f32.mrb[0].mxu0
        %2215 = vmatprep.mubr.f32.mxu0 0.0
        %2216 = vmatmul.mubr.f32.gmra.mrb[0].mxu0 %v1784
        %v2217 = vpop.f32.mrb[0].mxu0
        %v2218 = vadd.f32 0.0, %v2217
        %v2219 = vpop.f32.mrb[0].mxu0
        %2220 = vmatprep.mubr.f32.mxu0 0.0
        %2221 = vmatmul.mubr.f32.gmra.mrb[0].mxu0 %v1787
        %v2222 = vpop.f32.mrb[0].mxu0
        %v2223 = vadd.f32 0.0, %v2222
        %v2224 = vpop.f32.mrb[0].mxu0
        %2225 = vmatprep.mubr.f32.mxu0 0.0
        %2226 = vmatmul.mubr.f32.gmra.mrb[0].mxu0 %v1790
        %v2227 = vpop.f32.mrb[0].mxu0
        %v2228 = vadd.f32 0.0, %v2227
        %v2229 = vpop.f32.mrb[0].mxu0
        %2230 = vmatprep.mubr.f32.mxu0 0.0
        %2231 = vmatmul.mubr.f32.gmra.mrb[0].mxu0 %v1793
        %v2232 = vpop.f32.mrb[0].mxu0
        %v2233 = vadd.f32 0.0, %v2232
        %v2234 = vpop.f32.mrb[0].mxu0
        %2235 = vmatprep.mubr.f32.mxu0 0.0
        %2236 = vmatmul.mubr.f32.gmra.mrb[0].mxu0 %v1796
        %v2237 = vpop.f32.mrb[0].mxu0
        %v2238 = vadd.f32 0.0, %v2237
        %v2239 = vpop.f32.mrb[0].mxu0
        %2240 = vmatprep.mubr.f32.mxu0 0.0
        %2241 = vmatmul.mubr.f32.gmra.mrb[0].mxu0 %v1799
        %v2242 = vpop.f32.mrb[0].mxu0
        %v2243 = vadd.f32 0.0, %v2242
        %v2244 = vpop.f32.mrb[0].mxu0
        %2245 = vmatprep.mubr.f32.mxu0 0.0
        %2246 = vmatmul.mubr.f32.gmra.mrb[0].mxu0 %v1802
        %v2247 = vpop.f32.mrb[0].mxu0
        %v2248 = vadd.f32 0.0, %v2247
        %v2249 = vpop.f32.mrb[0].mxu0
        %2250 = vmatprep.mubr.f32.mxu0 0.0
        %2251 = vmatmul.mubr.f32.gmra.mrb[0].mxu0 %v1805
        %v2252 = vpop.f32.mrb[0].mxu0
        %v2253 = vadd.f32 0.0, %v2252
        %v2254 = vpop.f32.mrb[0].mxu0
        %2255 = vmatprep.mubr.f32.mxu0 0.0
        %2256 = vmatmul.mubr.f32.gmra.mrb[0].mxu0 %v1808
        %v2257 = vpop.f32.mrb[0].mxu0
        %v2258 = vadd.f32 0.0, %v2257
        %v2259 = vpop.f32.mrb[0].mxu0
        %2260 = vmatprep.mubr.f32.mxu0 0.0
        %2261 = vmatmul.mubr.f32.gmra.mrb[0].mxu0 %v1811
        %v2262 = vpop.f32.mrb[0].mxu0
        %v2263 = vadd.f32 0.0, %v2262
        %v2264 = vpop.f32.mrb[0].mxu0
        %2265 = vmatprep.mubr.f32.mxu0 0.0
        %2266 = vmatmul.mubr.f32.gmra.mrb[0].mxu0 %v1814
        %v2267 = vpop.f32.mrb[0].mxu0
        %v2268 = vadd.f32 0.0, %v2267
        %v2269 = vpop.f32.mrb[0].mxu0
        %2270 = vmatprep.mubr.f32.mxu0 0.0
        %2271 = vmatmul.mubr.f32.gmra.mrb[0].mxu0 %v1817
        %v2272 = vpop.f32.mrb[0].mxu0
        %v2273 = vadd.f32 0.0, %v2272
        %v2274 = vpop.f32.mrb[0].mxu0
        %2275 = vmatprep.mubr.f32.mxu0 0.0
        %2276 = vmatmul.mubr.f32.gmra.mrb[0].mxu0 %v1820
        %v2277 = vpop.f32.mrb[0].mxu0
        %v2278 = vadd.f32 0.0, %v2277
        %v2279 = vpop.f32.mrb[0].mxu0
        %2280 = vmatprep.mubr.f32.mxu0 0.0
        %2281 = vmatmul.mubr.f32.gmra.mrb[0].mxu0 %v1823
        %v2282 = vpop.f32.mrb[0].mxu0
        %v2283 = vadd.f32 0.0, %v2282
        %v2284 = vpop.f32.mrb[0].mxu0
        %2285 = vmatprep.mubr.f32.mxu0 0.0
        %2286 = vmatmul.mubr.f32.gmra.mrb[0].mxu0 %v1826
        %v2287 = vpop.f32.mrb[0].mxu0
        %v2288 = vadd.f32 0.0, %v2287
        %v2289 = vpop.f32.mrb[0].mxu0
        %2290 = vmatprep.mubr.f32.mxu0 0.0
        %2291 = vmatmul.mubr.f32.gmra.mrb[0].mxu0 %v1829
        %v2292 = vpop.f32.mrb[0].mxu0
        %v2293 = vadd.f32 0.0, %v2292
        %v2294 = vpop.f32.mrb[0].mxu0
        %2295 = vmatprep.mubr.f32.mxu0 0.0
        %2296 = vmatmul.mubr.f32.gmra.mrb[0].mxu0 %v1832
        %v2297 = vpop.f32.mrb[0].mxu0
        %v2298 = vadd.f32 0.0, %v2297
        %v2299 = vpop.f32.mrb[0].mxu0
        %2300 = vmatprep.mubr.f32.mxu0 0.0
        %2301 = vmatmul.mubr.f32.gmra.mrb[0].mxu0 %v1835
        %v2302 = vpop.f32.mrb[0].mxu0
        %v2303 = vadd.f32 0.0, %v2302
        %v2304 = vpop.f32.mrb[0].mxu0
        %2305 = vmatprep.mubr.f32.mxu0 0.0
        %2306 = vmatmul.mubr.f32.gmra.mrb[0].mxu0 %v1838
        %v2307 = vpop.f32.mrb[0].mxu0
        %v2308 = vadd.f32 0.0, %v2307
        %v2309 = vpop.f32.mrb[0].mxu0
        %2310 = vmatprep.mubr.f32.mxu0 0.0
        %2311 = vmatmul.mubr.f32.gmra.mrb[0].mxu0 %v1841
        %v2312 = vpop.f32.mrb[0].mxu0
        %v2313 = vadd.f32 0.0, %v2312
        %v2314 = vpop.f32.mrb[0].mxu0
        %2315 = vmatprep.mubr.f32.mxu0 0.0
        %2316 = vmatmul.mubr.f32.gmra.mrb[0].mxu0 %v1844
        %v2317 = vpop.f32.mrb[0].mxu0
        %v2318 = vadd.f32 0.0, %v2317
        %v2319 = vpop.f32.mrb[0].mxu0
        %2320 = vmatprep.mubr.f32.mxu0 0.0
        %2321 = vmatmul.mubr.f32.gmra.mrb[0].mxu0 %v1847
        %v2322 = vpop.f32.mrb[0].mxu0
        %v2323 = vadd.f32 0.0, %v2322
        %v2324 = vpop.f32.mrb[0].mxu0
        %2325 = vmatprep.mubr.f32.mxu0 0.0
        %2326 = vmatmul.mubr.f32.gmra.mrb[0].mxu0 %v1850
        %v2327 = vpop.f32.mrb[0].mxu0
        %v2328 = vadd.f32 0.0, %v2327
        %v2329 = vpop.f32.mrb[0].mxu0
        %2330 = vmatprep.mubr.f32.mxu0 0.0
        %2331 = vmatmul.mubr.f32.gmra.mrb[0].mxu0 %v1853
        %v2332 = vpop.f32.mrb[0].mxu0
        %v2333 = vadd.f32 0.0, %v2332
        %v2334 = vpop.f32.mrb[0].mxu0
        %2335 = vmatprep.mubr.f32.mxu0 0.0
        %2336 = vmatmul.mubr.f32.gmra.mrb[0].mxu0 %v1856
        %v2337 = vpop.f32.mrb[0].mxu0
        %v2338 = vadd.f32 0.0, %v2337
        %v2339 = vpop.f32.mrb[0].mxu0
        %2340 = vdwg.mxu0
        %v2341 = vld [vmem:[%s1340 + $0x2] sm:$0xff]
        %v2342 = vld [vmem:[%s1340 + $0xa] sm:$0xff]
        %v2343 = vld [vmem:[%s1340 + $0x1a] sm:$0xff]
        %v2344 = vld [vmem:[%s1340 + $0x22] sm:$0xff]
        %v2345 = vld [vmem:[%s1340 + $0x32] sm:$0xff]
        %v2346 = vld [vmem:[%s1340 + $0x3a] sm:$0xff]
        %v2347 = vld [vmem:[%s1340 + $0x4a] sm:$0xff]
        %v2348 = vld [vmem:[%s1340 + $0x52] sm:$0xff]
        %v2349 = vld [vmem:[%s1340 + $0x62] sm:$0xff]
        %v2350 = vld [vmem:[%s1340 + $0x6a] sm:$0xff]
        %v2351 = vld [vmem:[%s1340 + $0x7a] sm:$0xff]
        %v2352 = vld [vmem:[%s1340 + $0x82] sm:$0xff]
        %v2353 = vld [vmem:[%s1340 + $0x92] sm:$0xff]
        %v2354 = vld [vmem:[%s1340 + $0x9a] sm:$0xff]
        %v2355 = vld [vmem:[%s1340 + $0xaa] sm:$0xff]
        %v2356 = vld [vmem:[%s1340 + $0xb2] sm:$0xff]
        %v2357 = vld [vmem:[%s1340 + $0xc2] sm:$0xff]
        %v2358 = vld [vmem:[%s1340 + $0xca] sm:$0xff]
        %v2359 = vld [vmem:[%s1340 + $0xda] sm:$0xff]
        %v2360 = vld [vmem:[%s1340 + $0xe2] sm:$0xff]
        %v2361 = vld [vmem:[%s1340 + $0xf2] sm:$0xff]
        %v2362 = vld [vmem:[%s1340 + $0xfa] sm:$0xff]
        %v2363 = vld [vmem:[%s1340 + $0x10a] sm:$0xff]
        %v2364 = vld [vmem:[%s1340 + $0x112] sm:$0xff]
        %v2365 = vld [vmem:[%s1340 + $0x122] sm:$0xff]
        %v2366 = vld [vmem:[%s1340 + $0x12a] sm:$0xff]
        %v2367 = vld [vmem:[%s1340 + $0x13a] sm:$0xff]
        %v2368 = vld [vmem:[%s1340 + $0x142] sm:$0xff]
        %v2369 = vld [vmem:[%s1340 + $0x152] sm:$0xff]
        %v2370 = vld [vmem:[%s1340 + $0x15a] sm:$0xff]
        %v2371 = vld [vmem:[%s1340 + $0x16a] sm:$0xff]
        %v2372 = vld [vmem:[%s1340 + $0x172] sm:$0xff]
        %s2373 = scalar_lea.vmem %s1, 40
        %v2374 = vld [vmem:[%s2373] sm:$0xff]
        %v2376 = vsel %vm310, %v2341, 0
        %v2379 = vsel %vm310, %v2342, 0
        %v2382 = vsel %vm310, %v2343, 0
        %v2385 = vsel %vm310, %v2344, 0
        %v2388 = vsel %vm310, %v2345, 0
        %v2391 = vsel %vm310, %v2346, 0
        %v2394 = vsel %vm310, %v2347, 0
        %v2397 = vsel %vm310, %v2348, 0
        %v2400 = vsel %vm310, %v2349, 0
        %v2403 = vsel %vm310, %v2350, 0
        %v2406 = vsel %vm310, %v2351, 0
        %v2409 = vsel %vm310, %v2352, 0
        %v2412 = vsel %vm310, %v2353, 0
        %v2415 = vsel %vm310, %v2354, 0
        %v2418 = vsel %vm310, %v2355, 0
        %v2421 = vsel %vm310, %v2356, 0
        %v2424 = vsel %vm310, %v2357, 0
        %v2427 = vsel %vm310, %v2358, 0
        %v2430 = vsel %vm310, %v2359, 0
        %v2433 = vsel %vm310, %v2360, 0
        %v2436 = vsel %vm310, %v2361, 0
        %v2439 = vsel %vm310, %v2362, 0
        %v2442 = vsel %vm310, %v2363, 0
        %v2445 = vsel %vm310, %v2364, 0
        %v2448 = vsel %vm310, %v2365, 0
        %v2451 = vsel %vm310, %v2366, 0
        %v2454 = vsel %vm310, %v2367, 0
        %v2457 = vsel %vm310, %v2368, 0
        %v2460 = vsel %vm310, %v2369, 0
        %v2463 = vsel %vm310, %v2370, 0
        %v2466 = vsel %vm310, %v2371, 0
        %v2469 = vsel %vm310, %v2372, 0
        %2471 = vmatprep.subr.mxu0 0.0
        %2472 = vmatpush1.msra.mxu0 %v2374
        %2473 = vmatprep.subr.mxu0 0.0
        %2474 = vmatpush1.msra.mxu0 0.0
        %2475 = vmatprep.subr.mxu0 0.0
        %2476 = vmatpush1.msra.mxu0 0.0
        %2477 = vmatprep.subr.mxu0 0.0
        %2478 = vmatpush1.msra.mxu0 0.0
        %2479 = vmatprep.subr.mxu0 0.0
        %2480 = vmatpush1.msra.mxu0 0.0
        %2481 = vmatprep.subr.mxu0 0.0
        %2482 = vmatpush1.msra.mxu0 0.0
        %2483 = vmatprep.subr.mxu0 0.0
        %2484 = vmatpush1.msra.mxu0 0.0
        %2485 = vmatprep.subr.mxu0 0.0
        %2486 = vmatpush1.msra.mxu0 0.0
        %2487 = vmatprep.subr.mxu0 0.0
        %2488 = vmatpush1.msra.mxu0 0.0
        %2489 = vmatprep.subr.mxu0 0.0
        %2490 = vmatpush1.msra.mxu0 0.0
        %2491 = vmatprep.subr.mxu0 0.0
        %2492 = vmatpush1.msra.mxu0 0.0
        %2493 = vmatprep.subr.mxu0 0.0
        %2494 = vmatpush1.msra.mxu0 0.0
        %2495 = vmatprep.subr.mxu0 0.0
        %2496 = vmatpush1.msra.mxu0 0.0
        %2497 = vmatprep.subr.mxu0 0.0
        %2498 = vmatpush1.msra.mxu0 0.0
        %2499 = vmatprep.subr.mxu0 0.0
        %2500 = vmatpush1.msra.mxu0 0.0
        %2501 = vmatprep.subr.mxu0 0.0
        %2502 = vmatpush1.msra.mxu0 0.0
        %2503 = vmatprep.subr.mxu0 0.0
        %2504 = vmatpush1.msra.mxu0 0.0
        %2505 = vmatprep.subr.mxu0 0.0
        %2506 = vmatpush1.msra.mxu0 0.0
        %2507 = vmatprep.subr.mxu0 0.0
        %2508 = vmatpush1.msra.mxu0 0.0
        %2509 = vmatprep.subr.mxu0 0.0
        %2510 = vmatpush1.msra.mxu0 0.0
        %2511 = vmatprep.subr.mxu0 0.0
        %2512 = vmatpush1.msra.mxu0 0.0
        %2513 = vmatprep.subr.mxu0 0.0
        %2514 = vmatpush1.msra.mxu0 0.0
        %2515 = vmatprep.subr.mxu0 0.0
        %2516 = vmatpush1.msra.mxu0 0.0
        %2517 = vmatprep.subr.mxu0 0.0
        %2518 = vmatpush1.msra.mxu0 0.0
        %2519 = vmatprep.subr.mxu0 0.0
        %2520 = vmatpush1.msra.mxu0 0.0
        %2521 = vmatprep.subr.mxu0 0.0
        %2522 = vmatpush1.msra.mxu0 0.0
        %2523 = vmatprep.subr.mxu0 0.0
        %2524 = vmatpush1.msra.mxu0 0.0
        %2525 = vmatprep.subr.mxu0 0.0
        %2526 = vmatpush1.msra.mxu0 0.0
        %2527 = vmatprep.subr.mxu0 0.0
        %2528 = vmatpush1.msra.mxu0 0.0
        %2529 = vmatprep.subr.mxu0 0.0
        %2530 = vmatpush1.msra.mxu0 0.0
        %2531 = vmatprep.subr.mxu0 0.0
        %2532 = vmatpush1.msra.mxu0 0.0
        %2533 = vmatprep.subr.mxu0 0.0
        %2534 = vmatpush1.msra.mxu0 0.0
        %2535 = vmatprep.mubr.f32.mxu0 0.0
        %2536 = vmatmul.mubr.f32.gmra.mrb[0].mxu0 %v2376
        %v2537 = vpop.f32.mrb[0].mxu0
        %v2538 = vadd.f32 0.0, %v2537
        %v2539 = vpop.f32.mrb[0].mxu0
        %2540 = vmatprep.mubr.f32.mxu0 0.0
        %2541 = vmatmul.mubr.f32.gmra.mrb[0].mxu0 %v2379
        %v2542 = vpop.f32.mrb[0].mxu0
        %v2543 = vadd.f32 0.0, %v2542
        %v2544 = vpop.f32.mrb[0].mxu0
        %2545 = vmatprep.mubr.f32.mxu0 0.0
        %2546 = vmatmul.mubr.f32.gmra.mrb[0].mxu0 %v2382
        %v2547 = vpop.f32.mrb[0].mxu0
        %v2548 = vadd.f32 0.0, %v2547
        %v2549 = vpop.f32.mrb[0].mxu0
        %2550 = vmatprep.mubr.f32.mxu0 0.0
        %2551 = vmatmul.mubr.f32.gmra.mrb[0].mxu0 %v2385
        %v2552 = vpop.f32.mrb[0].mxu0
        %v2553 = vadd.f32 0.0, %v2552
        %v2554 = vpop.f32.mrb[0].mxu0
        %2555 = vmatprep.mubr.f32.mxu0 0.0
        %2556 = vmatmul.mubr.f32.gmra.mrb[0].mxu0 %v2388
        %v2557 = vpop.f32.mrb[0].mxu0
        %v2558 = vadd.f32 0.0, %v2557
        %v2559 = vpop.f32.mrb[0].mxu0
        %2560 = vmatprep.mubr.f32.mxu0 0.0
        %2561 = vmatmul.mubr.f32.gmra.mrb[0].mxu0 %v2391
        %v2562 = vpop.f32.mrb[0].mxu0
        %v2563 = vadd.f32 0.0, %v2562
        %v2564 = vpop.f32.mrb[0].mxu0
        %2565 = vmatprep.mubr.f32.mxu0 0.0
        %2566 = vmatmul.mubr.f32.gmra.mrb[0].mxu0 %v2394
        %v2567 = vpop.f32.mrb[0].mxu0
        %v2568 = vadd.f32 0.0, %v2567
        %v2569 = vpop.f32.mrb[0].mxu0
        %2570 = vmatprep.mubr.f32.mxu0 0.0
        %2571 = vmatmul.mubr.f32.gmra.mrb[0].mxu0 %v2397
        %v2572 = vpop.f32.mrb[0].mxu0
        %v2573 = vadd.f32 0.0, %v2572
        %v2574 = vpop.f32.mrb[0].mxu0
        %2575 = vmatprep.mubr.f32.mxu0 0.0
        %2576 = vmatmul.mubr.f32.gmra.mrb[0].mxu0 %v2400
        %v2577 = vpop.f32.mrb[0].mxu0
        %v2578 = vadd.f32 0.0, %v2577
        %v2579 = vpop.f32.mrb[0].mxu0
        %2580 = vmatprep.mubr.f32.mxu0 0.0
        %2581 = vmatmul.mubr.f32.gmra.mrb[0].mxu0 %v2403
        %v2582 = vpop.f32.mrb[0].mxu0
        %v2583 = vadd.f32 0.0, %v2582
        %v2584 = vpop.f32.mrb[0].mxu0
        %2585 = vmatprep.mubr.f32.mxu0 0.0
        %2586 = vmatmul.mubr.f32.gmra.mrb[0].mxu0 %v2406
        %v2587 = vpop.f32.mrb[0].mxu0
        %v2588 = vadd.f32 0.0, %v2587
        %v2589 = vpop.f32.mrb[0].mxu0
        %2590 = vmatprep.mubr.f32.mxu0 0.0
        %2591 = vmatmul.mubr.f32.gmra.mrb[0].mxu0 %v2409
        %v2592 = vpop.f32.mrb[0].mxu0
        %v2593 = vadd.f32 0.0, %v2592
        %v2594 = vpop.f32.mrb[0].mxu0
        %2595 = vmatprep.mubr.f32.mxu0 0.0
        %2596 = vmatmul.mubr.f32.gmra.mrb[0].mxu0 %v2412
        %v2597 = vpop.f32.mrb[0].mxu0
        %v2598 = vadd.f32 0.0, %v2597
        %v2599 = vpop.f32.mrb[0].mxu0
        %2600 = vmatprep.mubr.f32.mxu0 0.0
        %2601 = vmatmul.mubr.f32.gmra.mrb[0].mxu0 %v2415
        %v2602 = vpop.f32.mrb[0].mxu0
        %v2603 = vadd.f32 0.0, %v2602
        %v2604 = vpop.f32.mrb[0].mxu0
        %2605 = vmatprep.mubr.f32.mxu0 0.0
        %2606 = vmatmul.mubr.f32.gmra.mrb[0].mxu0 %v2418
        %v2607 = vpop.f32.mrb[0].mxu0
        %v2608 = vadd.f32 0.0, %v2607
        %v2609 = vpop.f32.mrb[0].mxu0
        %2610 = vmatprep.mubr.f32.mxu0 0.0
        %2611 = vmatmul.mubr.f32.gmra.mrb[0].mxu0 %v2421
        %v2612 = vpop.f32.mrb[0].mxu0
        %v2613 = vadd.f32 0.0, %v2612
        %v2614 = vpop.f32.mrb[0].mxu0
        %2615 = vmatprep.mubr.f32.mxu0 0.0
        %2616 = vmatmul.mubr.f32.gmra.mrb[0].mxu0 %v2424
        %v2617 = vpop.f32.mrb[0].mxu0
        %v2618 = vadd.f32 0.0, %v2617
        %v2619 = vpop.f32.mrb[0].mxu0
        %2620 = vmatprep.mubr.f32.mxu0 0.0
        %2621 = vmatmul.mubr.f32.gmra.mrb[0].mxu0 %v2427
        %v2622 = vpop.f32.mrb[0].mxu0
        %v2623 = vadd.f32 0.0, %v2622
        %v2624 = vpop.f32.mrb[0].mxu0
        %2625 = vmatprep.mubr.f32.mxu0 0.0
        %2626 = vmatmul.mubr.f32.gmra.mrb[0].mxu0 %v2430
        %v2627 = vpop.f32.mrb[0].mxu0
        %v2628 = vadd.f32 0.0, %v2627
        %v2629 = vpop.f32.mrb[0].mxu0
        %2630 = vmatprep.mubr.f32.mxu0 0.0
        %2631 = vmatmul.mubr.f32.gmra.mrb[0].mxu0 %v2433
        %v2632 = vpop.f32.mrb[0].mxu0
        %v2633 = vadd.f32 0.0, %v2632
        %v2634 = vpop.f32.mrb[0].mxu0
        %2635 = vmatprep.mubr.f32.mxu0 0.0
        %2636 = vmatmul.mubr.f32.gmra.mrb[0].mxu0 %v2436
        %v2637 = vpop.f32.mrb[0].mxu0
        %v2638 = vadd.f32 0.0, %v2637
        %v2639 = vpop.f32.mrb[0].mxu0
        %2640 = vmatprep.mubr.f32.mxu0 0.0
        %2641 = vmatmul.mubr.f32.gmra.mrb[0].mxu0 %v2439
        %v2642 = vpop.f32.mrb[0].mxu0
        %v2643 = vadd.f32 0.0, %v2642
        %v2644 = vpop.f32.mrb[0].mxu0
        %2645 = vmatprep.mubr.f32.mxu0 0.0
        %2646 = vmatmul.mubr.f32.gmra.mrb[0].mxu0 %v2442
        %v2647 = vpop.f32.mrb[0].mxu0
        %v2648 = vadd.f32 0.0, %v2647
        %v2649 = vpop.f32.mrb[0].mxu0
        %2650 = vmatprep.mubr.f32.mxu0 0.0
        %2651 = vmatmul.mubr.f32.gmra.mrb[0].mxu0 %v2445
        %v2652 = vpop.f32.mrb[0].mxu0
        %v2653 = vadd.f32 0.0, %v2652
        %v2654 = vpop.f32.mrb[0].mxu0
        %2655 = vmatprep.mubr.f32.mxu0 0.0
        %2656 = vmatmul.mubr.f32.gmra.mrb[0].mxu0 %v2448
        %v2657 = vpop.f32.mrb[0].mxu0
        %v2658 = vadd.f32 0.0, %v2657
        %v2659 = vpop.f32.mrb[0].mxu0
        %2660 = vmatprep.mubr.f32.mxu0 0.0
        %2661 = vmatmul.mubr.f32.gmra.mrb[0].mxu0 %v2451
        %v2662 = vpop.f32.mrb[0].mxu0
        %v2663 = vadd.f32 0.0, %v2662
        %v2664 = vpop.f32.mrb[0].mxu0
        %2665 = vmatprep.mubr.f32.mxu0 0.0
        %2666 = vmatmul.mubr.f32.gmra.mrb[0].mxu0 %v2454
        %v2667 = vpop.f32.mrb[0].mxu0
        %v2668 = vadd.f32 0.0, %v2667
        %v2669 = vpop.f32.mrb[0].mxu0
        %2670 = vmatprep.mubr.f32.mxu0 0.0
        %2671 = vmatmul.mubr.f32.gmra.mrb[0].mxu0 %v2457
        %v2672 = vpop.f32.mrb[0].mxu0
        %v2673 = vadd.f32 0.0, %v2672
        %v2674 = vpop.f32.mrb[0].mxu0
        %2675 = vmatprep.mubr.f32.mxu0 0.0
        %2676 = vmatmul.mubr.f32.gmra.mrb[0].mxu0 %v2460
        %v2677 = vpop.f32.mrb[0].mxu0
        %v2678 = vadd.f32 0.0, %v2677
        %v2679 = vpop.f32.mrb[0].mxu0
        %2680 = vmatprep.mubr.f32.mxu0 0.0
        %2681 = vmatmul.mubr.f32.gmra.mrb[0].mxu0 %v2463
        %v2682 = vpop.f32.mrb[0].mxu0
        %v2683 = vadd.f32 0.0, %v2682
        %v2684 = vpop.f32.mrb[0].mxu0
        %2685 = vmatprep.mubr.f32.mxu0 0.0
        %2686 = vmatmul.mubr.f32.gmra.mrb[0].mxu0 %v2466
        %v2687 = vpop.f32.mrb[0].mxu0
        %v2688 = vadd.f32 0.0, %v2687
        %v2689 = vpop.f32.mrb[0].mxu0
        %2690 = vmatprep.mubr.f32.mxu0 0.0
        %2691 = vmatmul.mubr.f32.gmra.mrb[0].mxu0 %v2469
        %v2692 = vpop.f32.mrb[0].mxu0
        %v2693 = vadd.f32 0.0, %v2692
        %v2694 = vpop.f32.mrb[0].mxu0
        %2695 = vdwg.mxu0
        %v2696 = vadd.f32 %v2083, %v2538
        %v2697 = vadd.f32 %v2084, %v2543
        %v2698 = vadd.f32 %v2085, %v2548
        %v2699 = vadd.f32 %v2086, %v2553
        %v2700 = vadd.f32 %v2087, %v2558
        %v2701 = vadd.f32 %v2088, %v2563
        %v2702 = vadd.f32 %v2089, %v2568
        %v2703 = vadd.f32 %v2090, %v2573
        %v2704 = vadd.f32 %v2091, %v2578
        %v2705 = vadd.f32 %v2092, %v2583
        %v2706 = vadd.f32 %v2093, %v2588
        %v2707 = vadd.f32 %v2094, %v2593
        %v2708 = vadd.f32 %v2095, %v2598
        %v2709 = vadd.f32 %v2096, %v2603
        %v2710 = vadd.f32 %v2097, %v2608
        %v2711 = vadd.f32 %v2098, %v2613
        %v2712 = vadd.f32 %v2099, %v2618
        %v2713 = vadd.f32 %v2100, %v2623
        %v2714 = vadd.f32 %v2101, %v2628
        %v2715 = vadd.f32 %v2102, %v2633
        %v2716 = vadd.f32 %v2103, %v2638
        %v2717 = vadd.f32 %v2104, %v2643
        %v2718 = vadd.f32 %v2105, %v2648
        %v2719 = vadd.f32 %v2106, %v2653
        %v2720 = vadd.f32 %v2107, %v2658
        %v2721 = vadd.f32 %v2108, %v2663
        %v2722 = vadd.f32 %v2109, %v2668
        %v2723 = vadd.f32 %v2110, %v2673
        %v2724 = vadd.f32 %v2111, %v2678
        %v2725 = vadd.f32 %v2112, %v2683
        %v2726 = vadd.f32 %v2113, %v2688
        %v2727 = vadd.f32 %v2114, %v2693
        %s2728 = scalar_lea.vmem %s240, 48
        %v2729 = vld [vmem:[%s2728] sm:$0xff]
        %v2730 = vld [vmem:[%s2728 + $0x8] sm:$0xff]
        %v2731 = vld [vmem:[%s2728 + $0x18] sm:$0xff]
        %v2732 = vld [vmem:[%s2728 + $0x20] sm:$0xff]
        %v2733 = vld [vmem:[%s2728 + $0x30] sm:$0xff]
        %v2734 = vld [vmem:[%s2728 + $0x38] sm:$0xff]
        %v2735 = vld [vmem:[%s2728 + $0x48] sm:$0xff]
        %v2736 = vld [vmem:[%s2728 + $0x50] sm:$0xff]
        %v2737 = vld [vmem:[%s2728 + $0x60] sm:$0xff]
        %v2738 = vld [vmem:[%s2728 + $0x68] sm:$0xff]
        %v2739 = vld [vmem:[%s2728 + $0x78] sm:$0xff]
        %v2740 = vld [vmem:[%s2728 + $0x80] sm:$0xff]
        %v2741 = vld [vmem:[%s2728 + $0x90] sm:$0xff]
        %v2742 = vld [vmem:[%s2728 + $0x98] sm:$0xff]
        %v2743 = vld [vmem:[%s2728 + $0xa8] sm:$0xff]
        %v2744 = vld [vmem:[%s2728 + $0xb0] sm:$0xff]
        %v2745 = vld [vmem:[%s2728 + $0xc0] sm:$0xff]
        %v2746 = vld [vmem:[%s2728 + $0xc8] sm:$0xff]
        %v2747 = vld [vmem:[%s2728 + $0xd8] sm:$0xff]
        %v2748 = vld [vmem:[%s2728 + $0xe0] sm:$0xff]
        %v2749 = vld [vmem:[%s2728 + $0xf0] sm:$0xff]
        %v2750 = vld [vmem:[%s2728 + $0xf8] sm:$0xff]
        %v2751 = vld [vmem:[%s2728 + $0x108] sm:$0xff]
        %v2752 = vld [vmem:[%s2728 + $0x110] sm:$0xff]
        %v2753 = vld [vmem:[%s2728 + $0x120] sm:$0xff]
        %v2754 = vld [vmem:[%s2728 + $0x128] sm:$0xff]
        %v2755 = vld [vmem:[%s2728 + $0x138] sm:$0xff]
        %v2756 = vld [vmem:[%s2728 + $0x140] sm:$0xff]
        %v2757 = vld [vmem:[%s2728 + $0x150] sm:$0xff]
        %v2758 = vld [vmem:[%s2728 + $0x158] sm:$0xff]
        %v2759 = vld [vmem:[%s2728 + $0x168] sm:$0xff]
        %v2760 = vld [vmem:[%s2728 + $0x170] sm:$0xff]
        %s2761 = scalar_lea.vmem %s1, 48
        %v2762 = vld [vmem:[%s2761] sm:$0xff]
        %v2764 = vsel %vm310, %v2729, 0
        %v2767 = vsel %vm310, %v2730, 0
        %v2770 = vsel %vm310, %v2731, 0
        %v2773 = vsel %vm310, %v2732, 0
        %v2776 = vsel %vm310, %v2733, 0
        %v2779 = vsel %vm310, %v2734, 0
        %v2782 = vsel %vm310, %v2735, 0
        %v2785 = vsel %vm310, %v2736, 0
        %v2788 = vsel %vm310, %v2737, 0
        %v2791 = vsel %vm310, %v2738, 0
        %v2794 = vsel %vm310, %v2739, 0
        %v2797 = vsel %vm310, %v2740, 0
        %v2800 = vsel %vm310, %v2741, 0
        %v2803 = vsel %vm310, %v2742, 0
        %v2806 = vsel %vm310, %v2743, 0
        %v2809 = vsel %vm310, %v2744, 0
        %v2812 = vsel %vm310, %v2745, 0
        %v2815 = vsel %vm310, %v2746, 0
        %v2818 = vsel %vm310, %v2747, 0
        %v2821 = vsel %vm310, %v2748, 0
        %v2824 = vsel %vm310, %v2749, 0
        %v2827 = vsel %vm310, %v2750, 0
        %v2830 = vsel %vm310, %v2751, 0
        %v2833 = vsel %vm310, %v2752, 0
        %v2836 = vsel %vm310, %v2753, 0
        %v2839 = vsel %vm310, %v2754, 0
        %v2842 = vsel %vm310, %v2755, 0
        %v2845 = vsel %vm310, %v2756, 0
        %v2848 = vsel %vm310, %v2757, 0
        %v2851 = vsel %vm310, %v2758, 0
        %v2854 = vsel %vm310, %v2759, 0
        %v2857 = vsel %vm310, %v2760, 0
        %2859 = vmatprep.subr.mxu0 0.0
        %2860 = vmatpush1.msra.mxu0 %v2762
        %2861 = vmatprep.subr.mxu0 0.0
        %2862 = vmatpush1.msra.mxu0 0.0
        %2863 = vmatprep.subr.mxu0 0.0
        %2864 = vmatpush1.msra.mxu0 0.0
        %2865 = vmatprep.subr.mxu0 0.0
        %2866 = vmatpush1.msra.mxu0 0.0
        %2867 = vmatprep.subr.mxu0 0.0
        %2868 = vmatpush1.msra.mxu0 0.0
        %2869 = vmatprep.subr.mxu0 0.0
        %2870 = vmatpush1.msra.mxu0 0.0
        %2871 = vmatprep.subr.mxu0 0.0
        %2872 = vmatpush1.msra.mxu0 0.0
        %2873 = vmatprep.subr.mxu0 0.0
        %2874 = vmatpush1.msra.mxu0 0.0
        %2875 = vmatprep.subr.mxu0 0.0
        %2876 = vmatpush1.msra.mxu0 0.0
        %2877 = vmatprep.subr.mxu0 0.0
        %2878 = vmatpush1.msra.mxu0 0.0
        %2879 = vmatprep.subr.mxu0 0.0
        %2880 = vmatpush1.msra.mxu0 0.0
        %2881 = vmatprep.subr.mxu0 0.0
        %2882 = vmatpush1.msra.mxu0 0.0
        %2883 = vmatprep.subr.mxu0 0.0
        %2884 = vmatpush1.msra.mxu0 0.0
        %2885 = vmatprep.subr.mxu0 0.0
        %2886 = vmatpush1.msra.mxu0 0.0
        %2887 = vmatprep.subr.mxu0 0.0
        %2888 = vmatpush1.msra.mxu0 0.0
        %2889 = vmatprep.subr.mxu0 0.0
        %2890 = vmatpush1.msra.mxu0 0.0
        %2891 = vmatprep.subr.mxu0 0.0
        %2892 = vmatpush1.msra.mxu0 0.0
        %2893 = vmatprep.subr.mxu0 0.0
        %2894 = vmatpush1.msra.mxu0 0.0
        %2895 = vmatprep.subr.mxu0 0.0
        %2896 = vmatpush1.msra.mxu0 0.0
        %2897 = vmatprep.subr.mxu0 0.0
        %2898 = vmatpush1.msra.mxu0 0.0
        %2899 = vmatprep.subr.mxu0 0.0
        %2900 = vmatpush1.msra.mxu0 0.0
        %2901 = vmatprep.subr.mxu0 0.0
        %2902 = vmatpush1.msra.mxu0 0.0
        %2903 = vmatprep.subr.mxu0 0.0
        %2904 = vmatpush1.msra.mxu0 0.0
        %2905 = vmatprep.subr.mxu0 0.0
        %2906 = vmatpush1.msra.mxu0 0.0
        %2907 = vmatprep.subr.mxu0 0.0
        %2908 = vmatpush1.msra.mxu0 0.0
        %2909 = vmatprep.subr.mxu0 0.0
        %2910 = vmatpush1.msra.mxu0 0.0
        %2911 = vmatprep.subr.mxu0 0.0
        %2912 = vmatpush1.msra.mxu0 0.0
        %2913 = vmatprep.subr.mxu0 0.0
        %2914 = vmatpush1.msra.mxu0 0.0
        %2915 = vmatprep.subr.mxu0 0.0
        %2916 = vmatpush1.msra.mxu0 0.0
        %2917 = vmatprep.subr.mxu0 0.0
        %2918 = vmatpush1.msra.mxu0 0.0
        %2919 = vmatprep.subr.mxu0 0.0
        %2920 = vmatpush1.msra.mxu0 0.0
        %2921 = vmatprep.subr.mxu0 0.0
        %2922 = vmatpush1.msra.mxu0 0.0
        %2923 = vmatprep.mubr.f32.mxu0 0.0
        %2924 = vmatmul.mubr.f32.gmra.mrb[0].mxu0 %v2764
        %v2925 = vpop.f32.mrb[0].mxu0
        %v2926 = vadd.f32 0.0, %v2925
        %v2927 = vpop.f32.mrb[0].mxu0
        %2928 = vmatprep.mubr.f32.mxu0 0.0
        %2929 = vmatmul.mubr.f32.gmra.mrb[0].mxu0 %v2767
        %v2930 = vpop.f32.mrb[0].mxu0
        %v2931 = vadd.f32 0.0, %v2930
        %v2932 = vpop.f32.mrb[0].mxu0
        %2933 = vmatprep.mubr.f32.mxu0 0.0
        %2934 = vmatmul.mubr.f32.gmra.mrb[0].mxu0 %v2770
        %v2935 = vpop.f32.mrb[0].mxu0
        %v2936 = vadd.f32 0.0, %v2935
        %v2937 = vpop.f32.mrb[0].mxu0
        %2938 = vmatprep.mubr.f32.mxu0 0.0
        %2939 = vmatmul.mubr.f32.gmra.mrb[0].mxu0 %v2773
        %v2940 = vpop.f32.mrb[0].mxu0
        %v2941 = vadd.f32 0.0, %v2940
        %v2942 = vpop.f32.mrb[0].mxu0
        %2943 = vmatprep.mubr.f32.mxu0 0.0
        %2944 = vmatmul.mubr.f32.gmra.mrb[0].mxu0 %v2776
        %v2945 = vpop.f32.mrb[0].mxu0
        %v2946 = vadd.f32 0.0, %v2945
        %v2947 = vpop.f32.mrb[0].mxu0
        %2948 = vmatprep.mubr.f32.mxu0 0.0
        %2949 = vmatmul.mubr.f32.gmra.mrb[0].mxu0 %v2779
        %v2950 = vpop.f32.mrb[0].mxu0
        %v2951 = vadd.f32 0.0, %v2950
        %v2952 = vpop.f32.mrb[0].mxu0
        %2953 = vmatprep.mubr.f32.mxu0 0.0
        %2954 = vmatmul.mubr.f32.gmra.mrb[0].mxu0 %v2782
        %v2955 = vpop.f32.mrb[0].mxu0
        %v2956 = vadd.f32 0.0, %v2955
        %v2957 = vpop.f32.mrb[0].mxu0
        %2958 = vmatprep.mubr.f32.mxu0 0.0
        %2959 = vmatmul.mubr.f32.gmra.mrb[0].mxu0 %v2785
        %v2960 = vpop.f32.mrb[0].mxu0
        %v2961 = vadd.f32 0.0, %v2960
        %v2962 = vpop.f32.mrb[0].mxu0
        %2963 = vmatprep.mubr.f32.mxu0 0.0
        %2964 = vmatmul.mubr.f32.gmra.mrb[0].mxu0 %v2788
        %v2965 = vpop.f32.mrb[0].mxu0
        %v2966 = vadd.f32 0.0, %v2965
        %v2967 = vpop.f32.mrb[0].mxu0
        %2968 = vmatprep.mubr.f32.mxu0 0.0
        %2969 = vmatmul.mubr.f32.gmra.mrb[0].mxu0 %v2791
        %v2970 = vpop.f32.mrb[0].mxu0
        %v2971 = vadd.f32 0.0, %v2970
        %v2972 = vpop.f32.mrb[0].mxu0
        %2973 = vmatprep.mubr.f32.mxu0 0.0
        %2974 = vmatmul.mubr.f32.gmra.mrb[0].mxu0 %v2794
        %v2975 = vpop.f32.mrb[0].mxu0
        %v2976 = vadd.f32 0.0, %v2975
        %v2977 = vpop.f32.mrb[0].mxu0
        %2978 = vmatprep.mubr.f32.mxu0 0.0
        %2979 = vmatmul.mubr.f32.gmra.mrb[0].mxu0 %v2797
        %v2980 = vpop.f32.mrb[0].mxu0
        %v2981 = vadd.f32 0.0, %v2980
        %v2982 = vpop.f32.mrb[0].mxu0
        %2983 = vmatprep.mubr.f32.mxu0 0.0
        %2984 = vmatmul.mubr.f32.gmra.mrb[0].mxu0 %v2800
        %v2985 = vpop.f32.mrb[0].mxu0
        %v2986 = vadd.f32 0.0, %v2985
        %v2987 = vpop.f32.mrb[0].mxu0
        %2988 = vmatprep.mubr.f32.mxu0 0.0
        %2989 = vmatmul.mubr.f32.gmra.mrb[0].mxu0 %v2803
        %v2990 = vpop.f32.mrb[0].mxu0
        %v2991 = vadd.f32 0.0, %v2990
        %v2992 = vpop.f32.mrb[0].mxu0
        %2993 = vmatprep.mubr.f32.mxu0 0.0
        %2994 = vmatmul.mubr.f32.gmra.mrb[0].mxu0 %v2806
        %v2995 = vpop.f32.mrb[0].mxu0
        %v2996 = vadd.f32 0.0, %v2995
        %v2997 = vpop.f32.mrb[0].mxu0
        %2998 = vmatprep.mubr.f32.mxu0 0.0
        %2999 = vmatmul.mubr.f32.gmra.mrb[0].mxu0 %v2809
        %v3000 = vpop.f32.mrb[0].mxu0
        %v3001 = vadd.f32 0.0, %v3000
        %v3002 = vpop.f32.mrb[0].mxu0
        %3003 = vmatprep.mubr.f32.mxu0 0.0
        %3004 = vmatmul.mubr.f32.gmra.mrb[0].mxu0 %v2812
        %v3005 = vpop.f32.mrb[0].mxu0
        %v3006 = vadd.f32 0.0, %v3005
        %v3007 = vpop.f32.mrb[0].mxu0
        %3008 = vmatprep.mubr.f32.mxu0 0.0
        %3009 = vmatmul.mubr.f32.gmra.mrb[0].mxu0 %v2815
        %v3010 = vpop.f32.mrb[0].mxu0
        %v3011 = vadd.f32 0.0, %v3010
        %v3012 = vpop.f32.mrb[0].mxu0
        %3013 = vmatprep.mubr.f32.mxu0 0.0
        %3014 = vmatmul.mubr.f32.gmra.mrb[0].mxu0 %v2818
        %v3015 = vpop.f32.mrb[0].mxu0
        %v3016 = vadd.f32 0.0, %v3015
        %v3017 = vpop.f32.mrb[0].mxu0
        %3018 = vmatprep.mubr.f32.mxu0 0.0
        %3019 = vmatmul.mubr.f32.gmra.mrb[0].mxu0 %v2821
        %v3020 = vpop.f32.mrb[0].mxu0
        %v3021 = vadd.f32 0.0, %v3020
        %v3022 = vpop.f32.mrb[0].mxu0
        %3023 = vmatprep.mubr.f32.mxu0 0.0
        %3024 = vmatmul.mubr.f32.gmra.mrb[0].mxu0 %v2824
        %v3025 = vpop.f32.mrb[0].mxu0
        %v3026 = vadd.f32 0.0, %v3025
        %v3027 = vpop.f32.mrb[0].mxu0
        %3028 = vmatprep.mubr.f32.mxu0 0.0
        %3029 = vmatmul.mubr.f32.gmra.mrb[0].mxu0 %v2827
        %v3030 = vpop.f32.mrb[0].mxu0
        %v3031 = vadd.f32 0.0, %v3030
        %v3032 = vpop.f32.mrb[0].mxu0
        %3033 = vmatprep.mubr.f32.mxu0 0.0
        %3034 = vmatmul.mubr.f32.gmra.mrb[0].mxu0 %v2830
        %v3035 = vpop.f32.mrb[0].mxu0
        %v3036 = vadd.f32 0.0, %v3035
        %v3037 = vpop.f32.mrb[0].mxu0
        %3038 = vmatprep.mubr.f32.mxu0 0.0
        %3039 = vmatmul.mubr.f32.gmra.mrb[0].mxu0 %v2833
        %v3040 = vpop.f32.mrb[0].mxu0
        %v3041 = vadd.f32 0.0, %v3040
        %v3042 = vpop.f32.mrb[0].mxu0
        %3043 = vmatprep.mubr.f32.mxu0 0.0
        %3044 = vmatmul.mubr.f32.gmra.mrb[0].mxu0 %v2836
        %v3045 = vpop.f32.mrb[0].mxu0
        %v3046 = vadd.f32 0.0, %v3045
        %v3047 = vpop.f32.mrb[0].mxu0
        %3048 = vmatprep.mubr.f32.mxu0 0.0
        %3049 = vmatmul.mubr.f32.gmra.mrb[0].mxu0 %v2839
        %v3050 = vpop.f32.mrb[0].mxu0
        %v3051 = vadd.f32 0.0, %v3050
        %v3052 = vpop.f32.mrb[0].mxu0
        %3053 = vmatprep.mubr.f32.mxu0 0.0
        %3054 = vmatmul.mubr.f32.gmra.mrb[0].mxu0 %v2842
        %v3055 = vpop.f32.mrb[0].mxu0
        %v3056 = vadd.f32 0.0, %v3055
        %v3057 = vpop.f32.mrb[0].mxu0
        %3058 = vmatprep.mubr.f32.mxu0 0.0
        %3059 = vmatmul.mubr.f32.gmra.mrb[0].mxu0 %v2845
        %v3060 = vpop.f32.mrb[0].mxu0
        %v3061 = vadd.f32 0.0, %v3060
        %v3062 = vpop.f32.mrb[0].mxu0
        %3063 = vmatprep.mubr.f32.mxu0 0.0
        %3064 = vmatmul.mubr.f32.gmra.mrb[0].mxu0 %v2848
        %v3065 = vpop.f32.mrb[0].mxu0
        %v3066 = vadd.f32 0.0, %v3065
        %v3067 = vpop.f32.mrb[0].mxu0
        %3068 = vmatprep.mubr.f32.mxu0 0.0
        %3069 = vmatmul.mubr.f32.gmra.mrb[0].mxu0 %v2851
        %v3070 = vpop.f32.mrb[0].mxu0
        %v3071 = vadd.f32 0.0, %v3070
        %v3072 = vpop.f32.mrb[0].mxu0
        %3073 = vmatprep.mubr.f32.mxu0 0.0
        %3074 = vmatmul.mubr.f32.gmra.mrb[0].mxu0 %v2854
        %v3075 = vpop.f32.mrb[0].mxu0
        %v3076 = vadd.f32 0.0, %v3075
        %v3077 = vpop.f32.mrb[0].mxu0
        %3078 = vmatprep.mubr.f32.mxu0 0.0
        %3079 = vmatmul.mubr.f32.gmra.mrb[0].mxu0 %v2857
        %v3080 = vpop.f32.mrb[0].mxu0
        %v3081 = vadd.f32 0.0, %v3080
        %v3082 = vpop.f32.mrb[0].mxu0
        %3083 = vdwg.mxu0
        %v3084 = vadd.f32 %v2696, %v2926
        %v3085 = vadd.f32 %v2697, %v2931
        %v3086 = vadd.f32 %v2698, %v2936
        %v3087 = vadd.f32 %v2699, %v2941
        %v3088 = vadd.f32 %v2700, %v2946
        %v3089 = vadd.f32 %v2701, %v2951
        %v3090 = vadd.f32 %v2702, %v2956
        %v3091 = vadd.f32 %v2703, %v2961
        %v3092 = vadd.f32 %v2704, %v2966
        %v3093 = vadd.f32 %v2705, %v2971
        %v3094 = vadd.f32 %v2706, %v2976
        %v3095 = vadd.f32 %v2707, %v2981
        %v3096 = vadd.f32 %v2708, %v2986
        %v3097 = vadd.f32 %v2709, %v2991
        %v3098 = vadd.f32 %v2710, %v2996
        %v3099 = vadd.f32 %v2711, %v3001
        %v3100 = vadd.f32 %v2712, %v3006
        %v3101 = vadd.f32 %v2713, %v3011
        %v3102 = vadd.f32 %v2714, %v3016
        %v3103 = vadd.f32 %v2715, %v3021
        %v3104 = vadd.f32 %v2716, %v3026
        %v3105 = vadd.f32 %v2717, %v3031
        %v3106 = vadd.f32 %v2718, %v3036
        %v3107 = vadd.f32 %v2719, %v3041
        %v3108 = vadd.f32 %v2720, %v3046
        %v3109 = vadd.f32 %v2721, %v3051
        %v3110 = vadd.f32 %v2722, %v3056
        %v3111 = vadd.f32 %v2723, %v3061
        %v3112 = vadd.f32 %v2724, %v3066
        %v3113 = vadd.f32 %v2725, %v3071
        %v3114 = vadd.f32 %v2726, %v3076
        %v3115 = vadd.f32 %v2727, %v3081
        %v3116 = vld [vmem:[%s2728 + $0x1] sm:$0xff]
        %v3117 = vld [vmem:[%s2728 + $0x9] sm:$0xff]
        %v3118 = vld [vmem:[%s2728 + $0x19] sm:$0xff]
        %v3119 = vld [vmem:[%s2728 + $0x21] sm:$0xff]
        %v3120 = vld [vmem:[%s2728 + $0x31] sm:$0xff]
        %v3121 = vld [vmem:[%s2728 + $0x39] sm:$0xff]
        %v3122 = vld [vmem:[%s2728 + $0x49] sm:$0xff]
        %v3123 = vld [vmem:[%s2728 + $0x51] sm:$0xff]
        %v3124 = vld [vmem:[%s2728 + $0x61] sm:$0xff]
        %v3125 = vld [vmem:[%s2728 + $0x69] sm:$0xff]
        %v3126 = vld [vmem:[%s2728 + $0x79] sm:$0xff]
        %v3127 = vld [vmem:[%s2728 + $0x81] sm:$0xff]
        %v3128 = vld [vmem:[%s2728 + $0x91] sm:$0xff]
        %v3129 = vld [vmem:[%s2728 + $0x99] sm:$0xff]
        %v3130 = vld [vmem:[%s2728 + $0xa9] sm:$0xff]
        %v3131 = vld [vmem:[%s2728 + $0xb1] sm:$0xff]
        %v3132 = vld [vmem:[%s2728 + $0xc1] sm:$0xff]
        %v3133 = vld [vmem:[%s2728 + $0xc9] sm:$0xff]
        %v3134 = vld [vmem:[%s2728 + $0xd9] sm:$0xff]
        %v3135 = vld [vmem:[%s2728 + $0xe1] sm:$0xff]
        %v3136 = vld [vmem:[%s2728 + $0xf1] sm:$0xff]
        %v3137 = vld [vmem:[%s2728 + $0xf9] sm:$0xff]
        %v3138 = vld [vmem:[%s2728 + $0x109] sm:$0xff]
        %v3139 = vld [vmem:[%s2728 + $0x111] sm:$0xff]
        %v3140 = vld [vmem:[%s2728 + $0x121] sm:$0xff]
        %v3141 = vld [vmem:[%s2728 + $0x129] sm:$0xff]
        %v3142 = vld [vmem:[%s2728 + $0x139] sm:$0xff]
        %v3143 = vld [vmem:[%s2728 + $0x141] sm:$0xff]
        %v3144 = vld [vmem:[%s2728 + $0x151] sm:$0xff]
        %v3145 = vld [vmem:[%s2728 + $0x159] sm:$0xff]
        %v3146 = vld [vmem:[%s2728 + $0x169] sm:$0xff]
        %v3147 = vld [vmem:[%s2728 + $0x171] sm:$0xff]
        %s3148 = scalar_lea.vmem %s1, 56
        %v3149 = vld [vmem:[%s3148] sm:$0xff]
        %v3151 = vsel %vm310, %v3116, 0
        %v3154 = vsel %vm310, %v3117, 0
        %v3157 = vsel %vm310, %v3118, 0
        %v3160 = vsel %vm310, %v3119, 0
        %v3163 = vsel %vm310, %v3120, 0
        %v3166 = vsel %vm310, %v3121, 0
        %v3169 = vsel %vm310, %v3122, 0
        %v3172 = vsel %vm310, %v3123, 0
        %v3175 = vsel %vm310, %v3124, 0
        %v3178 = vsel %vm310, %v3125, 0
        %v3181 = vsel %vm310, %v3126, 0
        %v3184 = vsel %vm310, %v3127, 0
        %v3187 = vsel %vm310, %v3128, 0
        %v3190 = vsel %vm310, %v3129, 0
        %v3193 = vsel %vm310, %v3130, 0
        %v3196 = vsel %vm310, %v3131, 0
        %v3199 = vsel %vm310, %v3132, 0
        %v3202 = vsel %vm310, %v3133, 0
        %v3205 = vsel %vm310, %v3134, 0
        %v3208 = vsel %vm310, %v3135, 0
        %v3211 = vsel %vm310, %v3136, 0
        %v3214 = vsel %vm310, %v3137, 0
        %v3217 = vsel %vm310, %v3138, 0
        %v3220 = vsel %vm310, %v3139, 0
        %v3223 = vsel %vm310, %v3140, 0
        %v3226 = vsel %vm310, %v3141, 0
        %v3229 = vsel %vm310, %v3142, 0
        %v3232 = vsel %vm310, %v3143, 0
        %v3235 = vsel %vm310, %v3144, 0
        %v3238 = vsel %vm310, %v3145, 0
        %v3241 = vsel %vm310, %v3146, 0
        %v3244 = vsel %vm310, %v3147, 0
        %3246 = vmatprep.subr.mxu0 0.0
        %3247 = vmatpush1.msra.mxu0 %v3149
        %3248 = vmatprep.subr.mxu0 0.0
        %3249 = vmatpush1.msra.mxu0 0.0
        %3250 = vmatprep.subr.mxu0 0.0
        %3251 = vmatpush1.msra.mxu0 0.0
        %3252 = vmatprep.subr.mxu0 0.0
        %3253 = vmatpush1.msra.mxu0 0.0
        %3254 = vmatprep.subr.mxu0 0.0
        %3255 = vmatpush1.msra.mxu0 0.0
        %3256 = vmatprep.subr.mxu0 0.0
        %3257 = vmatpush1.msra.mxu0 0.0
        %3258 = vmatprep.subr.mxu0 0.0
        %3259 = vmatpush1.msra.mxu0 0.0
        %3260 = vmatprep.subr.mxu0 0.0
        %3261 = vmatpush1.msra.mxu0 0.0
        %3262 = vmatprep.subr.mxu0 0.0
        %3263 = vmatpush1.msra.mxu0 0.0
        %3264 = vmatprep.subr.mxu0 0.0
        %3265 = vmatpush1.msra.mxu0 0.0
        %3266 = vmatprep.subr.mxu0 0.0
        %3267 = vmatpush1.msra.mxu0 0.0
        %3268 = vmatprep.subr.mxu0 0.0
        %3269 = vmatpush1.msra.mxu0 0.0
        %3270 = vmatprep.subr.mxu0 0.0
        %3271 = vmatpush1.msra.mxu0 0.0
        %3272 = vmatprep.subr.mxu0 0.0
        %3273 = vmatpush1.msra.mxu0 0.0
        %3274 = vmatprep.subr.mxu0 0.0
        %3275 = vmatpush1.msra.mxu0 0.0
        %3276 = vmatprep.subr.mxu0 0.0
        %3277 = vmatpush1.msra.mxu0 0.0
        %3278 = vmatprep.subr.mxu0 0.0
        %3279 = vmatpush1.msra.mxu0 0.0
        %3280 = vmatprep.subr.mxu0 0.0
        %3281 = vmatpush1.msra.mxu0 0.0
        %3282 = vmatprep.subr.mxu0 0.0
        %3283 = vmatpush1.msra.mxu0 0.0
        %3284 = vmatprep.subr.mxu0 0.0
        %3285 = vmatpush1.msra.mxu0 0.0
        %3286 = vmatprep.subr.mxu0 0.0
        %3287 = vmatpush1.msra.mxu0 0.0
        %3288 = vmatprep.subr.mxu0 0.0
        %3289 = vmatpush1.msra.mxu0 0.0
        %3290 = vmatprep.subr.mxu0 0.0
        %3291 = vmatpush1.msra.mxu0 0.0
        %3292 = vmatprep.subr.mxu0 0.0
        %3293 = vmatpush1.msra.mxu0 0.0
        %3294 = vmatprep.subr.mxu0 0.0
        %3295 = vmatpush1.msra.mxu0 0.0
        %3296 = vmatprep.subr.mxu0 0.0
        %3297 = vmatpush1.msra.mxu0 0.0
        %3298 = vmatprep.subr.mxu0 0.0
        %3299 = vmatpush1.msra.mxu0 0.0
        %3300 = vmatprep.subr.mxu0 0.0
        %3301 = vmatpush1.msra.mxu0 0.0
        %3302 = vmatprep.subr.mxu0 0.0
        %3303 = vmatpush1.msra.mxu0 0.0
        %3304 = vmatprep.subr.mxu0 0.0
        %3305 = vmatpush1.msra.mxu0 0.0
        %3306 = vmatprep.subr.mxu0 0.0
        %3307 = vmatpush1.msra.mxu0 0.0
        %3308 = vmatprep.subr.mxu0 0.0
        %3309 = vmatpush1.msra.mxu0 0.0
        %3310 = vmatprep.mubr.f32.mxu0 0.0
        %3311 = vmatmul.mubr.f32.gmra.mrb[0].mxu0 %v3151
        %v3312 = vpop.f32.mrb[0].mxu0
        %v3313 = vadd.f32 0.0, %v3312
        %v3314 = vpop.f32.mrb[0].mxu0
        %3315 = vmatprep.mubr.f32.mxu0 0.0
        %3316 = vmatmul.mubr.f32.gmra.mrb[0].mxu0 %v3154
        %v3317 = vpop.f32.mrb[0].mxu0
        %v3318 = vadd.f32 0.0, %v3317
        %v3319 = vpop.f32.mrb[0].mxu0
        %3320 = vmatprep.mubr.f32.mxu0 0.0
        %3321 = vmatmul.mubr.f32.gmra.mrb[0].mxu0 %v3157
        %v3322 = vpop.f32.mrb[0].mxu0
        %v3323 = vadd.f32 0.0, %v3322
        %v3324 = vpop.f32.mrb[0].mxu0
        %3325 = vmatprep.mubr.f32.mxu0 0.0
        %3326 = vmatmul.mubr.f32.gmra.mrb[0].mxu0 %v3160
        %v3327 = vpop.f32.mrb[0].mxu0
        %v3328 = vadd.f32 0.0, %v3327
        %v3329 = vpop.f32.mrb[0].mxu0
        %3330 = vmatprep.mubr.f32.mxu0 0.0
        %3331 = vmatmul.mubr.f32.gmra.mrb[0].mxu0 %v3163
        %v3332 = vpop.f32.mrb[0].mxu0
        %v3333 = vadd.f32 0.0, %v3332
        %v3334 = vpop.f32.mrb[0].mxu0
        %3335 = vmatprep.mubr.f32.mxu0 0.0
        %3336 = vmatmul.mubr.f32.gmra.mrb[0].mxu0 %v3166
        %v3337 = vpop.f32.mrb[0].mxu0
        %v3338 = vadd.f32 0.0, %v3337
        %v3339 = vpop.f32.mrb[0].mxu0
        %3340 = vmatprep.mubr.f32.mxu0 0.0
        %3341 = vmatmul.mubr.f32.gmra.mrb[0].mxu0 %v3169
        %v3342 = vpop.f32.mrb[0].mxu0
        %v3343 = vadd.f32 0.0, %v3342
        %v3344 = vpop.f32.mrb[0].mxu0
        %3345 = vmatprep.mubr.f32.mxu0 0.0
        %3346 = vmatmul.mubr.f32.gmra.mrb[0].mxu0 %v3172
        %v3347 = vpop.f32.mrb[0].mxu0
        %v3348 = vadd.f32 0.0, %v3347
        %v3349 = vpop.f32.mrb[0].mxu0
        %3350 = vmatprep.mubr.f32.mxu0 0.0
        %3351 = vmatmul.mubr.f32.gmra.mrb[0].mxu0 %v3175
        %v3352 = vpop.f32.mrb[0].mxu0
        %v3353 = vadd.f32 0.0, %v3352
        %v3354 = vpop.f32.mrb[0].mxu0
        %3355 = vmatprep.mubr.f32.mxu0 0.0
        %3356 = vmatmul.mubr.f32.gmra.mrb[0].mxu0 %v3178
        %v3357 = vpop.f32.mrb[0].mxu0
        %v3358 = vadd.f32 0.0, %v3357
        %v3359 = vpop.f32.mrb[0].mxu0
        %3360 = vmatprep.mubr.f32.mxu0 0.0
        %3361 = vmatmul.mubr.f32.gmra.mrb[0].mxu0 %v3181
        %v3362 = vpop.f32.mrb[0].mxu0
        %v3363 = vadd.f32 0.0, %v3362
        %v3364 = vpop.f32.mrb[0].mxu0
        %3365 = vmatprep.mubr.f32.mxu0 0.0
        %3366 = vmatmul.mubr.f32.gmra.mrb[0].mxu0 %v3184
        %v3367 = vpop.f32.mrb[0].mxu0
        %v3368 = vadd.f32 0.0, %v3367
        %v3369 = vpop.f32.mrb[0].mxu0
        %3370 = vmatprep.mubr.f32.mxu0 0.0
        %3371 = vmatmul.mubr.f32.gmra.mrb[0].mxu0 %v3187
        %v3372 = vpop.f32.mrb[0].mxu0
        %v3373 = vadd.f32 0.0, %v3372
        %v3374 = vpop.f32.mrb[0].mxu0
        %3375 = vmatprep.mubr.f32.mxu0 0.0
        %3376 = vmatmul.mubr.f32.gmra.mrb[0].mxu0 %v3190
        %v3377 = vpop.f32.mrb[0].mxu0
        %v3378 = vadd.f32 0.0, %v3377
        %v3379 = vpop.f32.mrb[0].mxu0
        %3380 = vmatprep.mubr.f32.mxu0 0.0
        %3381 = vmatmul.mubr.f32.gmra.mrb[0].mxu0 %v3193
        %v3382 = vpop.f32.mrb[0].mxu0
        %v3383 = vadd.f32 0.0, %v3382
        %v3384 = vpop.f32.mrb[0].mxu0
        %3385 = vmatprep.mubr.f32.mxu0 0.0
        %3386 = vmatmul.mubr.f32.gmra.mrb[0].mxu0 %v3196
        %v3387 = vpop.f32.mrb[0].mxu0
        %v3388 = vadd.f32 0.0, %v3387
        %v3389 = vpop.f32.mrb[0].mxu0
        %3390 = vmatprep.mubr.f32.mxu0 0.0
        %3391 = vmatmul.mubr.f32.gmra.mrb[0].mxu0 %v3199
        %v3392 = vpop.f32.mrb[0].mxu0
        %v3393 = vadd.f32 0.0, %v3392
        %v3394 = vpop.f32.mrb[0].mxu0
        %3395 = vmatprep.mubr.f32.mxu0 0.0
        %3396 = vmatmul.mubr.f32.gmra.mrb[0].mxu0 %v3202
        %v3397 = vpop.f32.mrb[0].mxu0
        %v3398 = vadd.f32 0.0, %v3397
        %v3399 = vpop.f32.mrb[0].mxu0
        %3400 = vmatprep.mubr.f32.mxu0 0.0
        %3401 = vmatmul.mubr.f32.gmra.mrb[0].mxu0 %v3205
        %v3402 = vpop.f32.mrb[0].mxu0
        %v3403 = vadd.f32 0.0, %v3402
        %v3404 = vpop.f32.mrb[0].mxu0
        %3405 = vmatprep.mubr.f32.mxu0 0.0
        %3406 = vmatmul.mubr.f32.gmra.mrb[0].mxu0 %v3208
        %v3407 = vpop.f32.mrb[0].mxu0
        %v3408 = vadd.f32 0.0, %v3407
        %v3409 = vpop.f32.mrb[0].mxu0
        %3410 = vmatprep.mubr.f32.mxu0 0.0
        %3411 = vmatmul.mubr.f32.gmra.mrb[0].mxu0 %v3211
        %v3412 = vpop.f32.mrb[0].mxu0
        %v3413 = vadd.f32 0.0, %v3412
        %v3414 = vpop.f32.mrb[0].mxu0
        %3415 = vmatprep.mubr.f32.mxu0 0.0
        %3416 = vmatmul.mubr.f32.gmra.mrb[0].mxu0 %v3214
        %v3417 = vpop.f32.mrb[0].mxu0
        %v3418 = vadd.f32 0.0, %v3417
        %v3419 = vpop.f32.mrb[0].mxu0
        %3420 = vmatprep.mubr.f32.mxu0 0.0
        %3421 = vmatmul.mubr.f32.gmra.mrb[0].mxu0 %v3217
        %v3422 = vpop.f32.mrb[0].mxu0
        %v3423 = vadd.f32 0.0, %v3422
        %v3424 = vpop.f32.mrb[0].mxu0
        %3425 = vmatprep.mubr.f32.mxu0 0.0
        %3426 = vmatmul.mubr.f32.gmra.mrb[0].mxu0 %v3220
        %v3427 = vpop.f32.mrb[0].mxu0
        %v3428 = vadd.f32 0.0, %v3427
        %v3429 = vpop.f32.mrb[0].mxu0
        %3430 = vmatprep.mubr.f32.mxu0 0.0
        %3431 = vmatmul.mubr.f32.gmra.mrb[0].mxu0 %v3223
        %v3432 = vpop.f32.mrb[0].mxu0
        %v3433 = vadd.f32 0.0, %v3432
        %v3434 = vpop.f32.mrb[0].mxu0
        %3435 = vmatprep.mubr.f32.mxu0 0.0
        %3436 = vmatmul.mubr.f32.gmra.mrb[0].mxu0 %v3226
        %v3437 = vpop.f32.mrb[0].mxu0
        %v3438 = vadd.f32 0.0, %v3437
        %v3439 = vpop.f32.mrb[0].mxu0
        %3440 = vmatprep.mubr.f32.mxu0 0.0
        %3441 = vmatmul.mubr.f32.gmra.mrb[0].mxu0 %v3229
        %v3442 = vpop.f32.mrb[0].mxu0
        %v3443 = vadd.f32 0.0, %v3442
        %v3444 = vpop.f32.mrb[0].mxu0
        %3445 = vmatprep.mubr.f32.mxu0 0.0
        %3446 = vmatmul.mubr.f32.gmra.mrb[0].mxu0 %v3232
        %v3447 = vpop.f32.mrb[0].mxu0
        %v3448 = vadd.f32 0.0, %v3447
        %v3449 = vpop.f32.mrb[0].mxu0
        %3450 = vmatprep.mubr.f32.mxu0 0.0
        %3451 = vmatmul.mubr.f32.gmra.mrb[0].mxu0 %v3235
        %v3452 = vpop.f32.mrb[0].mxu0
        %v3453 = vadd.f32 0.0, %v3452
        %v3454 = vpop.f32.mrb[0].mxu0
        %3455 = vmatprep.mubr.f32.mxu0 0.0
        %3456 = vmatmul.mubr.f32.gmra.mrb[0].mxu0 %v3238
        %v3457 = vpop.f32.mrb[0].mxu0
        %v3458 = vadd.f32 0.0, %v3457
        %v3459 = vpop.f32.mrb[0].mxu0
        %3460 = vmatprep.mubr.f32.mxu0 0.0
        %3461 = vmatmul.mubr.f32.gmra.mrb[0].mxu0 %v3241
        %v3462 = vpop.f32.mrb[0].mxu0
        %v3463 = vadd.f32 0.0, %v3462
        %v3464 = vpop.f32.mrb[0].mxu0
        %3465 = vmatprep.mubr.f32.mxu0 0.0
        %3466 = vmatmul.mubr.f32.gmra.mrb[0].mxu0 %v3244
        %v3467 = vpop.f32.mrb[0].mxu0
        %v3468 = vadd.f32 0.0, %v3467
        %v3469 = vpop.f32.mrb[0].mxu0
        %3470 = vdwg.mxu0
        %v3471 = vadd.f32 %v3084, %v3313
        %v3472 = vadd.f32 %v3085, %v3318
        %v3473 = vadd.f32 %v3086, %v3323
        %v3474 = vadd.f32 %v3087, %v3328
        %v3475 = vadd.f32 %v3088, %v3333
        %v3476 = vadd.f32 %v3089, %v3338
        %v3477 = vadd.f32 %v3090, %v3343
        %v3478 = vadd.f32 %v3091, %v3348
        %v3479 = vadd.f32 %v3092, %v3353
        %v3480 = vadd.f32 %v3093, %v3358
        %v3481 = vadd.f32 %v3094, %v3363
        %v3482 = vadd.f32 %v3095, %v3368
        %v3483 = vadd.f32 %v3096, %v3373
        %v3484 = vadd.f32 %v3097, %v3378
        %v3485 = vadd.f32 %v3098, %v3383
        %v3486 = vadd.f32 %v3099, %v3388
        %v3487 = vadd.f32 %v3100, %v3393
        %v3488 = vadd.f32 %v3101, %v3398
        %v3489 = vadd.f32 %v3102, %v3403
        %v3490 = vadd.f32 %v3103, %v3408
        %v3491 = vadd.f32 %v3104, %v3413
        %v3492 = vadd.f32 %v3105, %v3418
        %v3493 = vadd.f32 %v3106, %v3423
        %v3494 = vadd.f32 %v3107, %v3428
        %v3495 = vadd.f32 %v3108, %v3433
        %v3496 = vadd.f32 %v3109, %v3438
        %v3497 = vadd.f32 %v3110, %v3443
        %v3498 = vadd.f32 %v3111, %v3448
        %v3499 = vadd.f32 %v3112, %v3453
        %v3500 = vadd.f32 %v3113, %v3458
        %v3501 = vadd.f32 %v3114, %v3463
        %v3502 = vadd.f32 %v3115, %v3468
        %v3503 = vld [vmem:[%s2728 + $0x2] sm:$0xff]
        %v3504 = vld [vmem:[%s2728 + $0xa] sm:$0xff]
        %v3505 = vld [vmem:[%s2728 + $0x1a] sm:$0xff]
        %v3506 = vld [vmem:[%s2728 + $0x22] sm:$0xff]
        %v3507 = vld [vmem:[%s2728 + $0x32] sm:$0xff]
        %v3508 = vld [vmem:[%s2728 + $0x3a] sm:$0xff]
        %v3509 = vld [vmem:[%s2728 + $0x4a] sm:$0xff]
        %v3510 = vld [vmem:[%s2728 + $0x52] sm:$0xff]
        %v3511 = vld [vmem:[%s2728 + $0x62] sm:$0xff]
        %v3512 = vld [vmem:[%s2728 + $0x6a] sm:$0xff]
        %v3513 = vld [vmem:[%s2728 + $0x7a] sm:$0xff]
        %v3514 = vld [vmem:[%s2728 + $0x82] sm:$0xff]
        %v3515 = vld [vmem:[%s2728 + $0x92] sm:$0xff]
        %v3516 = vld [vmem:[%s2728 + $0x9a] sm:$0xff]
        %v3517 = vld [vmem:[%s2728 + $0xaa] sm:$0xff]
        %v3518 = vld [vmem:[%s2728 + $0xb2] sm:$0xff]
        %v3519 = vld [vmem:[%s2728 + $0xc2] sm:$0xff]
        %v3520 = vld [vmem:[%s2728 + $0xca] sm:$0xff]
        %v3521 = vld [vmem:[%s2728 + $0xda] sm:$0xff]
        %v3522 = vld [vmem:[%s2728 + $0xe2] sm:$0xff]
        %v3523 = vld [vmem:[%s2728 + $0xf2] sm:$0xff]
        %v3524 = vld [vmem:[%s2728 + $0xfa] sm:$0xff]
        %v3525 = vld [vmem:[%s2728 + $0x10a] sm:$0xff]
        %v3526 = vld [vmem:[%s2728 + $0x112] sm:$0xff]
        %v3527 = vld [vmem:[%s2728 + $0x122] sm:$0xff]
        %v3528 = vld [vmem:[%s2728 + $0x12a] sm:$0xff]
        %v3529 = vld [vmem:[%s2728 + $0x13a] sm:$0xff]
        %v3530 = vld [vmem:[%s2728 + $0x142] sm:$0xff]
        %v3531 = vld [vmem:[%s2728 + $0x152] sm:$0xff]
        %v3532 = vld [vmem:[%s2728 + $0x15a] sm:$0xff]
        %v3533 = vld [vmem:[%s2728 + $0x16a] sm:$0xff]
        %v3534 = vld [vmem:[%s2728 + $0x172] sm:$0xff]
        %s3535 = scalar_lea.vmem %s1, 64
        %v3536 = vld [vmem:[%s3535] sm:$0xff]
        %v3538 = vsel %vm310, %v3503, 0
        %v3541 = vsel %vm310, %v3504, 0
        %v3544 = vsel %vm310, %v3505, 0
        %v3547 = vsel %vm310, %v3506, 0
        %v3550 = vsel %vm310, %v3507, 0
        %v3553 = vsel %vm310, %v3508, 0
        %v3556 = vsel %vm310, %v3509, 0
        %v3559 = vsel %vm310, %v3510, 0
        %v3562 = vsel %vm310, %v3511, 0
        %v3565 = vsel %vm310, %v3512, 0
        %v3568 = vsel %vm310, %v3513, 0
        %v3571 = vsel %vm310, %v3514, 0
        %v3574 = vsel %vm310, %v3515, 0
        %v3577 = vsel %vm310, %v3516, 0
        %v3580 = vsel %vm310, %v3517, 0
        %v3583 = vsel %vm310, %v3518, 0
        %v3586 = vsel %vm310, %v3519, 0
        %v3589 = vsel %vm310, %v3520, 0
        %v3592 = vsel %vm310, %v3521, 0
        %v3595 = vsel %vm310, %v3522, 0
        %v3598 = vsel %vm310, %v3523, 0
        %v3601 = vsel %vm310, %v3524, 0
        %v3604 = vsel %vm310, %v3525, 0
        %v3607 = vsel %vm310, %v3526, 0
        %v3610 = vsel %vm310, %v3527, 0
        %v3613 = vsel %vm310, %v3528, 0
        %v3616 = vsel %vm310, %v3529, 0
        %v3619 = vsel %vm310, %v3530, 0
        %v3622 = vsel %vm310, %v3531, 0
        %v3625 = vsel %vm310, %v3532, 0
        %v3628 = vsel %vm310, %v3533, 0
        %v3631 = vsel %vm310, %v3534, 0
        %3633 = vmatprep.subr.mxu0 0.0
        %3634 = vmatpush1.msra.mxu0 %v3536
        %3635 = vmatprep.subr.mxu0 0.0
        %3636 = vmatpush1.msra.mxu0 0.0
        %3637 = vmatprep.subr.mxu0 0.0
        %3638 = vmatpush1.msra.mxu0 0.0
        %3639 = vmatprep.subr.mxu0 0.0
        %3640 = vmatpush1.msra.mxu0 0.0
        %3641 = vmatprep.subr.mxu0 0.0
        %3642 = vmatpush1.msra.mxu0 0.0
        %3643 = vmatprep.subr.mxu0 0.0
        %3644 = vmatpush1.msra.mxu0 0.0
        %3645 = vmatprep.subr.mxu0 0.0
        %3646 = vmatpush1.msra.mxu0 0.0
        %3647 = vmatprep.subr.mxu0 0.0
        %3648 = vmatpush1.msra.mxu0 0.0
        %3649 = vmatprep.subr.mxu0 0.0
        %3650 = vmatpush1.msra.mxu0 0.0
        %3651 = vmatprep.subr.mxu0 0.0
        %3652 = vmatpush1.msra.mxu0 0.0
        %3653 = vmatprep.subr.mxu0 0.0
        %3654 = vmatpush1.msra.mxu0 0.0
        %3655 = vmatprep.subr.mxu0 0.0
        %3656 = vmatpush1.msra.mxu0 0.0
        %3657 = vmatprep.subr.mxu0 0.0
        %3658 = vmatpush1.msra.mxu0 0.0
        %3659 = vmatprep.subr.mxu0 0.0
        %3660 = vmatpush1.msra.mxu0 0.0
        %3661 = vmatprep.subr.mxu0 0.0
        %3662 = vmatpush1.msra.mxu0 0.0
        %3663 = vmatprep.subr.mxu0 0.0
        %3664 = vmatpush1.msra.mxu0 0.0
        %3665 = vmatprep.subr.mxu0 0.0
        %3666 = vmatpush1.msra.mxu0 0.0
        %3667 = vmatprep.subr.mxu0 0.0
        %3668 = vmatpush1.msra.mxu0 0.0
        %3669 = vmatprep.subr.mxu0 0.0
        %3670 = vmatpush1.msra.mxu0 0.0
        %3671 = vmatprep.subr.mxu0 0.0
        %3672 = vmatpush1.msra.mxu0 0.0
        %3673 = vmatprep.subr.mxu0 0.0
        %3674 = vmatpush1.msra.mxu0 0.0
        %3675 = vmatprep.subr.mxu0 0.0
        %3676 = vmatpush1.msra.mxu0 0.0
        %3677 = vmatprep.subr.mxu0 0.0
        %3678 = vmatpush1.msra.mxu0 0.0
        %3679 = vmatprep.subr.mxu0 0.0
        %3680 = vmatpush1.msra.mxu0 0.0
        %3681 = vmatprep.subr.mxu0 0.0
        %3682 = vmatpush1.msra.mxu0 0.0
        %3683 = vmatprep.subr.mxu0 0.0
        %3684 = vmatpush1.msra.mxu0 0.0
        %3685 = vmatprep.subr.mxu0 0.0
        %3686 = vmatpush1.msra.mxu0 0.0
        %3687 = vmatprep.subr.mxu0 0.0
        %3688 = vmatpush1.msra.mxu0 0.0
        %3689 = vmatprep.subr.mxu0 0.0
        %3690 = vmatpush1.msra.mxu0 0.0
        %3691 = vmatprep.subr.mxu0 0.0
        %3692 = vmatpush1.msra.mxu0 0.0
        %3693 = vmatprep.subr.mxu0 0.0
        %3694 = vmatpush1.msra.mxu0 0.0
        %3695 = vmatprep.subr.mxu0 0.0
        %3696 = vmatpush1.msra.mxu0 0.0
        %3697 = vmatprep.mubr.f32.mxu0 0.0
        %3698 = vmatmul.mubr.f32.gmra.mrb[0].mxu0 %v3538
        %v3699 = vpop.f32.mrb[0].mxu0
        %v3700 = vadd.f32 0.0, %v3699
        %v3701 = vpop.f32.mrb[0].mxu0
        %3702 = vmatprep.mubr.f32.mxu0 0.0
        %3703 = vmatmul.mubr.f32.gmra.mrb[0].mxu0 %v3541
        %v3704 = vpop.f32.mrb[0].mxu0
        %v3705 = vadd.f32 0.0, %v3704
        %v3706 = vpop.f32.mrb[0].mxu0
        %3707 = vmatprep.mubr.f32.mxu0 0.0
        %3708 = vmatmul.mubr.f32.gmra.mrb[0].mxu0 %v3544
        %v3709 = vpop.f32.mrb[0].mxu0
        %v3710 = vadd.f32 0.0, %v3709
        %v3711 = vpop.f32.mrb[0].mxu0
        %3712 = vmatprep.mubr.f32.mxu0 0.0
        %3713 = vmatmul.mubr.f32.gmra.mrb[0].mxu0 %v3547
        %v3714 = vpop.f32.mrb[0].mxu0
        %v3715 = vadd.f32 0.0, %v3714
        %v3716 = vpop.f32.mrb[0].mxu0
        %3717 = vmatprep.mubr.f32.mxu0 0.0
        %3718 = vmatmul.mubr.f32.gmra.mrb[0].mxu0 %v3550
        %v3719 = vpop.f32.mrb[0].mxu0
        %v3720 = vadd.f32 0.0, %v3719
        %v3721 = vpop.f32.mrb[0].mxu0
        %3722 = vmatprep.mubr.f32.mxu0 0.0
        %3723 = vmatmul.mubr.f32.gmra.mrb[0].mxu0 %v3553
        %v3724 = vpop.f32.mrb[0].mxu0
        %v3725 = vadd.f32 0.0, %v3724
        %v3726 = vpop.f32.mrb[0].mxu0
        %3727 = vmatprep.mubr.f32.mxu0 0.0
        %3728 = vmatmul.mubr.f32.gmra.mrb[0].mxu0 %v3556
        %v3729 = vpop.f32.mrb[0].mxu0
        %v3730 = vadd.f32 0.0, %v3729
        %v3731 = vpop.f32.mrb[0].mxu0
        %3732 = vmatprep.mubr.f32.mxu0 0.0
        %3733 = vmatmul.mubr.f32.gmra.mrb[0].mxu0 %v3559
        %v3734 = vpop.f32.mrb[0].mxu0
        %v3735 = vadd.f32 0.0, %v3734
        %v3736 = vpop.f32.mrb[0].mxu0
        %3737 = vmatprep.mubr.f32.mxu0 0.0
        %3738 = vmatmul.mubr.f32.gmra.mrb[0].mxu0 %v3562
        %v3739 = vpop.f32.mrb[0].mxu0
        %v3740 = vadd.f32 0.0, %v3739
        %v3741 = vpop.f32.mrb[0].mxu0
        %3742 = vmatprep.mubr.f32.mxu0 0.0
        %3743 = vmatmul.mubr.f32.gmra.mrb[0].mxu0 %v3565
        %v3744 = vpop.f32.mrb[0].mxu0
        %v3745 = vadd.f32 0.0, %v3744
        %v3746 = vpop.f32.mrb[0].mxu0
        %3747 = vmatprep.mubr.f32.mxu0 0.0
        %3748 = vmatmul.mubr.f32.gmra.mrb[0].mxu0 %v3568
        %v3749 = vpop.f32.mrb[0].mxu0
        %v3750 = vadd.f32 0.0, %v3749
        %v3751 = vpop.f32.mrb[0].mxu0
        %3752 = vmatprep.mubr.f32.mxu0 0.0
        %3753 = vmatmul.mubr.f32.gmra.mrb[0].mxu0 %v3571
        %v3754 = vpop.f32.mrb[0].mxu0
        %v3755 = vadd.f32 0.0, %v3754
        %v3756 = vpop.f32.mrb[0].mxu0
        %3757 = vmatprep.mubr.f32.mxu0 0.0
        %3758 = vmatmul.mubr.f32.gmra.mrb[0].mxu0 %v3574
        %v3759 = vpop.f32.mrb[0].mxu0
        %v3760 = vadd.f32 0.0, %v3759
        %v3761 = vpop.f32.mrb[0].mxu0
        %3762 = vmatprep.mubr.f32.mxu0 0.0
        %3763 = vmatmul.mubr.f32.gmra.mrb[0].mxu0 %v3577
        %v3764 = vpop.f32.mrb[0].mxu0
        %v3765 = vadd.f32 0.0, %v3764
        %v3766 = vpop.f32.mrb[0].mxu0
        %3767 = vmatprep.mubr.f32.mxu0 0.0
        %3768 = vmatmul.mubr.f32.gmra.mrb[0].mxu0 %v3580
        %v3769 = vpop.f32.mrb[0].mxu0
        %v3770 = vadd.f32 0.0, %v3769
        %v3771 = vpop.f32.mrb[0].mxu0
        %3772 = vmatprep.mubr.f32.mxu0 0.0
        %3773 = vmatmul.mubr.f32.gmra.mrb[0].mxu0 %v3583
        %v3774 = vpop.f32.mrb[0].mxu0
        %v3775 = vadd.f32 0.0, %v3774
        %v3776 = vpop.f32.mrb[0].mxu0
        %3777 = vmatprep.mubr.f32.mxu0 0.0
        %3778 = vmatmul.mubr.f32.gmra.mrb[0].mxu0 %v3586
        %v3779 = vpop.f32.mrb[0].mxu0
        %v3780 = vadd.f32 0.0, %v3779
        %v3781 = vpop.f32.mrb[0].mxu0
        %3782 = vmatprep.mubr.f32.mxu0 0.0
        %3783 = vmatmul.mubr.f32.gmra.mrb[0].mxu0 %v3589
        %v3784 = vpop.f32.mrb[0].mxu0
        %v3785 = vadd.f32 0.0, %v3784
        %v3786 = vpop.f32.mrb[0].mxu0
        %3787 = vmatprep.mubr.f32.mxu0 0.0
        %3788 = vmatmul.mubr.f32.gmra.mrb[0].mxu0 %v3592
        %v3789 = vpop.f32.mrb[0].mxu0
        %v3790 = vadd.f32 0.0, %v3789
        %v3791 = vpop.f32.mrb[0].mxu0
        %3792 = vmatprep.mubr.f32.mxu0 0.0
        %3793 = vmatmul.mubr.f32.gmra.mrb[0].mxu0 %v3595
        %v3794 = vpop.f32.mrb[0].mxu0
        %v3795 = vadd.f32 0.0, %v3794
        %v3796 = vpop.f32.mrb[0].mxu0
        %3797 = vmatprep.mubr.f32.mxu0 0.0
        %3798 = vmatmul.mubr.f32.gmra.mrb[0].mxu0 %v3598
        %v3799 = vpop.f32.mrb[0].mxu0
        %v3800 = vadd.f32 0.0, %v3799
        %v3801 = vpop.f32.mrb[0].mxu0
        %3802 = vmatprep.mubr.f32.mxu0 0.0
        %3803 = vmatmul.mubr.f32.gmra.mrb[0].mxu0 %v3601
        %v3804 = vpop.f32.mrb[0].mxu0
        %v3805 = vadd.f32 0.0, %v3804
        %v3806 = vpop.f32.mrb[0].mxu0
        %3807 = vmatprep.mubr.f32.mxu0 0.0
        %3808 = vmatmul.mubr.f32.gmra.mrb[0].mxu0 %v3604
        %v3809 = vpop.f32.mrb[0].mxu0
        %v3810 = vadd.f32 0.0, %v3809
        %v3811 = vpop.f32.mrb[0].mxu0
        %3812 = vmatprep.mubr.f32.mxu0 0.0
        %3813 = vmatmul.mubr.f32.gmra.mrb[0].mxu0 %v3607
        %v3814 = vpop.f32.mrb[0].mxu0
        %v3815 = vadd.f32 0.0, %v3814
        %v3816 = vpop.f32.mrb[0].mxu0
        %3817 = vmatprep.mubr.f32.mxu0 0.0
        %3818 = vmatmul.mubr.f32.gmra.mrb[0].mxu0 %v3610
        %v3819 = vpop.f32.mrb[0].mxu0
        %v3820 = vadd.f32 0.0, %v3819
        %v3821 = vpop.f32.mrb[0].mxu0
        %3822 = vmatprep.mubr.f32.mxu0 0.0
        %3823 = vmatmul.mubr.f32.gmra.mrb[0].mxu0 %v3613
        %v3824 = vpop.f32.mrb[0].mxu0
        %v3825 = vadd.f32 0.0, %v3824
        %v3826 = vpop.f32.mrb[0].mxu0
        %3827 = vmatprep.mubr.f32.mxu0 0.0
        %3828 = vmatmul.mubr.f32.gmra.mrb[0].mxu0 %v3616
        %v3829 = vpop.f32.mrb[0].mxu0
        %v3830 = vadd.f32 0.0, %v3829
        %v3831 = vpop.f32.mrb[0].mxu0
        %3832 = vmatprep.mubr.f32.mxu0 0.0
        %3833 = vmatmul.mubr.f32.gmra.mrb[0].mxu0 %v3619
        %v3834 = vpop.f32.mrb[0].mxu0
        %v3835 = vadd.f32 0.0, %v3834
        %v3836 = vpop.f32.mrb[0].mxu0
        %3837 = vmatprep.mubr.f32.mxu0 0.0
        %3838 = vmatmul.mubr.f32.gmra.mrb[0].mxu0 %v3622
        %v3839 = vpop.f32.mrb[0].mxu0
        %v3840 = vadd.f32 0.0, %v3839
        %v3841 = vpop.f32.mrb[0].mxu0
        %3842 = vmatprep.mubr.f32.mxu0 0.0
        %3843 = vmatmul.mubr.f32.gmra.mrb[0].mxu0 %v3625
        %v3844 = vpop.f32.mrb[0].mxu0
        %v3845 = vadd.f32 0.0, %v3844
        %v3846 = vpop.f32.mrb[0].mxu0
        %3847 = vmatprep.mubr.f32.mxu0 0.0
        %3848 = vmatmul.mubr.f32.gmra.mrb[0].mxu0 %v3628
        %v3849 = vpop.f32.mrb[0].mxu0
        %v3850 = vadd.f32 0.0, %v3849
        %v3851 = vpop.f32.mrb[0].mxu0
        %3852 = vmatprep.mubr.f32.mxu0 0.0
        %3853 = vmatmul.mubr.f32.gmra.mrb[0].mxu0 %v3631
        %v3854 = vpop.f32.mrb[0].mxu0
        %v3855 = vadd.f32 0.0, %v3854
        %v3856 = vpop.f32.mrb[0].mxu0
        %3857 = vdwg.mxu0
        %v3858 = vadd.f32 %v3471, %v3700
        %v3859 = vadd.f32 %v3472, %v3705
        %v3860 = vadd.f32 %v3473, %v3710
        %v3861 = vadd.f32 %v3474, %v3715
        %v3862 = vadd.f32 %v3475, %v3720
        %v3863 = vadd.f32 %v3476, %v3725
        %v3864 = vadd.f32 %v3477, %v3730
        %v3865 = vadd.f32 %v3478, %v3735
        %v3866 = vadd.f32 %v3479, %v3740
        %v3867 = vadd.f32 %v3480, %v3745
        %v3868 = vadd.f32 %v3481, %v3750
        %v3869 = vadd.f32 %v3482, %v3755
        %v3870 = vadd.f32 %v3483, %v3760
        %v3871 = vadd.f32 %v3484, %v3765
        %v3872 = vadd.f32 %v3485, %v3770
        %v3873 = vadd.f32 %v3486, %v3775
        %v3874 = vadd.f32 %v3487, %v3780
        %v3875 = vadd.f32 %v3488, %v3785
        %v3876 = vadd.f32 %v3489, %v3790
        %v3877 = vadd.f32 %v3490, %v3795
        %v3878 = vadd.f32 %v3491, %v3800
        %v3879 = vadd.f32 %v3492, %v3805
        %v3880 = vadd.f32 %v3493, %v3810
        %v3881 = vadd.f32 %v3494, %v3815
        %v3882 = vadd.f32 %v3495, %v3820
        %v3883 = vadd.f32 %v3496, %v3825
        %v3884 = vadd.f32 %v3497, %v3830
        %v3885 = vadd.f32 %v3498, %v3835
        %v3886 = vadd.f32 %v3499, %v3840
        %v3887 = vadd.f32 %v3500, %v3845
        %v3888 = vadd.f32 %v3501, %v3850
        %v3889 = vadd.f32 %v3502, %v3855
        %3890 = vst [vmem:[%s221] sm:$0xff] %v3858
        %3891 = vst [vmem:[%s221 + $0x8] sm:$0xff] %v3859
        %3892 = vst [vmem:[%s221 + $0x10] sm:$0xff] %v3860
        %3893 = vst [vmem:[%s221 + $0x18] sm:$0xff] %v3861
        %3894 = vst [vmem:[%s221 + $0x20] sm:$0xff] %v3862
        %3895 = vst [vmem:[%s221 + $0x28] sm:$0xff] %v3863
        %3896 = vst [vmem:[%s221 + $0x30] sm:$0xff] %v3864
        %3897 = vst [vmem:[%s221 + $0x38] sm:$0xff] %v3865
        %3898 = vst [vmem:[%s221 + $0x40] sm:$0xff] %v3866
        %3899 = vst [vmem:[%s221 + $0x48] sm:$0xff] %v3867
        %3900 = vst [vmem:[%s221 + $0x50] sm:$0xff] %v3868
        %3901 = vst [vmem:[%s221 + $0x58] sm:$0xff] %v3869
        %3902 = vst [vmem:[%s221 + $0x60] sm:$0xff] %v3870
        %3903 = vst [vmem:[%s221 + $0x68] sm:$0xff] %v3871
        %3904 = vst [vmem:[%s221 + $0x70] sm:$0xff] %v3872
        %3905 = vst [vmem:[%s221 + $0x78] sm:$0xff] %v3873
        %3906 = vst [vmem:[%s221 + $0x80] sm:$0xff] %v3874
        %3907 = vst [vmem:[%s221 + $0x88] sm:$0xff] %v3875
        %3908 = vst [vmem:[%s221 + $0x90] sm:$0xff] %v3876
        %3909 = vst [vmem:[%s221 + $0x98] sm:$0xff] %v3877
        %3910 = vst [vmem:[%s221 + $0xa0] sm:$0xff] %v3878
        %3911 = vst [vmem:[%s221 + $0xa8] sm:$0xff] %v3879
        %3912 = vst [vmem:[%s221 + $0xb0] sm:$0xff] %v3880
        %3913 = vst [vmem:[%s221 + $0xb8] sm:$0xff] %v3881
        %3914 = vst [vmem:[%s221 + $0xc0] sm:$0xff] %v3882
        %3915 = vst [vmem:[%s221 + $0xc8] sm:$0xff] %v3883
        %3916 = vst [vmem:[%s221 + $0xd0] sm:$0xff] %v3884
        %3917 = vst [vmem:[%s221 + $0xd8] sm:$0xff] %v3885
        %3918 = vst [vmem:[%s221 + $0xe0] sm:$0xff] %v3886
        %3919 = vst [vmem:[%s221 + $0xe8] sm:$0xff] %v3887
        %3920 = vst [vmem:[%s221 + $0xf0] sm:$0xff] %v3888
        %3921 = vst [vmem:[%s221 + $0xf8] sm:$0xff] %v3889
        %v3922 = vadd.f32 %v3858, %v3859
        %v3923 = vadd.f32 %v3922, %v3860
        %v3924 = vadd.f32 %v3923, %v3861
        %v3925 = vadd.f32 %v3924, %v3862
        %v3926 = vadd.f32 %v3925, %v3863
        %v3927 = vadd.f32 %v3926, %v3864
        %v3928 = vadd.f32 %v3927, %v3865
        %v3929 = vadd.f32 %v3928, %v3866
        %v3930 = vadd.f32 %v3929, %v3867
        %v3931 = vadd.f32 %v3930, %v3868
        %v3932 = vadd.f32 %v3931, %v3869
        %v3933 = vadd.f32 %v3932, %v3870
        %v3934 = vadd.f32 %v3933, %v3871
        %v3935 = vadd.f32 %v3934, %v3872
        %v3936 = vadd.f32 %v3935, %v3873
        %v3937 = vadd.f32 %v3936, %v3874
        %v3938 = vadd.f32 %v3937, %v3875
        %v3939 = vadd.f32 %v3938, %v3876
        %v3940 = vadd.f32 %v3939, %v3877
        %v3941 = vadd.f32 %v3940, %v3878
        %v3942 = vadd.f32 %v3941, %v3879
        %v3943 = vadd.f32 %v3942, %v3880
        %v3944 = vadd.f32 %v3943, %v3881
        %v3945 = vadd.f32 %v3944, %v3882
        %v3946 = vadd.f32 %v3945, %v3883
        %v3947 = vadd.f32 %v3946, %v3884
        %v3948 = vadd.f32 %v3947, %v3885
        %v3949 = vadd.f32 %v3948, %v3886
        %v3950 = vadd.f32 %v3949, %v3887
        %v3951 = vadd.f32 %v3950, %v3888
        %v3952 = vadd.f32 %v3951, %v3889
        %v3953 = vrot.slane %v3952, 4
        %v3954 = vadd.f32 %v3952, %v3953
        %v3955 = vrot.slane %v3954, 2
        %v3956 = vadd.f32 %v3954, %v3955
        %v3957 = vrot.slane %v3956, 1
        %v3958 = vadd.f32 %v3956, %v3957
        %v3959 = vmul.f32 %v3858, %v3858
        %v3960 = vmul.f32 %v3859, %v3859
        %v3961 = vmul.f32 %v3860, %v3860
        %v3962 = vmul.f32 %v3861, %v3861
        %v3963 = vmul.f32 %v3862, %v3862
        %v3964 = vmul.f32 %v3863, %v3863
        %v3965 = vmul.f32 %v3864, %v3864
        %v3966 = vmul.f32 %v3865, %v3865
        %v3967 = vmul.f32 %v3866, %v3866
        %v3968 = vmul.f32 %v3867, %v3867
        %v3969 = vmul.f32 %v3868, %v3868
        %v3970 = vmul.f32 %v3869, %v3869
        %v3971 = vmul.f32 %v3870, %v3870
        %v3972 = vmul.f32 %v3871, %v3871
        %v3973 = vmul.f32 %v3872, %v3872
        %v3974 = vmul.f32 %v3873, %v3873
        %v3975 = vmul.f32 %v3874, %v3874
        %v3976 = vmul.f32 %v3875, %v3875
        %v3977 = vmul.f32 %v3876, %v3876
        %v3978 = vmul.f32 %v3877, %v3877
        %v3979 = vmul.f32 %v3878, %v3878
        %v3980 = vmul.f32 %v3879, %v3879
        %v3981 = vmul.f32 %v3880, %v3880
        %v3982 = vmul.f32 %v3881, %v3881
        %v3983 = vmul.f32 %v3882, %v3882
        %v3984 = vmul.f32 %v3883, %v3883
        %v3985 = vmul.f32 %v3884, %v3884
        %v3986 = vmul.f32 %v3885, %v3885
        %v3987 = vmul.f32 %v3886, %v3886
        %v3988 = vmul.f32 %v3887, %v3887
        %v3989 = vmul.f32 %v3888, %v3888
        %v3990 = vmul.f32 %v3889, %v3889
        %v3991 = vadd.f32 %v3959, %v3960
        %v3992 = vadd.f32 %v3991, %v3961
        %v3993 = vadd.f32 %v3992, %v3962
        %v3994 = vadd.f32 %v3993, %v3963
        %v3995 = vadd.f32 %v3994, %v3964
        %v3996 = vadd.f32 %v3995, %v3965
        %v3997 = vadd.f32 %v3996, %v3966
        %v3998 = vadd.f32 %v3997, %v3967
        %v3999 = vadd.f32 %v3998, %v3968
        %v4000 = vadd.f32 %v3999, %v3969
        %v4001 = vadd.f32 %v4000, %v3970
        %v4002 = vadd.f32 %v4001, %v3971
        %v4003 = vadd.f32 %v4002, %v3972
        %v4004 = vadd.f32 %v4003, %v3973
        %v4005 = vadd.f32 %v4004, %v3974
        %v4006 = vadd.f32 %v4005, %v3975
        %v4007 = vadd.f32 %v4006, %v3976
        %v4008 = vadd.f32 %v4007, %v3977
        %v4009 = vadd.f32 %v4008, %v3978
        %v4010 = vadd.f32 %v4009, %v3979
        %v4011 = vadd.f32 %v4010, %v3980
        %v4012 = vadd.f32 %v4011, %v3981
        %v4013 = vadd.f32 %v4012, %v3982
        %v4014 = vadd.f32 %v4013, %v3983
        %v4015 = vadd.f32 %v4014, %v3984
        %v4016 = vadd.f32 %v4015, %v3985
        %v4017 = vadd.f32 %v4016, %v3986
        %v4018 = vadd.f32 %v4017, %v3987
        %v4019 = vadd.f32 %v4018, %v3988
        %v4020 = vadd.f32 %v4019, %v3989
        %v4021 = vadd.f32 %v4020, %v3990
        %v4022 = vrot.slane %v4021, 4
        %v4023 = vadd.f32 %v4021, %v4022
        %v4024 = vrot.slane %v4023, 2
        %v4025 = vadd.f32 %v4023, %v4024
        %v4026 = vrot.slane %v4025, 1
        %v4027 = vadd.f32 %v4025, %v4026
        %4028 = vst [vmem:[%s228] sm:$0xff] %v2183
        %4029 = vst [vmem:[%s228 + $0x8] sm:$0xff] %v2188
        %4030 = vst [vmem:[%s228 + $0x10] sm:$0xff] %v2193
        %4031 = vst [vmem:[%s228 + $0x18] sm:$0xff] %v2198
        %4032 = vst [vmem:[%s228 + $0x20] sm:$0xff] %v2203
        %4033 = vst [vmem:[%s228 + $0x28] sm:$0xff] %v2208
        %4034 = vst [vmem:[%s228 + $0x30] sm:$0xff] %v2213
        %4035 = vst [vmem:[%s228 + $0x38] sm:$0xff] %v2218
        %4036 = vst [vmem:[%s228 + $0x40] sm:$0xff] %v2223
        %4037 = vst [vmem:[%s228 + $0x48] sm:$0xff] %v2228
        %4038 = vst [vmem:[%s228 + $0x50] sm:$0xff] %v2233
        %4039 = vst [vmem:[%s228 + $0x58] sm:$0xff] %v2238
        %4040 = vst [vmem:[%s228 + $0x60] sm:$0xff] %v2243
        %4041 = vst [vmem:[%s228 + $0x68] sm:$0xff] %v2248
        %4042 = vst [vmem:[%s228 + $0x70] sm:$0xff] %v2253
        %4043 = vst [vmem:[%s228 + $0x78] sm:$0xff] %v2258
        %4044 = vst [vmem:[%s228 + $0x80] sm:$0xff] %v2263
        %4045 = vst [vmem:[%s228 + $0x88] sm:$0xff] %v2268
        %4046 = vst [vmem:[%s228 + $0x90] sm:$0xff] %v2273
        %4047 = vst [vmem:[%s228 + $0x98] sm:$0xff] %v2278
        %4048 = vst [vmem:[%s228 + $0xa0] sm:$0xff] %v2283
        %4049 = vst [vmem:[%s228 + $0xa8] sm:$0xff] %v2288
        %4050 = vst [vmem:[%s228 + $0xb0] sm:$0xff] %v2293
        %4051 = vst [vmem:[%s228 + $0xb8] sm:$0xff] %v2298
        %4052 = vst [vmem:[%s228 + $0xc0] sm:$0xff] %v2303
        %4053 = vst [vmem:[%s228 + $0xc8] sm:$0xff] %v2308
        %4054 = vst [vmem:[%s228 + $0xd0] sm:$0xff] %v2313
        %4055 = vst [vmem:[%s228 + $0xd8] sm:$0xff] %v2318
        %4056 = vst [vmem:[%s228 + $0xe0] sm:$0xff] %v2323
        %4057 = vst [vmem:[%s228 + $0xe8] sm:$0xff] %v2328
        %4058 = vst [vmem:[%s228 + $0xf0] sm:$0xff] %v2333
        %4059 = vst [vmem:[%s228 + $0xf8] sm:$0xff] %v2338
        %v4060 = vadd.f32 %v2183, %v2188
        %v4061 = vadd.f32 %v4060, %v2193
        %v4062 = vadd.f32 %v4061, %v2198
        %v4063 = vadd.f32 %v4062, %v2203
        %v4064 = vadd.f32 %v4063, %v2208
        %v4065 = vadd.f32 %v4064, %v2213
        %v4066 = vadd.f32 %v4065, %v2218
        %v4067 = vadd.f32 %v4066, %v2223
        %v4068 = vadd.f32 %v4067, %v2228
        %v4069 = vadd.f32 %v4068, %v2233
        %v4070 = vadd.f32 %v4069, %v2238
        %v4071 = vadd.f32 %v4070, %v2243
        %v4072 = vadd.f32 %v4071, %v2248
        %v4073 = vadd.f32 %v4072, %v2253
        %v4074 = vadd.f32 %v4073, %v2258
        %v4075 = vadd.f32 %v4074, %v2263
        %v4076 = vadd.f32 %v4075, %v2268
        %v4077 = vadd.f32 %v4076, %v2273
        %v4078 = vadd.f32 %v4077, %v2278
        %v4079 = vadd.f32 %v4078, %v2283
        %v4080 = vadd.f32 %v4079, %v2288
        %v4081 = vadd.f32 %v4080, %v2293
        %v4082 = vadd.f32 %v4081, %v2298
        %v4083 = vadd.f32 %v4082, %v2303
        %v4084 = vadd.f32 %v4083, %v2308
        %v4085 = vadd.f32 %v4084, %v2313
        %v4086 = vadd.f32 %v4085, %v2318
        %v4087 = vadd.f32 %v4086, %v2323
        %v4088 = vadd.f32 %v4087, %v2328
        %v4089 = vadd.f32 %v4088, %v2333
        %v4090 = vadd.f32 %v4089, %v2338
        %v4091 = vrot.slane %v4090, 4
        %v4092 = vadd.f32 %v4090, %v4091
        %v4093 = vrot.slane %v4092, 2
        %v4094 = vadd.f32 %v4092, %v4093
        %v4095 = vrot.slane %v4094, 1
        %v4096 = vadd.f32 %v4094, %v4095
        %v4097 = vmul.f32 %v2183, %v2183
        %v4098 = vmul.f32 %v2188, %v2188
        %v4099 = vmul.f32 %v2193, %v2193
        %v4100 = vmul.f32 %v2198, %v2198
        %v4101 = vmul.f32 %v2203, %v2203
        %v4102 = vmul.f32 %v2208, %v2208
        %v4103 = vmul.f32 %v2213, %v2213
        %v4104 = vmul.f32 %v2218, %v2218
        %v4105 = vmul.f32 %v2223, %v2223
        %v4106 = vmul.f32 %v2228, %v2228
        %v4107 = vmul.f32 %v2233, %v2233
        %v4108 = vmul.f32 %v2238, %v2238
        %v4109 = vmul.f32 %v2243, %v2243
        %v4110 = vmul.f32 %v2248, %v2248
        %v4111 = vmul.f32 %v2253, %v2253
        %v4112 = vmul.f32 %v2258, %v2258
        %v4113 = vmul.f32 %v2263, %v2263
        %v4114 = vmul.f32 %v2268, %v2268
        %v4115 = vmul.f32 %v2273, %v2273
        %v4116 = vmul.f32 %v2278, %v2278
        %v4117 = vmul.f32 %v2283, %v2283
        %v4118 = vmul.f32 %v2288, %v2288
        %v4119 = vmul.f32 %v2293, %v2293
        %v4120 = vmul.f32 %v2298, %v2298
        %v4121 = vmul.f32 %v2303, %v2303
        %v4122 = vmul.f32 %v2308, %v2308
        %v4123 = vmul.f32 %v2313, %v2313
        %v4124 = vmul.f32 %v2318, %v2318
        %v4125 = vmul.f32 %v2323, %v2323
        %v4126 = vmul.f32 %v2328, %v2328
        %v4127 = vmul.f32 %v2333, %v2333
        %v4128 = vmul.f32 %v2338, %v2338
        %v4129 = vadd.f32 %v4097, %v4098
        %v4130 = vadd.f32 %v4129, %v4099
        %v4131 = vadd.f32 %v4130, %v4100
        %v4132 = vadd.f32 %v4131, %v4101
        %v4133 = vadd.f32 %v4132, %v4102
        %v4134 = vadd.f32 %v4133, %v4103
        %v4135 = vadd.f32 %v4134, %v4104
        %v4136 = vadd.f32 %v4135, %v4105
        %v4137 = vadd.f32 %v4136, %v4106
        %v4138 = vadd.f32 %v4137, %v4107
        %v4139 = vadd.f32 %v4138, %v4108
        %v4140 = vadd.f32 %v4139, %v4109
        %v4141 = vadd.f32 %v4140, %v4110
        %v4142 = vadd.f32 %v4141, %v4111
        %v4143 = vadd.f32 %v4142, %v4112
        %v4144 = vadd.f32 %v4143, %v4113
        %v4145 = vadd.f32 %v4144, %v4114
        %v4146 = vadd.f32 %v4145, %v4115
        %v4147 = vadd.f32 %v4146, %v4116
        %v4148 = vadd.f32 %v4147, %v4117
        %v4149 = vadd.f32 %v4148, %v4118
        %v4150 = vadd.f32 %v4149, %v4119
        %v4151 = vadd.f32 %v4150, %v4120
        %v4152 = vadd.f32 %v4151, %v4121
        %v4153 = vadd.f32 %v4152, %v4122
        %v4154 = vadd.f32 %v4153, %v4123
        %v4155 = vadd.f32 %v4154, %v4124
        %v4156 = vadd.f32 %v4155, %v4125
        %v4157 = vadd.f32 %v4156, %v4126
        %v4158 = vadd.f32 %v4157, %v4127
        %v4159 = vadd.f32 %v4158, %v4128
        %v4160 = vrot.slane %v4159, 4
        %v4161 = vadd.f32 %v4159, %v4160
        %v4162 = vrot.slane %v4161, 2
        %v4163 = vadd.f32 %v4161, %v4162
        %v4164 = vrot.slane %v4163, 1
        %v4165 = vadd.f32 %v4163, %v4164
        %v4166 = vlaneseq
        %v4167 = vshrl.u32 %v4166, 7
        %vm4168 = vcmp.eq.s32.totalorder %v4167, 0
        %v4169 = vsel %vm4168, %v3958, 0.0
        %vm4170 = vcmp.eq.s32.totalorder %v4167, 1
        %v4171 = vsel %vm4170, %v4027, %v4169
        %vm4172 = vcmp.eq.s32.totalorder %v4167, 2
        %v4173 = vsel %vm4172, %v4096, %v4171
        %vm4174 = vcmp.eq.s32.totalorder %v4167, 3
        %v4175 = vsel %vm4174, %v4165, %v4173
        %4176 = vst [vmem:[%s235] sm:$0xf] %v4175
        %s4177 = sand.u32 %s99, 1
        %s4178 = scalar_lea.sflag [#allocation3], %s4177
        %s4179 = sand.u32 %s99, 1
        %s4180 = smul.addr %s4179, 256
        %s4181 = scalar_lea.vmem [#allocation2], %s4180
        %s4182 = sand.u32 %s23, 1
        %s4183 = scalar_lea.sflag [#allocation5], %s4182
        %s4184 = sand.u32 %s125, 1
        %s4185 = smul.addr %s4184, 256
        %s4186 = scalar_lea.vmem [#allocation4], %s4185
        %s4187 = sand.u32 %s23, 1
        %s4188 = scalar_lea.sflag [#allocation5], %s4187
        %s4189 = sand.u32 %s151, 1
        %s4190 = smul.addr %s4189, 4
        %s4191 = scalar_lea.vmem [#allocation6], %s4190
        // Predicated region
        $region33: #{tpu_custom_call.1} parent=31 // pred_check
          %p4192 = pneg %p109
        $region34: #{tpu_custom_call.1} parent=31 // pred_check_branch
          %4194 = sbr.rel (%p4192) target = $region36
        $region35: #{tpu_custom_call.1} parent=31 // pred_region
          %s4195 = smul.u32 32, %s23
          %s4197 = ssub.s32 4096, 4096
          %4198 = vsyncadd %s4178, %s4197
          %s4199 = smul.addr %s4195, 128
          %s4200 = scalar_lea.hbm %s3, %s4199
          %s4201 = sshll.u32 %s4181, 4
          %s4202 = int_to_ptr.vmem [resolvable:$true] %s4201
          %4207 = dma.vmem_to_hbm [thread:$0]  %s4202, 4096, %s4200, %s4178, 128, 128, 8
        $region36: #{tpu_custom_call.1} parent=31 // pred_fallthru
          _
        // Predicated region
        $region37: #{tpu_custom_call.1} parent=31 // pred_check
          %p4208 = pneg %p135
        $region38: #{tpu_custom_call.1} parent=31 // pred_check_branch
          %4210 = sbr.rel (%p4208) target = $region40
        $region39: #{tpu_custom_call.1} parent=31 // pred_region
          %s4211 = smul.u32 32, %s23
          %s4213 = ssub.s32 4096, 4096
          %4214 = vsyncadd %s4183, %s4213
          %s4215 = smul.addr %s4211, 128
          %s4216 = scalar_lea.hbm %s4, %s4215
          %s4217 = sshll.u32 %s4186, 4
          %s4218 = int_to_ptr.vmem [resolvable:$true] %s4217
          %4223 = dma.vmem_to_hbm [thread:$0]  %s4218, 4096, %s4216, %s4183, 128, 128, 8
        $region40: #{tpu_custom_call.1} parent=31 // pred_fallthru
          _
        // Predicated region
        $region41: #{tpu_custom_call.1} parent=31 // pred_check
          %p4224 = pneg %p161
        $region42: #{tpu_custom_call.1} parent=31 // pred_check_branch
          %4226 = sbr.rel (%p4224) target = $region44
        $region43: #{tpu_custom_call.1} parent=31 // pred_region
          %s4228 = ssub.s32 64, 64
          %4229 = vsyncadd %s4188, %s4228
          %s4230 = smul.addr %s23, 64
          %s4231 = scalar_lea.hbm %s5, %s4230
          %s4233 = sshll.u32 %s4191, 4
          %s4234 = int_to_ptr.vmem [resolvable:$true] %s4233
          %4236 = dma.vmem_to_hbm [thread:$0]  %s4234, 64, %s4231, %s4188
        $region44: #{tpu_custom_call.1} parent=31 // pred_fallthru
          _
      $region32: #{tpu_custom_call.1} parent=5 // pred_fallthru
        _
      %p4237 = scmp.le.s32.totalorder 2, %s18
      // Predicated region
      $region45: #{tpu_custom_call.1} parent=5 // pred_check
        %p4238 = pneg %p4237
      $region46: #{tpu_custom_call.1} parent=5 // pred_check_branch
        %4240 = sbr.rel (%p4238) target = $region48
      $region47: #{tpu_custom_call.1} parent=5 // pred_region
        %s4241 = ssub.s32 %s18, 2
        // Predicated region
        $region49: #{tpu_custom_call.1} parent=47 // pred_check
          %p4242 = pneg %p115
        $region50: #{tpu_custom_call.1} parent=47 // pred_check_branch
          %4244 = sbr.rel (%p4242) target = $region52
        $region51: #{tpu_custom_call.1} parent=47 // pred_region
          %s4245 = sand.u32 %s100, 1
          %s4246 = scalar_lea.sflag [#allocation3], %s4245
          %s4247 = sand.u32 %s100, 1
          %s4248 = smul.addr %s4247, 256
          %s4249 = scalar_lea.vmem [#allocation2], %s4248
          %4250 = dma.done %s4246, 4096
        $region52: #{tpu_custom_call.1} parent=47 // pred_fallthru
          _
        // Predicated region
        $region53: #{tpu_custom_call.1} parent=47 // pred_check
          %p4251 = pneg %p141
        $region54: #{tpu_custom_call.1} parent=47 // pred_check_branch
          %4253 = sbr.rel (%p4251) target = $region56
        $region55: #{tpu_custom_call.1} parent=47 // pred_region
          %s4254 = sand.u32 %s24, 1
          %s4255 = scalar_lea.sflag [#allocation5], %s4254
          %s4256 = sand.u32 %s126, 1
          %s4257 = smul.addr %s4256, 256
          %s4258 = scalar_lea.vmem [#allocation4], %s4257
          %4259 = dma.done %s4255, 4096
        $region56: #{tpu_custom_call.1} parent=47 // pred_fallthru
          _
        // Predicated region
        $region57: #{tpu_custom_call.1} parent=47 // pred_check
          %p4260 = pneg %p167
        $region58: #{tpu_custom_call.1} parent=47 // pred_check_branch
          %4262 = sbr.rel (%p4260) target = $region60
        $region59: #{tpu_custom_call.1} parent=47 // pred_region
          %s4263 = sand.u32 %s24, 1
          %s4264 = scalar_lea.sflag [#allocation5], %s4263
          %s4265 = sand.u32 %s152, 1
          %s4266 = smul.addr %s4265, 4
          %s4267 = scalar_lea.vmem [#allocation6], %s4266
          %4268 = dma.done %s4264, 64
        $region60: #{tpu_custom_call.1} parent=47 // pred_fallthru
          _
      $region48: #{tpu_custom_call.1} parent=5 // pred_fallthru
        _
    $region6: #{tpu_custom_call.1} parent=1 // loop_footer
      %s22 = sadd.s32 1, %s18
    $region7: #{tpu_custom_call.1} parent=1 // loop_footer_branch
      %17 = sbr.rel target = $region3
    $region8: #{tpu_custom_call.1} parent=1 // loop_exit
      _
    %4269 = vsyncpa [#allocation3], 1
    %s4270 = scalar_lea.sflag [#allocation3], 1
    %4271 = vsyncpa %s4270, 1
    %4272 = vsyncpa [#allocation5], 1
    %s4273 = scalar_lea.sflag [#allocation5], 1
    %4274 = vsyncpa %s4273, 1

</llo_original>
